<compile_context>
chip_gen: v7x
topology: tpu7x:2x2x1
jax: 0.10.0
libtpu: 0.0.40
codegen_flags: <defaults>
</compile_context>

<pallas_src>
import functools

import jax
import jax.numpy as jnp
from jax import lax
from jax.experimental import pallas as pl
from jax.experimental.pallas import tpu as pltpu


def _layer_norm(y, gamma, beta, eps=1e-5):
    mu = jnp.mean(y, axis=-1, keepdims=True)
    d = y - mu
    var = jnp.mean(d * d, axis=-1, keepdims=True)
    return d * lax.rsqrt(var + eps) * gamma + beta


# ---------------------------------------------------------------------------
# Pass 1: multi-head self-attention + residual + LayerNorm1 (grid over batch).
# ---------------------------------------------------------------------------
def attn_ln_kernel(x_ref, wqkv_ref, bqkv_ref, wo_ref, bo_ref, g1_ref, be1_ref,
                   y_ref, *, num_heads):
    Bb, S, H = x_ref.shape
    nh = num_heads
    hd = H // nh
    scale = 1.0 / float(hd) ** 0.5
    bf = jnp.bfloat16

    x = x_ref[...].reshape(Bb * S, H)                       # f32, kept for residual + LN

    # Fused QKV projection over all Bb*S rows: one bf16 MXU matmul, N = 3H (lane-dense).
    qkv = jnp.dot(x.astype(bf), wqkv_ref[...],
                  preferred_element_type=jnp.float32) + bqkv_ref[...]
    # PyTorch scales q (including its bias) by head_dim**-0.5.
    q = qkv[:, :H] * scale
    k = qkv[:, H:2 * H]
    v = qkv[:, 2 * H:]

    # Small static unroll over the batch elements of this tile; heads batched into a
    # single-batch-dim dot_general per product (known-good Mosaic lowering).
    for b in range(Bb):
        sl = slice(b * S, (b + 1) * S)
        qh = jnp.transpose(q[sl].reshape(S, nh, hd), (1, 0, 2))   # (nh, S, hd)
        kh = jnp.transpose(k[sl].reshape(S, nh, hd), (1, 0, 2))
        vh = jnp.transpose(v[sl].reshape(S, nh, hd), (1, 0, 2))

        sc = jnp.einsum('nqd,nkd->nqk', qh.astype(bf), kh.astype(bf),
                        preferred_element_type=jnp.float32)       # (nh, S, S), f32
        m = jnp.max(sc, axis=-1, keepdims=True)
        p = jnp.exp(sc - m)                                        # f32 EUP
        denom = jnp.sum(p, axis=-1, keepdims=True)
        ctx = jnp.einsum('nqk,nkd->nqd', p.astype(bf), vh.astype(bf),
                         preferred_element_type=jnp.float32)       # unnormalized
        ctx = ctx * pl.reciprocal(denom, approx=True)              # EUP slot
        ctx = jnp.transpose(ctx, (1, 0, 2)).reshape(S, H)          # heads back on lanes

        attn = jnp.dot(ctx.astype(bf), wo_ref[...],
                       preferred_element_type=jnp.float32) + bo_ref[...]
        # dropout(p=0.1) is identity in eval mode.
        y_ref[b] = _layer_norm(x[sl] + attn, g1_ref[...], be1_ref[...])


# ---------------------------------------------------------------------------
# Pass 2: Conv1d -> ReLU -> Conv1d (along the original batch axis) + residual +
# LayerNorm2.  Grid over sequence tiles (each position is an independent conv
# "batch" sample), so every tile holds all B conv-length positions -> no halo
# exchange between tiles.
# ---------------------------------------------------------------------------
def conv_ln_kernel(y_ref, w1f_ref, c1b_ref, w2f_ref, c2b_ref, g2_ref, be2_ref,
                   o_ref, pad1_ref, pad2_ref):
    Bc, TS, H = y_ref.shape           # Bc = conv length (original batch B)
    E = w1f_ref.shape[1]
    K = w1f_ref.shape[0] // H
    pad = K // 2
    rows = Bc * TS
    bf = jnp.bfloat16

    y2 = y_ref[...].reshape(rows, H)                         # f32

    # Zero-padded staging buffer (flattened 2-D, conv axis major).  Halos re-zeroed every
    # step: a one-time (program_id==0) init is unsafe under "parallel" megacore sharding.
    if pad > 0:
        pad1_ref[0:pad * TS, :] = jnp.zeros((pad * TS, H), pad1_ref.dtype)
        pad1_ref[(pad + Bc) * TS:(2 * pad + Bc) * TS, :] = (
            jnp.zeros((pad * TS, H), pad1_ref.dtype))
    pad1_ref[pad * TS:(pad + Bc) * TS, :] = y2

    # conv1 + bias + ReLU: K accumulated bf16 matmuls (one per tap), no lane concat.
    acc1 = jnp.zeros((rows, E), jnp.float32)
    for kk in range(K):
        tap = pad1_ref[kk * TS:(kk + Bc) * TS, :].astype(bf)
        acc1 = acc1 + jnp.dot(tap, w1f_ref[kk * H:(kk + 1) * H, :],
                              preferred_element_type=jnp.float32)
    h1 = jnp.maximum(acc1 + c1b_ref[...], 0.0)

    # conv2 on the expanded channels, same scheme.
    if pad > 0:
        pad2_ref[0:pad * TS, :] = jnp.zeros((pad * TS, E), pad2_ref.dtype)
        pad2_ref[(pad + Bc) * TS:(2 * pad + Bc) * TS, :] = (
            jnp.zeros((pad * TS, E), pad2_ref.dtype))
    pad2_ref[pad * TS:(pad + Bc) * TS, :] = h1

    acc2 = jnp.zeros((rows, H), jnp.float32)
    for kk in range(K):
        tap = pad2_ref[kk * TS:(kk + Bc) * TS, :].astype(bf)
        acc2 = acc2 + jnp.dot(tap, w2f_ref[kk * E:(kk + 1) * E, :],
                              preferred_element_type=jnp.float32)
    h2 = acc2 + c2b_ref[...]

    out = _layer_norm(y2 + h2, g2_ref[...], be2_ref[...])
    o_ref[...] = out.reshape(Bc, TS, H)


# ---------------------------------------------------------------------------
# Wrapper: parameter re-layout (+ bf16 weight cast) and two pipelined pallas_calls.
# ---------------------------------------------------------------------------
def fft_block(x, params, *, num_heads, batch_tile=None, seq_tile=None):
    S, B, H = x.shape
    E, _, K = params['w1'].shape
    pad = K // 2
    assert H % num_heads == 0

    if batch_tile is None:
        # >= 2 grid steps when possible so v7x megacore has work for both TensorCores;
        # on single-TC chips the extra step costs ~0.35 us.
        batch_tile = B // 2 if (B % 2 == 0 and B >= 2) else B
    assert B % batch_tile == 0

    if seq_tile is None:
        budget = 16 * 1024 * 1024
        seq_tile = 1
        for cand in sorted((d for d in range(1, S + 1) if S % d == 0), reverse=True):
            scratch_bytes = (B + 2 * pad) * cand * (H + E) * 4
            io_bytes = 2 * 2 * B * cand * H * 4        # double-buffered in + out blocks
            if scratch_bytes + io_bytes <= budget:
                seq_tile = cand
                break
        if seq_tile == S and S % 2 == 0:
            seq_tile = S // 2                          # >= 2 tiles for megacore
    assert S % seq_tile == 0

    bf = jnp.bfloat16
    xb = jnp.transpose(x, (1, 0, 2)).astype(jnp.float32)      # (B, S, H)

    # Fused QKV weight (H, 3H) + bias (1, 3H); bf16 weights, f32 biases/LN params.
    wqkv = jnp.concatenate(
        [params['wq'].T, params['wk'].T, params['wv'].T], axis=1).astype(bf)
    bqkv = jnp.concatenate([params['bq'], params['bk'], params['bv']])[None, :]
    bqkv = bqkv.astype(jnp.float32)
    wo_t = params['wo'].T.astype(bf)
    bo = params['bo'][None, :]
    g1 = params['g1'][None, :]
    be1 = params['be1'][None, :]
    g2 = params['g2'][None, :]
    be2 = params['be2'][None, :]
    # Per-tap conv weights stacked tap-major along the contraction axis.
    w1f = jnp.transpose(params['w1'], (2, 1, 0)).reshape(K * H, E).astype(bf)   # (K*H, E)
    w2f = jnp.transpose(params['w2'], (2, 1, 0)).reshape(K * E, H).astype(bf)   # (K*E, H)
    c1b = params['c1b'][None, :]
    c2b = params['c2b'][None, :]

    cparams = pltpu.CompilerParams(dimension_semantics=("parallel",))

    def full(shape):
        return pl.BlockSpec(shape, lambda *_: (0,) * len(shape))

    # ---- pass 1: attention + LN1, grid over batch tiles ----------------------
    y = pl.pallas_call(
        functools.partial(attn_ln_kernel, num_heads=num_heads),
        out_shape=jax.ShapeDtypeStruct((B, S, H), jnp.float32),
        grid_spec=pltpu.PrefetchScalarGridSpec(
            num_scalar_prefetch=0,
            grid=(B // batch_tile,),
            in_specs=[
                pl.BlockSpec((batch_tile, S, H), lambda i: (i, 0, 0)),
                full((H, 3 * H)), full((1, 3 * H)),
                full((H, H)), full((1, H)),
                full((1, H)), full((1, H)),
            ],
            out_specs=pl.BlockSpec((batch_tile, S, H), lambda i: (i, 0, 0)),
        ),
        compiler_params=cparams,
    )(xb, wqkv, bqkv, wo_t, bo, g1, be1)

    # ---- pass 2: conv branch + LN2, grid over sequence tiles -----------------
    out_b = pl.pallas_call(
        conv_ln_kernel,
        out_shape=jax.ShapeDtypeStruct((B, S, H), jnp.float32),
        grid_spec=pltpu.PrefetchScalarGridSpec(
            num_scalar_prefetch=0,
            grid=(S // seq_tile,),
            in_specs=[
                pl.BlockSpec((B, seq_tile, H), lambda j: (0, j, 0)),
                full((K * H, E)), full((1, E)),
                full((K * E, H)), full((1, H)),
                full((1, H)), full((1, H)),
            ],
            out_specs=pl.BlockSpec((B, seq_tile, H), lambda j: (0, j, 0)),
            scratch_shapes=[
                pltpu.VMEM(((B + 2 * pad) * seq_tile, H), jnp.float32),
                pltpu.VMEM(((B + 2 * pad) * seq_tile, E), jnp.float32),
            ],
        ),
        compiler_params=cparams,
    )(y, w1f, c1b, w2f, c2b, g2, be2)

    return jnp.transpose(out_b, (1, 0, 2))                    # back to (S, B, H)


# ---------------------------------------------------------------------------
# Pure-JAX reference (independent implementation, mirrors the PyTorch module).
# ---------------------------------------------------------------------------
def _layer_norm_ref(y, g, b, eps=1e-5):
    mu = jnp.mean(y, axis=-1, keepdims=True)
    var = jnp.mean((y - mu) ** 2, axis=-1, keepdims=True)
    return (y - mu) / jnp.sqrt(var + eps) * g + b


def reference_fft_block(x, p, *, num_heads):
    S, B, H = x.shape
    hd = H // num_heads
    q = x @ p['wq'].T + p['bq']
    k = x @ p['wk'].T + p['bk']
    v = x @ p['wv'].T + p['bv']
    q = q * (hd ** -0.5)
    qh = q.reshape(S, B, num_heads, hd)
    kh = k.reshape(S, B, num_heads, hd)
    vh = v.reshape(S, B, num_heads, hd)
    sc = jnp.einsum('sbnd,tbnd->bnst', qh, kh)
    att = jax.nn.softmax(sc, axis=-1)
    ctx = jnp.einsum('bnst,tbnd->sbnd', att, vh).reshape(S, B, H)
    attn = ctx @ p['wo'].T + p['bo']
    y = _layer_norm_ref(x + attn, p['g1'], p['be1'])

    pad = p['w1'].shape[-1] // 2
    xc = jnp.transpose(y, (0, 2, 1))                        # (S, H, B)
    h1 = lax.conv_general_dilated(xc, p['w1'], (1,), [(pad, pad)],
                                  dimension_numbers=('NCH', 'OIH', 'NCH'))
    h1 = h1 + p['c1b'][None, :, None]
    h1 = jnp.maximum(h1, 0.0)
    h2 = lax.conv_general_dilated(h1, p['w2'], (1,), [(pad, pad)],
                                  dimension_numbers=('NCH', 'OIH', 'NCH'))
    h2 = h2 + p['c2b'][None, :, None]
    z = y + jnp.transpose(h2, (0, 2, 1))                    # (S, B, H)
    return _layer_norm_ref(z, p['g2'], p['be2'])


# ---------------------------------------------------------------------------
if __name__ == "__main__":
    # seq, batch, hidden, heads, conv kernel, conv expansion (lane-dense H/E).
    S, B, H, NH, K, E = 16, 4, 128, 4, 3, 256

    key = jax.random.PRNGKey(0)
    ks = jax.random.split(key, 13)

    def rnd(k, shape, scale=0.05):
        return scale * jax.random.normal(k, shape, jnp.float32)

    params = dict(
        wq=rnd(ks[0], (H, H)), wk=rnd(ks[1], (H, H)), wv=rnd(ks[2], (H, H)),
        bq=rnd(ks[3], (H,)), bk=rnd(ks[4], (H,)), bv=rnd(ks[5], (H,)),
        wo=rnd(ks[6], (H, H)), bo=rnd(ks[7], (H,)),
        g1=jnp.ones((H,), jnp.float32), be1=jnp.zeros((H,), jnp.float32),
        w1=rnd(ks[8], (E, H, K)), c1b=rnd(ks[9], (E,)),
        w2=rnd(ks[10], (H, E, K)), c2b=rnd(ks[11], (H,)),
        g2=jnp.ones((H,), jnp.float32), be2=jnp.zeros((H,), jnp.float32),
    )

    x = jax.random.normal(ks[12], (S, B, H), jnp.float32)

    fft = jax.jit(functools.partial(fft_block, num_heads=NH))
    out = jax.block_until_ready(fft(x, params))

    with jax.default_matmul_precision("float32"):
        ref = reference_fft_block(x, params, num_heads=NH)

    assert out.shape == (S, B, H)
    # Tolerance covers bf16 MXU inputs (per the perf review) + approx EUP reciprocal.
    max_err = float(jnp.max(jnp.abs(out - ref)))
    assert max_err < 1e-1, f"max_err={max_err}"
    print("KERNEL_OK")
</pallas_src>

<mosaic_0001>
module attributes {stable_mosaic.version = 11 : i64} {
  func.func @conv_ln_kernel(%arg0: i32, %arg1: memref<4x8x128xf32, #tpu.memory_space<vmem>>, %arg2: memref<384x256xbf16, #tpu.memory_space<vmem>>, %arg3: memref<1x256xf32, #tpu.memory_space<vmem>>, %arg4: memref<768x128xbf16, #tpu.memory_space<vmem>>, %arg5: memref<1x128xf32, #tpu.memory_space<vmem>>, %arg6: memref<1x128xf32, #tpu.memory_space<vmem>>, %arg7: memref<1x128xf32, #tpu.memory_space<vmem>>, %arg8: memref<4x8x128xf32, #tpu.memory_space<vmem>>, %arg9: memref<48x128xf32, #tpu.memory_space<vmem>>, %arg10: memref<48x256xf32, #tpu.memory_space<vmem>>) attributes {dimension_semantics = [#tpu.dimension_semantics<parallel>], iteration_bounds = array<i64: 2>, scalar_prefetch = 0 : i64, scratch_operands = 2 : i64, tpu.core_type = #tpu.core_type<tc>, window_params = [{transform_indices = @transform_0, window_bounds = array<i64: 4, 8, 128>}, {pipeline_mode = #tpu.pipeline_mode<synchronous>, transform_indices = @transform_1, window_bounds = array<i64: 384, 256>}, {pipeline_mode = #tpu.pipeline_mode<synchronous>, transform_indices = @transform_2, window_bounds = array<i64: 1, 256>}, {pipeline_mode = #tpu.pipeline_mode<synchronous>, transform_indices = @transform_3, window_bounds = array<i64: 768, 128>}, {pipeline_mode = #tpu.pipeline_mode<synchronous>, transform_indices = @transform_4, window_bounds = array<i64: 1, 128>}, {pipeline_mode = #tpu.pipeline_mode<synchronous>, transform_indices = @transform_5, window_bounds = array<i64: 1, 128>}, {pipeline_mode = #tpu.pipeline_mode<synchronous>, transform_indices = @transform_6, window_bounds = array<i64: 1, 128>}, {transform_indices = @transform_7, window_bounds = array<i64: 4, 8, 128>}]} {
    %c0 = arith.constant 0 : index
    %c0_0 = arith.constant 0 : index
    %c0_1 = arith.constant 0 : index
    %0 = vector.load %arg1[%c0, %c0_0, %c0_1] : memref<4x8x128xf32, #tpu.memory_space<vmem>>, vector<4x8x128xf32>
    %1 = vector.shape_cast %0 : vector<4x8x128xf32> to vector<32x128xf32>
    %cst = arith.constant 0.000000e+00 : f32
    %2 = vector.broadcast %cst : f32 to vector<8x128xf32>
    %c0_2 = arith.constant 0 : index
    %c0_3 = arith.constant 0 : index
    %3 = vector.load %arg9[%c0_2, %c0_3] : memref<48x128xf32, #tpu.memory_space<vmem>>, vector<8x128xf32>
    tpu.vector_store %arg9[%c0_2, %c0_3], %2 {strides = array<i32>} : memref<48x128xf32, #tpu.memory_space<vmem>>, vector<8x128xf32>,
    %cst_4 = arith.constant 0.000000e+00 : f32
    %4 = vector.broadcast %cst_4 : f32 to vector<8x128xf32>
    %c40 = arith.constant 40 : index
    %c0_5 = arith.constant 0 : index
    %5 = vector.load %arg9[%c40, %c0_5] : memref<48x128xf32, #tpu.memory_space<vmem>>, vector<8x128xf32>
    tpu.vector_store %arg9[%c40, %c0_5], %4 {strides = array<i32>} : memref<48x128xf32, #tpu.memory_space<vmem>>, vector<8x128xf32>,
    %c8 = arith.constant 8 : index
    %c0_6 = arith.constant 0 : index
    %6 = vector.load %arg9[%c8, %c0_6] : memref<48x128xf32, #tpu.memory_space<vmem>>, vector<32x128xf32>
    tpu.vector_store %arg9[%c8, %c0_6], %1 {strides = array<i32>} : memref<48x128xf32, #tpu.memory_space<vmem>>, vector<32x128xf32>,
    %cst_7 = arith.constant 0.000000e+00 : f32
    %7 = vector.broadcast %cst_7 : f32 to vector<32x256xf32>
    %c0_8 = arith.constant 0 : index
    %c0_9 = arith.constant 0 : index
    %8 = vector.load %arg9[%c0_8, %c0_9] : memref<48x128xf32, #tpu.memory_space<vmem>>, vector<32x128xf32>
    %9 = arith.truncf %8 : vector<32x128xf32> to vector<32x128xbf16>
    %c0_10 = arith.constant 0 : index
    %c0_11 = arith.constant 0 : index
    %10 = vector.load %arg2[%c0_10, %c0_11] : memref<384x256xbf16, #tpu.memory_space<vmem>>, vector<128x256xbf16>
    %cst_12 = arith.constant dense<0.000000e+00> : vector<32x256xf32>
    %11 = tpu.matmul %9, %10, %cst_12 {dimension_numbers = #tpu.dot_dimension_numbers<[1], [0], [0], [1], [0, 0, 1, 1], [], []>} : vector<32x128xbf16>, vector<128x256xbf16>, vector<32x256xf32> -> vector<32x256xf32>
    %12 = arith.addf %7, %11 : vector<32x256xf32>
    %c8_13 = arith.constant 8 : index
    %c0_14 = arith.constant 0 : index
    %13 = vector.load %arg9[%c8_13, %c0_14] : memref<48x128xf32, #tpu.memory_space<vmem>>, vector<32x128xf32>
    %14 = arith.truncf %13 : vector<32x128xf32> to vector<32x128xbf16>
    %c128 = arith.constant 128 : index
    %c0_15 = arith.constant 0 : index
    %15 = vector.load %arg2[%c128, %c0_15] : memref<384x256xbf16, #tpu.memory_space<vmem>>, vector<128x256xbf16>
    %cst_16 = arith.constant dense<0.000000e+00> : vector<32x256xf32>
    %16 = tpu.matmul %14, %15, %cst_16 {dimension_numbers = #tpu.dot_dimension_numbers<[1], [0], [0], [1], [0, 0, 1, 1], [], []>} : vector<32x128xbf16>, vector<128x256xbf16>, vector<32x256xf32> -> vector<32x256xf32>
    %17 = arith.addf %12, %16 : vector<32x256xf32>
    %c16 = arith.constant 16 : index
    %c0_17 = arith.constant 0 : index
    %18 = vector.load %arg9[%c16, %c0_17] : memref<48x128xf32, #tpu.memory_space<vmem>>, vector<32x128xf32>
    %19 = arith.truncf %18 : vector<32x128xf32> to vector<32x128xbf16>
    %c256 = arith.constant 256 : index
    %c0_18 = arith.constant 0 : index
    %20 = vector.load %arg2[%c256, %c0_18] : memref<384x256xbf16, #tpu.memory_space<vmem>>, vector<128x256xbf16>
    %cst_19 = arith.constant dense<0.000000e+00> : vector<32x256xf32>
    %21 = tpu.matmul %19, %20, %cst_19 {dimension_numbers = #tpu.dot_dimension_numbers<[1], [0], [0], [1], [0, 0, 1, 1], [], []>} : vector<32x128xbf16>, vector<128x256xbf16>, vector<32x256xf32> -> vector<32x256xf32>
    %22 = arith.addf %17, %21 : vector<32x256xf32>
    %c0_20 = arith.constant 0 : index
    %c0_21 = arith.constant 0 : index
    %23 = vector.load %arg3[%c0_20, %c0_21] : memref<1x256xf32, #tpu.memory_space<vmem>>, vector<1x256xf32>
    %24 = vector.broadcast %23 : vector<1x256xf32> to vector<32x256xf32>
    %25 = arith.addf %22, %24 : vector<32x256xf32>
    %cst_22 = arith.constant 0.000000e+00 : f32
    %26 = vector.broadcast %cst_22 : f32 to vector<32x256xf32>
    %27 = arith.maximumf %25, %26 : vector<32x256xf32>
    %cst_23 = arith.constant 0.000000e+00 : f32
    %28 = vector.broadcast %cst_23 : f32 to vector<8x256xf32>
    %c0_24 = arith.constant 0 : index
    %c0_25 = arith.constant 0 : index
    %29 = vector.load %arg10[%c0_24, %c0_25] : memref<48x256xf32, #tpu.memory_space<vmem>>, vector<8x256xf32>
    tpu.vector_store %arg10[%c0_24, %c0_25], %28 {strides = array<i32>} : memref<48x256xf32, #tpu.memory_space<vmem>>, vector<8x256xf32>,
    %cst_26 = arith.constant 0.000000e+00 : f32
    %30 = vector.broadcast %cst_26 : f32 to vector<8x256xf32>
    %c40_27 = arith.constant 40 : index
    %c0_28 = arith.constant 0 : index
    %31 = vector.load %arg10[%c40_27, %c0_28] : memref<48x256xf32, #tpu.memory_space<vmem>>, vector<8x256xf32>
    tpu.vector_store %arg10[%c40_27, %c0_28], %30 {strides = array<i32>} : memref<48x256xf32, #tpu.memory_space<vmem>>, vector<8x256xf32>,
    %c8_29 = arith.constant 8 : index
    %c0_30 = arith.constant 0 : index
    %32 = vector.load %arg10[%c8_29, %c0_30] : memref<48x256xf32, #tpu.memory_space<vmem>>, vector<32x256xf32>
    tpu.vector_store %arg10[%c8_29, %c0_30], %27 {strides = array<i32>} : memref<48x256xf32, #tpu.memory_space<vmem>>, vector<32x256xf32>,
    %cst_31 = arith.constant 0.000000e+00 : f32
    %33 = vector.broadcast %cst_31 : f32 to vector<32x128xf32>
    %c0_32 = arith.constant 0 : index
    %c0_33 = arith.constant 0 : index
    %34 = vector.load %arg10[%c0_32, %c0_33] : memref<48x256xf32, #tpu.memory_space<vmem>>, vector<32x256xf32>
    %35 = arith.truncf %34 : vector<32x256xf32> to vector<32x256xbf16>
    %c0_34 = arith.constant 0 : index
    %c0_35 = arith.constant 0 : index
    %36 = vector.load %arg4[%c0_34, %c0_35] : memref<768x128xbf16, #tpu.memory_space<vmem>>, vector<256x128xbf16>
    %cst_36 = arith.constant dense<0.000000e+00> : vector<32x128xf32>
    %37 = tpu.matmul %35, %36, %cst_36 {dimension_numbers = #tpu.dot_dimension_numbers<[1], [0], [0], [1], [0, 0, 1, 1], [], []>} : vector<32x256xbf16>, vector<256x128xbf16>, vector<32x128xf32> -> vector<32x128xf32>
    %38 = arith.addf %33, %37 : vector<32x128xf32>
    %c8_37 = arith.constant 8 : index
    %c0_38 = arith.constant 0 : index
    %39 = vector.load %arg10[%c8_37, %c0_38] : memref<48x256xf32, #tpu.memory_space<vmem>>, vector<32x256xf32>
    %40 = arith.truncf %39 : vector<32x256xf32> to vector<32x256xbf16>
    %c256_39 = arith.constant 256 : index
    %c0_40 = arith.constant 0 : index
    %41 = vector.load %arg4[%c256_39, %c0_40] : memref<768x128xbf16, #tpu.memory_space<vmem>>, vector<256x128xbf16>
    %cst_41 = arith.constant dense<0.000000e+00> : vector<32x128xf32>
    %42 = tpu.matmul %40, %41, %cst_41 {dimension_numbers = #tpu.dot_dimension_numbers<[1], [0], [0], [1], [0, 0, 1, 1], [], []>} : vector<32x256xbf16>, vector<256x128xbf16>, vector<32x128xf32> -> vector<32x128xf32>
    %43 = arith.addf %38, %42 : vector<32x128xf32>
    %c16_42 = arith.constant 16 : index
    %c0_43 = arith.constant 0 : index
    %44 = vector.load %arg10[%c16_42, %c0_43] : memref<48x256xf32, #tpu.memory_space<vmem>>, vector<32x256xf32>
    %45 = arith.truncf %44 : vector<32x256xf32> to vector<32x256xbf16>
    %c512 = arith.constant 512 : index
    %c0_44 = arith.constant 0 : index
    %46 = vector.load %arg4[%c512, %c0_44] : memref<768x128xbf16, #tpu.memory_space<vmem>>, vector<256x128xbf16>
    %cst_45 = arith.constant dense<0.000000e+00> : vector<32x128xf32>
    %47 = tpu.matmul %45, %46, %cst_45 {dimension_numbers = #tpu.dot_dimension_numbers<[1], [0], [0], [1], [0, 0, 1, 1], [], []>} : vector<32x256xbf16>, vector<256x128xbf16>, vector<32x128xf32> -> vector<32x128xf32>
    %48 = arith.addf %43, %47 : vector<32x128xf32>
    %c0_46 = arith.constant 0 : index
    %c0_47 = arith.constant 0 : index
    %49 = vector.load %arg5[%c0_46, %c0_47] : memref<1x128xf32, #tpu.memory_space<vmem>>, vector<1x128xf32>
    %50 = vector.broadcast %49 : vector<1x128xf32> to vector<32x128xf32>
    %51 = arith.addf %48, %50 : vector<32x128xf32>
    %52 = arith.addf %1, %51 : vector<32x128xf32>
    %c0_48 = arith.constant 0 : index
    %c0_49 = arith.constant 0 : index
    %53 = vector.load %arg6[%c0_48, %c0_49] : memref<1x128xf32, #tpu.memory_space<vmem>>, vector<1x128xf32>
    %c0_50 = arith.constant 0 : index
    %c0_51 = arith.constant 0 : index
    %54 = vector.load %arg7[%c0_50, %c0_51] : memref<1x128xf32, #tpu.memory_space<vmem>>, vector<1x128xf32>
    %cst_52 = arith.constant dense<0.000000e+00> : vector<32xf32>
    %55 = vector.multi_reduction <add>, %52, %cst_52 [1] : vector<32x128xf32> to vector<32xf32>
    %56 = vector.shape_cast %55 : vector<32xf32> to vector<32x1xf32>
    %cst_53 = arith.constant 1.280000e+02 : f32
    %57 = vector.broadcast %cst_53 : f32 to vector<32x1xf32>
    %58 = arith.divf %56, %57 : vector<32x1xf32>
    %59 = vector.broadcast %58 : vector<32x1xf32> to vector<32x128xf32>
    %60 = arith.subf %52, %59 : vector<32x128xf32>
    %61 = arith.mulf %60, %60 : vector<32x128xf32>
    %cst_54 = arith.constant dense<0.000000e+00> : vector<32xf32>
    %62 = vector.multi_reduction <add>, %61, %cst_54 [1] : vector<32x128xf32> to vector<32xf32>
    %63 = vector.shape_cast %62 : vector<32xf32> to vector<32x1xf32>
    %cst_55 = arith.constant 1.280000e+02 : f32
    %64 = vector.broadcast %cst_55 : f32 to vector<32x1xf32>
    %65 = arith.divf %63, %64 : vector<32x1xf32>
    %cst_56 = arith.constant 9.99999974E-6 : f32
    %66 = vector.broadcast %cst_56 : f32 to vector<32x1xf32>
    %67 = arith.addf %65, %66 : vector<32x1xf32>
    %68 = math.rsqrt %67 : vector<32x1xf32>
    %69 = vector.broadcast %68 : vector<32x1xf32> to vector<32x128xf32>
    %70 = arith.mulf %60, %69 : vector<32x128xf32>
    %71 = vector.broadcast %53 : vector<1x128xf32> to vector<32x128xf32>
    %72 = arith.mulf %70, %71 : vector<32x128xf32>
    %73 = vector.broadcast %54 : vector<1x128xf32> to vector<32x128xf32>
    %74 = arith.addf %72, %73 : vector<32x128xf32>
    %75 = vector.shape_cast %74 : vector<32x128xf32> to vector<4x8x128xf32>
    %c0_57 = arith.constant 0 : index
    %c0_58 = arith.constant 0 : index
    %c0_59 = arith.constant 0 : index
    %76 = vector.load %arg8[%c0_57, %c0_58, %c0_59] : memref<4x8x128xf32, #tpu.memory_space<vmem>>, vector<4x8x128xf32>
    tpu.vector_store %arg8[%c0_57, %c0_58, %c0_59], %75 {strides = array<i32>} : memref<4x8x128xf32, #tpu.memory_space<vmem>>, vector<4x8x128xf32>,
    return
  }
  func.func @transform_0(%arg0: i32) -> (i32, i32, i32) {
    %c0_i32 = arith.constant 0 : i32
    %c0_i32_0 = arith.constant 0 : i32
    %c0_i32_1 = arith.constant 0 : i32
    return %c0_i32, %arg0, %c0_i32_0 : i32, i32, i32
  }
  func.func @transform_1(%arg0: i32) -> (i32, i32) {
    %c0_i32 = arith.constant 0 : i32
    %c0_i32_0 = arith.constant 0 : i32
    %c0_i32_1 = arith.constant 0 : i32
    return %c0_i32, %c0_i32_0 : i32, i32
  }
  func.func @transform_2(%arg0: i32) -> (i32, i32) {
    %c0_i32 = arith.constant 0 : i32
    %c0_i32_0 = arith.constant 0 : i32
    %c0_i32_1 = arith.constant 0 : i32
    return %c0_i32, %c0_i32_0 : i32, i32
  }
  func.func @transform_3(%arg0: i32) -> (i32, i32) {
    %c0_i32 = arith.constant 0 : i32
    %c0_i32_0 = arith.constant 0 : i32
    %c0_i32_1 = arith.constant 0 : i32
    return %c0_i32, %c0_i32_0 : i32, i32
  }
  func.func @transform_4(%arg0: i32) -> (i32, i32) {
    %c0_i32 = arith.constant 0 : i32
    %c0_i32_0 = arith.constant 0 : i32
    %c0_i32_1 = arith.constant 0 : i32
    return %c0_i32, %c0_i32_0 : i32, i32
  }
  func.func @transform_5(%arg0: i32) -> (i32, i32) {
    %c0_i32 = arith.constant 0 : i32
    %c0_i32_0 = arith.constant 0 : i32
    %c0_i32_1 = arith.constant 0 : i32
    return %c0_i32, %c0_i32_0 : i32, i32
  }
  func.func @transform_6(%arg0: i32) -> (i32, i32) {
    %c0_i32 = arith.constant 0 : i32
    %c0_i32_0 = arith.constant 0 : i32
    %c0_i32_1 = arith.constant 0 : i32
    return %c0_i32, %c0_i32_0 : i32, i32
  }
  func.func @transform_7(%arg0: i32) -> (i32, i32, i32) {
    %c0_i32 = arith.constant 0 : i32
    %c0_i32_0 = arith.constant 0 : i32
    %c0_i32_1 = arith.constant 0 : i32
    return %c0_i32, %arg0, %c0_i32_0 : i32, i32, i32
  }
}

module attributes {stable_mosaic.version = 11 : i64} {
  func.func @attn_ln_kernel(%arg0: i32, %arg1: memref<2x16x128xf32, #tpu.memory_space<vmem>>, %arg2: memref<128x384xbf16, #tpu.memory_space<vmem>>, %arg3: memref<1x384xf32, #tpu.memory_space<vmem>>, %arg4: memref<128x128xbf16, #tpu.memory_space<vmem>>, %arg5: memref<1x128xf32, #tpu.memory_space<vmem>>, %arg6: memref<1x128xf32, #tpu.memory_space<vmem>>, %arg7: memref<1x128xf32, #tpu.memory_space<vmem>>, %arg8: memref<2x16x128xf32, #tpu.memory_space<vmem>>) attributes {dimension_semantics = [#tpu.dimension_semantics<parallel>], iteration_bounds = array<i64: 2>, scalar_prefetch = 0 : i64, scratch_operands = 0 : i64, tpu.core_type = #tpu.core_type<tc>, window_params = [{transform_indices = @transform_0, window_bounds = array<i64: 2, 16, 128>}, {pipeline_mode = #tpu.pipeline_mode<synchronous>, transform_indices = @transform_1, window_bounds = array<i64: 128, 384>}, {pipeline_mode = #tpu.pipeline_mode<synchronous>, transform_indices = @transform_2, window_bounds = array<i64: 1, 384>}, {pipeline_mode = #tpu.pipeline_mode<synchronous>, transform_indices = @transform_3, window_bounds = array<i64: 128, 128>}, {pipeline_mode = #tpu.pipeline_mode<synchronous>, transform_indices = @transform_4, window_bounds = array<i64: 1, 128>}, {pipeline_mode = #tpu.pipeline_mode<synchronous>, transform_indices = @transform_5, window_bounds = array<i64: 1, 128>}, {pipeline_mode = #tpu.pipeline_mode<synchronous>, transform_indices = @transform_6, window_bounds = array<i64: 1, 128>}, {transform_indices = @transform_7, window_bounds = array<i64: 2, 16, 128>}]} {
    %c0 = arith.constant 0 : index
    %c0_0 = arith.constant 0 : index
    %c0_1 = arith.constant 0 : index
    %0 = vector.load %arg1[%c0, %c0_0, %c0_1] : memref<2x16x128xf32, #tpu.memory_space<vmem>>, vector<2x16x128xf32>
    %1 = vector.shape_cast %0 : vector<2x16x128xf32> to vector<32x128xf32>
    %2 = arith.truncf %1 : vector<32x128xf32> to vector<32x128xbf16>
    %c0_2 = arith.constant 0 : index
    %c0_3 = arith.constant 0 : index
    %3 = vector.load %arg2[%c0_2, %c0_3] : memref<128x384xbf16, #tpu.memory_space<vmem>>, vector<128x384xbf16>
    %cst = arith.constant dense<0.000000e+00> : vector<32x384xf32>
    %4 = tpu.matmul %2, %3, %cst {dimension_numbers = #tpu.dot_dimension_numbers<[1], [0], [0], [1], [0, 0, 1, 1], [], []>} : vector<32x128xbf16>, vector<128x384xbf16>, vector<32x384xf32> -> vector<32x384xf32>
    %c0_4 = arith.constant 0 : index
    %c0_5 = arith.constant 0 : index
    %5 = vector.load %arg3[%c0_4, %c0_5] : memref<1x384xf32, #tpu.memory_space<vmem>>, vector<1x384xf32>
    %6 = vector.broadcast %5 : vector<1x384xf32> to vector<32x384xf32>
    %7 = arith.addf %4, %6 : vector<32x384xf32>
    %8 = vector.extract_strided_slice %7 {offsets = [0, 0], sizes = [32, 128], strides = [1, 1]} : vector<32x384xf32> to vector<32x128xf32>
    %cst_6 = arith.constant 0.176776692 : f32
    %9 = vector.broadcast %cst_6 : f32 to vector<32x128xf32>
    %10 = arith.mulf %8, %9 : vector<32x128xf32>
    %11 = vector.extract_strided_slice %7 {offsets = [0, 128], sizes = [32, 128], strides = [1, 1]} : vector<32x384xf32> to vector<32x128xf32>
    %12 = vector.extract_strided_slice %7 {offsets = [0, 256], sizes = [32, 128], strides = [1, 1]} : vector<32x384xf32> to vector<32x128xf32>
    %13 = vector.extract_strided_slice %10 {offsets = [0, 0], sizes = [16, 128], strides = [1, 1]} : vector<32x128xf32> to vector<16x128xf32>
    %14 = vector.shape_cast %13 : vector<16x128xf32> to vector<16x4x32xf32>
    %15 = tpu.transpose %14, [1, 0, 2] : vector<16x4x32xf32> -> vector<4x16x32xf32>
    %16 = vector.extract_strided_slice %11 {offsets = [0, 0], sizes = [16, 128], strides = [1, 1]} : vector<32x128xf32> to vector<16x128xf32>
    %17 = vector.shape_cast %16 : vector<16x128xf32> to vector<16x4x32xf32>
    %18 = tpu.transpose %17, [1, 0, 2] : vector<16x4x32xf32> -> vector<4x16x32xf32>
    %19 = vector.extract_strided_slice %12 {offsets = [0, 0], sizes = [16, 128], strides = [1, 1]} : vector<32x128xf32> to vector<16x128xf32>
    %20 = vector.shape_cast %19 : vector<16x128xf32> to vector<16x4x32xf32>
    %21 = tpu.transpose %20, [1, 0, 2] : vector<16x4x32xf32> -> vector<4x16x32xf32>
    %22 = arith.truncf %15 : vector<4x16x32xf32> to vector<4x16x32xbf16>
    %23 = arith.truncf %18 : vector<4x16x32xf32> to vector<4x16x32xbf16>
    "tpu.trace_start"() <{level = 10 : i32, message = "nqd,nkd->nqk"}> : () -> ()
    %cst_7 = arith.constant dense<0.000000e+00> : vector<4x16x16xf32>
    %24 = tpu.matmul %22, %23, %cst_7 {dimension_numbers = #tpu.dot_dimension_numbers<[2], [2], [1], [1], [0, 0, 0, 1, 1, 1], [0], [0]>} : vector<4x16x32xbf16>, vector<4x16x32xbf16>, vector<4x16x16xf32> -> vector<4x16x16xf32>
    "tpu.trace_stop"() : () -> ()
    %cst_8 = arith.constant dense<0xFF800000> : vector<4x16xf32>
    %25 = vector.multi_reduction <maximumf>, %24, %cst_8 [2] : vector<4x16x16xf32> to vector<4x16xf32>
    %26 = vector.shape_cast %25 : vector<4x16xf32> to vector<4x16x1xf32>
    %27 = vector.broadcast %26 : vector<4x16x1xf32> to vector<4x16x16xf32>
    %28 = arith.subf %24, %27 : vector<4x16x16xf32>
    %29 = math.exp %28 : vector<4x16x16xf32>
    %cst_9 = arith.constant dense<0.000000e+00> : vector<4x16xf32>
    %30 = vector.multi_reduction <add>, %29, %cst_9 [2] : vector<4x16x16xf32> to vector<4x16xf32>
    %31 = vector.shape_cast %30 : vector<4x16xf32> to vector<4x16x1xf32>
    %32 = arith.truncf %29 : vector<4x16x16xf32> to vector<4x16x16xbf16>
    %33 = arith.truncf %21 : vector<4x16x32xf32> to vector<4x16x32xbf16>
    "tpu.trace_start"() <{level = 10 : i32, message = "nqk,nkd->nqd"}> : () -> ()
    %cst_10 = arith.constant dense<0.000000e+00> : vector<4x16x32xf32>
    %34 = tpu.matmul %32, %33, %cst_10 {dimension_numbers = #tpu.dot_dimension_numbers<[2], [1], [1], [2], [0, 0, 0, 1, 1, 2], [0], [0]>} : vector<4x16x16xbf16>, vector<4x16x32xbf16>, vector<4x16x32xf32> -> vector<4x16x32xf32>
    "tpu.trace_stop"() : () -> ()
    %35 = tpu.reciprocal %31 {approx = true} : vector<4x16x1xf32> -> vector<4x16x1xf32>
    %36 = vector.broadcast %35 : vector<4x16x1xf32> to vector<4x16x32xf32>
    %37 = arith.mulf %34, %36 : vector<4x16x32xf32>
    %38 = tpu.transpose %37, [1, 0, 2] : vector<4x16x32xf32> -> vector<16x4x32xf32>
    %39 = vector.shape_cast %38 : vector<16x4x32xf32> to vector<16x128xf32>
    %40 = arith.truncf %39 : vector<16x128xf32> to vector<16x128xbf16>
    %c0_11 = arith.constant 0 : index
    %c0_12 = arith.constant 0 : index
    %41 = vector.load %arg4[%c0_11, %c0_12] : memref<128x128xbf16, #tpu.memory_space<vmem>>, vector<128x128xbf16>
    %cst_13 = arith.constant dense<0.000000e+00> : vector<16x128xf32>
    %42 = tpu.matmul %40, %41, %cst_13 {dimension_numbers = #tpu.dot_dimension_numbers<[1], [0], [0], [1], [0, 0, 1, 1], [], []>} : vector<16x128xbf16>, vector<128x128xbf16>, vector<16x128xf32> -> vector<16x128xf32>
    %c0_14 = arith.constant 0 : index
    %c0_15 = arith.constant 0 : index
    %43 = vector.load %arg5[%c0_14, %c0_15] : memref<1x128xf32, #tpu.memory_space<vmem>>, vector<1x128xf32>
    %44 = vector.broadcast %43 : vector<1x128xf32> to vector<16x128xf32>
    %45 = arith.addf %42, %44 : vector<16x128xf32>
    %46 = vector.extract_strided_slice %1 {offsets = [0, 0], sizes = [16, 128], strides = [1, 1]} : vector<32x128xf32> to vector<16x128xf32>
    %47 = arith.addf %46, %45 : vector<16x128xf32>
    %c0_16 = arith.constant 0 : index
    %c0_17 = arith.constant 0 : index
    %48 = vector.load %arg6[%c0_16, %c0_17] : memref<1x128xf32, #tpu.memory_space<vmem>>, vector<1x128xf32>
    %c0_18 = arith.constant 0 : index
    %c0_19 = arith.constant 0 : index
    %49 = vector.load %arg7[%c0_18, %c0_19] : memref<1x128xf32, #tpu.memory_space<vmem>>, vector<1x128xf32>
    %cst_20 = arith.constant dense<0.000000e+00> : vector<16xf32>
    %50 = vector.multi_reduction <add>, %47, %cst_20 [1] : vector<16x128xf32> to vector<16xf32>
    %51 = vector.shape_cast %50 : vector<16xf32> to vector<16x1xf32>
    %cst_21 = arith.constant 1.280000e+02 : f32
    %52 = vector.broadcast %cst_21 : f32 to vector<16x1xf32>
    %53 = arith.divf %51, %52 : vector<16x1xf32>
    %54 = vector.broadcast %53 : vector<16x1xf32> to vector<16x128xf32>
    %55 = arith.subf %47, %54 : vector<16x128xf32>
    %56 = arith.mulf %55, %55 : vector<16x128xf32>
    %cst_22 = arith.constant dense<0.000000e+00> : vector<16xf32>
    %57 = vector.multi_reduction <add>, %56, %cst_22 [1] : vector<16x128xf32> to vector<16xf32>
    %58 = vector.shape_cast %57 : vector<16xf32> to vector<16x1xf32>
    %cst_23 = arith.constant 1.280000e+02 : f32
    %59 = vector.broadcast %cst_23 : f32 to vector<16x1xf32>
    %60 = arith.divf %58, %59 : vector<16x1xf32>
    %cst_24 = arith.constant 9.99999974E-6 : f32
    %61 = vector.broadcast %cst_24 : f32 to vector<16x1xf32>
    %62 = arith.addf %60, %61 : vector<16x1xf32>
    %63 = math.rsqrt %62 : vector<16x1xf32>
    %64 = vector.broadcast %63 : vector<16x1xf32> to vector<16x128xf32>
    %65 = arith.mulf %55, %64 : vector<16x128xf32>
    %66 = vector.broadcast %48 : vector<1x128xf32> to vector<16x128xf32>
    %67 = arith.mulf %65, %66 : vector<16x128xf32>
    %68 = vector.broadcast %49 : vector<1x128xf32> to vector<16x128xf32>
    %69 = arith.addf %67, %68 : vector<16x128xf32>
    %c0_25 = arith.constant 0 : index
    %c0_26 = arith.constant 0 : index
    %c0_27 = arith.constant 0 : index
    %70 = vector.load %arg8[%c0_25, %c0_26, %c0_27] : memref<2x16x128xf32, #tpu.memory_space<vmem>>, vector<1x16x128xf32>
    %71 = vector.shape_cast %70 : vector<1x16x128xf32> to vector<16x128xf32>
    %72 = vector.shape_cast %69 : vector<16x128xf32> to vector<1x16x128xf32>
    tpu.vector_store %arg8[%c0_25, %c0_26, %c0_27], %72 {strides = array<i32>} : memref<2x16x128xf32, #tpu.memory_space<vmem>>, vector<1x16x128xf32>,
    %73 = vector.extract_strided_slice %10 {offsets = [16, 0], sizes = [16, 128], strides = [1, 1]} : vector<32x128xf32> to vector<16x128xf32>
    %74 = vector.shape_cast %73 : vector<16x128xf32> to vector<16x4x32xf32>
    %75 = tpu.transpose %74, [1, 0, 2] : vector<16x4x32xf32> -> vector<4x16x32xf32>
    %76 = vector.extract_strided_slice %11 {offsets = [16, 0], sizes = [16, 128], strides = [1, 1]} : vector<32x128xf32> to vector<16x128xf32>
    %77 = vector.shape_cast %76 : vector<16x128xf32> to vector<16x4x32xf32>
    %78 = tpu.transpose %77, [1, 0, 2] : vector<16x4x32xf32> -> vector<4x16x32xf32>
    %79 = vector.extract_strided_slice %12 {offsets = [16, 0], sizes = [16, 128], strides = [1, 1]} : vector<32x128xf32> to vector<16x128xf32>
    %80 = vector.shape_cast %79 : vector<16x128xf32> to vector<16x4x32xf32>
    %81 = tpu.transpose %80, [1, 0, 2] : vector<16x4x32xf32> -> vector<4x16x32xf32>
    %82 = arith.truncf %75 : vector<4x16x32xf32> to vector<4x16x32xbf16>
    %83 = arith.truncf %78 : vector<4x16x32xf32> to vector<4x16x32xbf16>
    "tpu.trace_start"() <{level = 10 : i32, message = "nqd,nkd->nqk"}> : () -> ()
    %cst_28 = arith.constant dense<0.000000e+00> : vector<4x16x16xf32>
    %84 = tpu.matmul %82, %83, %cst_28 {dimension_numbers = #tpu.dot_dimension_numbers<[2], [2], [1], [1], [0, 0, 0, 1, 1, 1], [0], [0]>} : vector<4x16x32xbf16>, vector<4x16x32xbf16>, vector<4x16x16xf32> -> vector<4x16x16xf32>
    "tpu.trace_stop"() : () -> ()
    %cst_29 = arith.constant dense<0xFF800000> : vector<4x16xf32>
    %85 = vector.multi_reduction <maximumf>, %84, %cst_29 [2] : vector<4x16x16xf32> to vector<4x16xf32>
    %86 = vector.shape_cast %85 : vector<4x16xf32> to vector<4x16x1xf32>
    %87 = vector.broadcast %86 : vector<4x16x1xf32> to vector<4x16x16xf32>
    %88 = arith.subf %84, %87 : vector<4x16x16xf32>
    %89 = math.exp %88 : vector<4x16x16xf32>
    %cst_30 = arith.constant dense<0.000000e+00> : vector<4x16xf32>
    %90 = vector.multi_reduction <add>, %89, %cst_30 [2] : vector<4x16x16xf32> to vector<4x16xf32>
    %91 = vector.shape_cast %90 : vector<4x16xf32> to vector<4x16x1xf32>
    %92 = arith.truncf %89 : vector<4x16x16xf32> to vector<4x16x16xbf16>
    %93 = arith.truncf %81 : vector<4x16x32xf32> to vector<4x16x32xbf16>
    "tpu.trace_start"() <{level = 10 : i32, message = "nqk,nkd->nqd"}> : () -> ()
    %cst_31 = arith.constant dense<0.000000e+00> : vector<4x16x32xf32>
    %94 = tpu.matmul %92, %93, %cst_31 {dimension_numbers = #tpu.dot_dimension_numbers<[2], [1], [1], [2], [0, 0, 0, 1, 1, 2], [0], [0]>} : vector<4x16x16xbf16>, vector<4x16x32xbf16>, vector<4x16x32xf32> -> vector<4x16x32xf32>
    "tpu.trace_stop"() : () -> ()
    %95 = tpu.reciprocal %91 {approx = true} : vector<4x16x1xf32> -> vector<4x16x1xf32>
    %96 = vector.broadcast %95 : vector<4x16x1xf32> to vector<4x16x32xf32>
    %97 = arith.mulf %94, %96 : vector<4x16x32xf32>
    %98 = tpu.transpose %97, [1, 0, 2] : vector<4x16x32xf32> -> vector<16x4x32xf32>
    %99 = vector.shape_cast %98 : vector<16x4x32xf32> to vector<16x128xf32>
    %100 = arith.truncf %99 : vector<16x128xf32> to vector<16x128xbf16>
    %c0_32 = arith.constant 0 : index
    %c0_33 = arith.constant 0 : index
    %101 = vector.load %arg4[%c0_32, %c0_33] : memref<128x128xbf16, #tpu.memory_space<vmem>>, vector<128x128xbf16>
    %cst_34 = arith.constant dense<0.000000e+00> : vector<16x128xf32>
    %102 = tpu.matmul %100, %101, %cst_34 {dimension_numbers = #tpu.dot_dimension_numbers<[1], [0], [0], [1], [0, 0, 1, 1], [], []>} : vector<16x128xbf16>, vector<128x128xbf16>, vector<16x128xf32> -> vector<16x128xf32>
    %c0_35 = arith.constant 0 : index
    %c0_36 = arith.constant 0 : index
    %103 = vector.load %arg5[%c0_35, %c0_36] : memref<1x128xf32, #tpu.memory_space<vmem>>, vector<1x128xf32>
    %104 = vector.broadcast %103 : vector<1x128xf32> to vector<16x128xf32>
    %105 = arith.addf %102, %104 : vector<16x128xf32>
    %106 = vector.extract_strided_slice %1 {offsets = [16, 0], sizes = [16, 128], strides = [1, 1]} : vector<32x128xf32> to vector<16x128xf32>
    %107 = arith.addf %106, %105 : vector<16x128xf32>
    %c0_37 = arith.constant 0 : index
    %c0_38 = arith.constant 0 : index
    %108 = vector.load %arg6[%c0_37, %c0_38] : memref<1x128xf32, #tpu.memory_space<vmem>>, vector<1x128xf32>
    %c0_39 = arith.constant 0 : index
    %c0_40 = arith.constant 0 : index
    %109 = vector.load %arg7[%c0_39, %c0_40] : memref<1x128xf32, #tpu.memory_space<vmem>>, vector<1x128xf32>
    %cst_41 = arith.constant dense<0.000000e+00> : vector<16xf32>
    %110 = vector.multi_reduction <add>, %107, %cst_41 [1] : vector<16x128xf32> to vector<16xf32>
    %111 = vector.shape_cast %110 : vector<16xf32> to vector<16x1xf32>
    %cst_42 = arith.constant 1.280000e+02 : f32
    %112 = vector.broadcast %cst_42 : f32 to vector<16x1xf32>
    %113 = arith.divf %111, %112 : vector<16x1xf32>
    %114 = vector.broadcast %113 : vector<16x1xf32> to vector<16x128xf32>
    %115 = arith.subf %107, %114 : vector<16x128xf32>
    %116 = arith.mulf %115, %115 : vector<16x128xf32>
    %cst_43 = arith.constant dense<0.000000e+00> : vector<16xf32>
    %117 = vector.multi_reduction <add>, %116, %cst_43 [1] : vector<16x128xf32> to vector<16xf32>
    %118 = vector.shape_cast %117 : vector<16xf32> to vector<16x1xf32>
    %cst_44 = arith.constant 1.280000e+02 : f32
    %119 = vector.broadcast %cst_44 : f32 to vector<16x1xf32>
    %120 = arith.divf %118, %119 : vector<16x1xf32>
    %cst_45 = arith.constant 9.99999974E-6 : f32
    %121 = vector.broadcast %cst_45 : f32 to vector<16x1xf32>
    %122 = arith.addf %120, %121 : vector<16x1xf32>
    %123 = math.rsqrt %122 : vector<16x1xf32>
    %124 = vector.broadcast %123 : vector<16x1xf32> to vector<16x128xf32>
    %125 = arith.mulf %115, %124 : vector<16x128xf32>
    %126 = vector.broadcast %108 : vector<1x128xf32> to vector<16x128xf32>
    %127 = arith.mulf %125, %126 : vector<16x128xf32>
    %128 = vector.broadcast %109 : vector<1x128xf32> to vector<16x128xf32>
    %129 = arith.addf %127, %128 : vector<16x128xf32>
    %c1 = arith.constant 1 : index
    %c0_46 = arith.constant 0 : index
    %c0_47 = arith.constant 0 : index
    %130 = vector.load %arg8[%c1, %c0_46, %c0_47] : memref<2x16x128xf32, #tpu.memory_space<vmem>>, vector<1x16x128xf32>
    %131 = vector.shape_cast %130 : vector<1x16x128xf32> to vector<16x128xf32>
    %132 = vector.shape_cast %129 : vector<16x128xf32> to vector<1x16x128xf32>
    tpu.vector_store %arg8[%c1, %c0_46, %c0_47], %132 {strides = array<i32>} : memref<2x16x128xf32, #tpu.memory_space<vmem>>, vector<1x16x128xf32>,
    return
  }
  func.func @transform_0(%arg0: i32) -> (i32, i32, i32) {
    %c0_i32 = arith.constant 0 : i32
    %c0_i32_0 = arith.constant 0 : i32
    %c0_i32_1 = arith.constant 0 : i32
    return %arg0, %c0_i32, %c0_i32_0 : i32, i32, i32
  }
  func.func @transform_1(%arg0: i32) -> (i32, i32) {
    %c0_i32 = arith.constant 0 : i32
    %c0_i32_0 = arith.constant 0 : i32
    %c0_i32_1 = arith.constant 0 : i32
    return %c0_i32, %c0_i32_0 : i32, i32
  }
  func.func @transform_2(%arg0: i32) -> (i32, i32) {
    %c0_i32 = arith.constant 0 : i32
    %c0_i32_0 = arith.constant 0 : i32
    %c0_i32_1 = arith.constant 0 : i32
    return %c0_i32, %c0_i32_0 : i32, i32
  }
  func.func @transform_3(%arg0: i32) -> (i32, i32) {
    %c0_i32 = arith.constant 0 : i32
    %c0_i32_0 = arith.constant 0 : i32
    %c0_i32_1 = arith.constant 0 : i32
    return %c0_i32, %c0_i32_0 : i32, i32
  }
  func.func @transform_4(%arg0: i32) -> (i32, i32) {
    %c0_i32 = arith.constant 0 : i32
    %c0_i32_0 = arith.constant 0 : i32
    %c0_i32_1 = arith.constant 0 : i32
    return %c0_i32, %c0_i32_0 : i32, i32
  }
  func.func @transform_5(%arg0: i32) -> (i32, i32) {
    %c0_i32 = arith.constant 0 : i32
    %c0_i32_0 = arith.constant 0 : i32
    %c0_i32_1 = arith.constant 0 : i32
    return %c0_i32, %c0_i32_0 : i32, i32
  }
  func.func @transform_6(%arg0: i32) -> (i32, i32) {
    %c0_i32 = arith.constant 0 : i32
    %c0_i32_0 = arith.constant 0 : i32
    %c0_i32_1 = arith.constant 0 : i32
    return %c0_i32, %c0_i32_0 : i32, i32
  }
  func.func @transform_7(%arg0: i32) -> (i32, i32, i32) {
    %c0_i32 = arith.constant 0 : i32
    %c0_i32_0 = arith.constant 0 : i32
    %c0_i32_1 = arith.constant 0 : i32
    return %arg0, %c0_i32, %c0_i32_0 : i32, i32, i32
  }
}

</mosaic_0001>

<llo_original>
// kernel: fft_block.3
$region0: #{fft_block.3}
  #allocation0 [shape = 'u32[]', space=smem, size = 0x4, offset = 0x4, fixed_abs, tag = 'smem constant byte address 0x4 - core index']
  #allocation1 [shape = 'u32[144,128]{1,0:T(1,128)}', space=vmem, size = 0x12000, scoped, tag = 'internal scratch']
  #allocation2 [shape = 'f32[48,128]{1,0:T(8,128)}', space=vmem, size = 0x6000, scoped, tag = 'scratch operand']
  #allocation3 [shape = 'f32[48,256]{1,0:T(8,128)}', space=vmem, size = 0xc000, scoped, tag = 'scratch operand']
  %s0 = inlined_call_operand.vmem [shape: f32[4,16,128], index: 0, kind: input, shape index: {}]
  %s1 = inlined_call_operand.vmem [shape: bf16[384,256], index: 1, kind: input, shape index: {}]
  %s2 = inlined_call_operand.vmem [shape: f32[1,256], index: 2, kind: input, shape index: {}]
  %s3 = inlined_call_operand.vmem [shape: bf16[768,128], index: 3, kind: input, shape index: {}]
  %s4 = inlined_call_operand.vmem [shape: f32[1,128], index: 4, kind: input, shape index: {}]
  %s5 = inlined_call_operand.vmem [shape: f32[1,128], index: 5, kind: input, shape index: {}]
  %s6 = inlined_call_operand.vmem [shape: f32[1,128], index: 6, kind: input, shape index: {}]
  %s7 = inlined_call_operand.vmem [shape: f32[4,16,128], index: 7, kind: output, shape index: {}]
  %s8 = sld [smem:[#allocation0]]
  $region133: #{fft_block.3} parent=0
    _
  %s10 = ssub.s32 1, %s8
  %s11 = scalar_select 0, %s10, %s8
  $region1: #{fft_block.3} parent=0
    #allocation4 [shape = 'u8[32768]{0}', space=vmem, size = 0x8000, scoped, tag = 'input window, operand 0']
    #allocation5 [shape = 'u8[32768]{0}', space=vmem, size = 0x8000, scoped, tag = 'output window, operand 0']
    loop: start=0, step=1, limit=4
    $region2: #{fft_block.3} parent=1 // loop_pre_header
      _
    $region3: #{fft_block.3} parent=1 // loop_header
      %s13 = sphi 0, %s17
      %p14 = scmp.ge.s32.totalorder %s13, 4
      %s23 = sphi 0, %s25
      %s26 = sphi 0, %s23
      %s27 = sphi 0, %s26
      %s43 = sphi 0, %s27
      %s47 = sphi 0, %s47
      %s49 = sphi 0, %s47
      %s50 = sphi 0, %s49
      %s64 = sphi 0, %s50
      %s68 = sphi 0, %s68
      %s70 = sphi 0, %s68
      %s71 = sphi 0, %s70
      %s85 = sphi 0, %s71
      %s89 = sphi 0, %s89
      %s91 = sphi 0, %s89
      %s92 = sphi 0, %s91
      %s106 = sphi 0, %s92
      %s110 = sphi 0, %s110
      %s112 = sphi 0, %s110
      %s113 = sphi 0, %s112
      %s127 = sphi 0, %s113
      %s131 = sphi 0, %s131
      %s133 = sphi 0, %s131
      %s134 = sphi 0, %s133
      %s148 = sphi 0, %s134
      %s152 = sphi 0, %s152
      %s154 = sphi 0, %s152
      %s155 = sphi 0, %s154
      %s169 = sphi 0, %s155
      %s175 = sphi 0, %s177
      %s178 = sphi 0, %s175
      %s179 = sphi 0, %s178
      %s195 = sphi 0, %s179
    $region4: #{fft_block.3} parent=1 // loop_header_branch
      %16 = sbr.rel (%p14) target = $region8
    $region5: #{fft_block.3} parent=1 // loop_body
      %s18 = ssub.s32 %s13, 1
      %s19 = ssub.s32 %s13, 2
      %s20 = sadd.s32 %s13, 1
      %s21 = ssub.s32 %s13, %s20
      %p22 = scmp.eq.s32.totalorder %s21, 0
      %s24 = sadd.s32 %s23, 1
      %s25 = scalar_select %p22, %s23, %s24
      %p28 = pneg %p22
      %p29 = scmp.eq.s32.totalorder %s13, 1
      %p30 = por %p28, %p29
      %p31 = scmp.ne.s32.totalorder %s23, %s26
      %p32 = scmp.eq.s32.totalorder %s13, 0
      %p33 = por %p31, %p32
      %p34 = scmp.ne.s32.totalorder %s23, %s26
      %p35 = scmp.eq.s32.totalorder %s18, 1
      %p36 = por %p34, %p35
      %p37 = scmp.ne.s32.totalorder %s26, %s27
      %p38 = scmp.eq.s32.totalorder %s18, 0
      %p39 = por %p37, %p38
      %p40 = scmp.ne.s32.totalorder %s26, %s27
      %p41 = scmp.eq.s32.totalorder %s19, 1
      %p42 = por %p40, %p41
      %p44 = scmp.ne.s32.totalorder %s27, %s43
      %p45 = scmp.eq.s32.totalorder %s19, 0
      %p46 = por %p44, %p45
      %s48 = sadd.s32 %s47, 1
      %p51 = scmp.eq.s32.totalorder %s13, 1
      %p52 = scmp.ne.s32.totalorder %s47, %s49
      %p53 = scmp.eq.s32.totalorder %s13, 0
      %p54 = por %p52, %p53
      %p55 = scmp.ne.s32.totalorder %s47, %s49
      %p56 = scmp.eq.s32.totalorder %s18, 1
      %p57 = por %p55, %p56
      %p58 = scmp.ne.s32.totalorder %s49, %s50
      %p59 = scmp.eq.s32.totalorder %s18, 0
      %p60 = por %p58, %p59
      %p61 = scmp.ne.s32.totalorder %s49, %s50
      %p62 = scmp.eq.s32.totalorder %s19, 1
      %p63 = por %p61, %p62
      %p65 = scmp.ne.s32.totalorder %s50, %s64
      %p66 = scmp.eq.s32.totalorder %s19, 0
      %p67 = por %p65, %p66
      %s69 = sadd.s32 %s68, 1
      %p72 = scmp.eq.s32.totalorder %s13, 1
      %p73 = scmp.ne.s32.totalorder %s68, %s70
      %p74 = scmp.eq.s32.totalorder %s13, 0
      %p75 = por %p73, %p74
      %p76 = scmp.ne.s32.totalorder %s68, %s70
      %p77 = scmp.eq.s32.totalorder %s18, 1
      %p78 = por %p76, %p77
      %p79 = scmp.ne.s32.totalorder %s70, %s71
      %p80 = scmp.eq.s32.totalorder %s18, 0
      %p81 = por %p79, %p80
      %p82 = scmp.ne.s32.totalorder %s70, %s71
      %p83 = scmp.eq.s32.totalorder %s19, 1
      %p84 = por %p82, %p83
      %p86 = scmp.ne.s32.totalorder %s71, %s85
      %p87 = scmp.eq.s32.totalorder %s19, 0
      %p88 = por %p86, %p87
      %s90 = sadd.s32 %s89, 1
      %p93 = scmp.eq.s32.totalorder %s13, 1
      %p94 = scmp.ne.s32.totalorder %s89, %s91
      %p95 = scmp.eq.s32.totalorder %s13, 0
      %p96 = por %p94, %p95
      %p97 = scmp.ne.s32.totalorder %s89, %s91
      %p98 = scmp.eq.s32.totalorder %s18, 1
      %p99 = por %p97, %p98
      %p100 = scmp.ne.s32.totalorder %s91, %s92
      %p101 = scmp.eq.s32.totalorder %s18, 0
      %p102 = por %p100, %p101
      %p103 = scmp.ne.s32.totalorder %s91, %s92
      %p104 = scmp.eq.s32.totalorder %s19, 1
      %p105 = por %p103, %p104
      %p107 = scmp.ne.s32.totalorder %s92, %s106
      %p108 = scmp.eq.s32.totalorder %s19, 0
      %p109 = por %p107, %p108
      %s111 = sadd.s32 %s110, 1
      %p114 = scmp.eq.s32.totalorder %s13, 1
      %p115 = scmp.ne.s32.totalorder %s110, %s112
      %p116 = scmp.eq.s32.totalorder %s13, 0
      %p117 = por %p115, %p116
      %p118 = scmp.ne.s32.totalorder %s110, %s112
      %p119 = scmp.eq.s32.totalorder %s18, 1
      %p120 = por %p118, %p119
      %p121 = scmp.ne.s32.totalorder %s112, %s113
      %p122 = scmp.eq.s32.totalorder %s18, 0
      %p123 = por %p121, %p122
      %p124 = scmp.ne.s32.totalorder %s112, %s113
      %p125 = scmp.eq.s32.totalorder %s19, 1
      %p126 = por %p124, %p125
      %p128 = scmp.ne.s32.totalorder %s113, %s127
      %p129 = scmp.eq.s32.totalorder %s19, 0
      %p130 = por %p128, %p129
      %s132 = sadd.s32 %s131, 1
      %p135 = scmp.eq.s32.totalorder %s13, 1
      %p136 = scmp.ne.s32.totalorder %s131, %s133
      %p137 = scmp.eq.s32.totalorder %s13, 0
      %p138 = por %p136, %p137
      %p139 = scmp.ne.s32.totalorder %s131, %s133
      %p140 = scmp.eq.s32.totalorder %s18, 1
      %p141 = por %p139, %p140
      %p142 = scmp.ne.s32.totalorder %s133, %s134
      %p143 = scmp.eq.s32.totalorder %s18, 0
      %p144 = por %p142, %p143
      %p145 = scmp.ne.s32.totalorder %s133, %s134
      %p146 = scmp.eq.s32.totalorder %s19, 1
      %p147 = por %p145, %p146
      %p149 = scmp.ne.s32.totalorder %s134, %s148
      %p150 = scmp.eq.s32.totalorder %s19, 0
      %p151 = por %p149, %p150
      %s153 = sadd.s32 %s152, 1
      %p156 = scmp.eq.s32.totalorder %s13, 1
      %p157 = scmp.ne.s32.totalorder %s152, %s154
      %p158 = scmp.eq.s32.totalorder %s13, 0
      %p159 = por %p157, %p158
      %p160 = scmp.ne.s32.totalorder %s152, %s154
      %p161 = scmp.eq.s32.totalorder %s18, 1
      %p162 = por %p160, %p161
      %p163 = scmp.ne.s32.totalorder %s154, %s155
      %p164 = scmp.eq.s32.totalorder %s18, 0
      %p165 = por %p163, %p164
      %p166 = scmp.ne.s32.totalorder %s154, %s155
      %p167 = scmp.eq.s32.totalorder %s19, 1
      %p168 = por %p166, %p167
      %p170 = scmp.ne.s32.totalorder %s155, %s169
      %p171 = scmp.eq.s32.totalorder %s19, 0
      %p172 = por %p170, %p171
      %s173 = ssub.s32 %s13, %s20
      %p174 = scmp.eq.s32.totalorder %s173, 0
      %s176 = sadd.s32 %s175, 1
      %s177 = scalar_select %p174, %s175, %s176
      %p180 = pneg %p174
      %p181 = scmp.eq.s32.totalorder %s13, 1
      %p182 = por %p180, %p181
      %p183 = scmp.ne.s32.totalorder %s175, %s178
      %p184 = scmp.eq.s32.totalorder %s13, 0
      %p185 = por %p183, %p184
      %p186 = scmp.ne.s32.totalorder %s175, %s178
      %p187 = scmp.eq.s32.totalorder %s18, 1
      %p188 = por %p186, %p187
      %p189 = scmp.ne.s32.totalorder %s178, %s179
      %p190 = scmp.eq.s32.totalorder %s18, 0
      %p191 = por %p189, %p190
      %p192 = scmp.ne.s32.totalorder %s178, %s179
      %p193 = scmp.eq.s32.totalorder %s19, 1
      %p194 = por %p192, %p193
      %p196 = scmp.ne.s32.totalorder %s179, %s195
      %p197 = scmp.eq.s32.totalorder %s19, 0
      %p198 = por %p196, %p197
      %p199 = scmp.le.s32.totalorder 1, %s13
      %p200 = scmp.lt.s32.totalorder %s13, 3
      %p201 = pnand %p199, %p200
      %p202 = pneg %p201
      // Predicated region
      $region9: #{fft_block.3} parent=5 // pred_check
        _
      $region10: #{fft_block.3} parent=5 // pred_check_branch
        %204 = sbr.rel (%p201) target = $region12
      $region11: #{fft_block.3} parent=5 // pred_region
        %s205 = ssub.s32 %s13, 1
        // Predicated region
        $region13: #{fft_block.3} parent=11 // pred_check
          %p206 = pneg %p60
        $region14: #{fft_block.3} parent=11 // pred_check_branch
          %208 = sbr.rel (%p206) target = $region16
        $region15: #{fft_block.3} parent=11 // pred_region
          _
        $region16: #{fft_block.3} parent=11 // pred_fallthru
          _
        // Predicated region
        $region17: #{fft_block.3} parent=11 // pred_check
          %p209 = pneg %p81
        $region18: #{fft_block.3} parent=11 // pred_check_branch
          %211 = sbr.rel (%p209) target = $region20
        $region19: #{fft_block.3} parent=11 // pred_region
          _
        $region20: #{fft_block.3} parent=11 // pred_fallthru
          _
        // Predicated region
        $region21: #{fft_block.3} parent=11 // pred_check
          %p212 = pneg %p102
        $region22: #{fft_block.3} parent=11 // pred_check_branch
          %214 = sbr.rel (%p212) target = $region24
        $region23: #{fft_block.3} parent=11 // pred_region
          _
        $region24: #{fft_block.3} parent=11 // pred_fallthru
          _
        // Predicated region
        $region25: #{fft_block.3} parent=11 // pred_check
          %p215 = pneg %p123
        $region26: #{fft_block.3} parent=11 // pred_check_branch
          %217 = sbr.rel (%p215) target = $region28
        $region27: #{fft_block.3} parent=11 // pred_region
          _
        $region28: #{fft_block.3} parent=11 // pred_fallthru
          _
        // Predicated region
        $region29: #{fft_block.3} parent=11 // pred_check
          %p218 = pneg %p144
        $region30: #{fft_block.3} parent=11 // pred_check_branch
          %220 = sbr.rel (%p218) target = $region32
        $region31: #{fft_block.3} parent=11 // pred_region
          _
        $region32: #{fft_block.3} parent=11 // pred_fallthru
          _
        // Predicated region
        $region33: #{fft_block.3} parent=11 // pred_check
          %p221 = pneg %p165
        $region34: #{fft_block.3} parent=11 // pred_check_branch
          %223 = sbr.rel (%p221) target = $region36
        $region35: #{fft_block.3} parent=11 // pred_region
          _
        $region36: #{fft_block.3} parent=11 // pred_fallthru
          _
      $region12: #{fft_block.3} parent=5 // pred_fallthru
        _
      %p224 = scmp.lt.s32.totalorder %s13, 2
      // Predicated region
      $region37: #{fft_block.3} parent=5 // pred_check
        %p225 = pneg %p224
      $region38: #{fft_block.3} parent=5 // pred_check_branch
        %227 = sbr.rel (%p225) target = $region40
      $region39: #{fft_block.3} parent=5 // pred_region
        // Predicated region
        $region41: #{fft_block.3} parent=39 // pred_check
          %p228 = pneg %p33
        $region42: #{fft_block.3} parent=39 // pred_check_branch
          %230 = sbr.rel (%p228) target = $region44
        $region43: #{fft_block.3} parent=39 // pred_region
          %s231 = sand.u32 %s23, 1
          %s232 = sand.u32 %s23, 1
          %s233 = smul.addr %s232, 32
          %s234 = scalar_lea.vmem [#allocation4], %s233
          %s235 = smul.addr %s13, 8
          %s236 = scalar_lea.vmem %s0, %s235
          // Predicated region
          $region45: #{fft_block.3} parent=43 // pred_check
            _
          $region46: #{fft_block.3} parent=43 // pred_check_branch
            %238 = sbr.rel (0) target = $region48
          $region47: #{fft_block.3} parent=43 // pred_region
            // Predicated region
            $region49: #{fft_block.3} parent=47 // pred_check
              _
            $region50: #{fft_block.3} parent=47 // pred_check_branch
              %240 = sbr.rel (0) target = $region52
            $region51: #{fft_block.3} parent=47 // pred_region
              // Predicated region
              $region64: #{fft_block.3} parent=51 // pred_check
                _
              $region65: #{fft_block.3} parent=51 // pred_check_branch
                %261 = sbr.rel (0) target = $region67
              $region66: #{fft_block.3} parent=51 // pred_region
                loop: start=0, step=1, limit=1
                $region68: #{fft_block.3} parent=66 // loop_pre_header
                  _
                $region69: #{fft_block.3} parent=66 // loop_header
                  %s263 = sphi 0, %s267
                  %p264 = scmp.ge.s32.totalorder %s263, 1
                  %s268 = sphi %s236, %s236
                  %s269 = sphi %s234, %s234
                $region70: #{fft_block.3} parent=66 // loop_header_branch
                  %266 = sbr.rel (%p264) target = $region74
                $region71: #{fft_block.3} parent=66 // loop_body
                  %v270 = vld [vmem:[%s268] sm:$0xff]
                  %271 = vst [vmem:[%s269] sm:$0xff] %v270
                  %v272 = vld [vmem:[%s268 + $0x10] sm:$0xff]
                  %273 = vst [vmem:[%s269 + $0x8] sm:$0xff] %v272
                  %v274 = vld [vmem:[%s268 + $0x20] sm:$0xff]
                  %275 = vst [vmem:[%s269 + $0x10] sm:$0xff] %v274
                  %v276 = vld [vmem:[%s268 + $0x30] sm:$0xff]
                  %277 = vst [vmem:[%s269 + $0x18] sm:$0xff] %v276
                $region72: #{fft_block.3} parent=66 // loop_footer
                  %s267 = sadd.s32 1, %s263
                $region73: #{fft_block.3} parent=66 // loop_footer_branch
                  %262 = sbr.rel target = $region69
                $region74: #{fft_block.3} parent=66 // loop_exit
                  _
              $region67: #{fft_block.3} parent=51 // pred_fallthru
                _
              // Predicated region
              $region75: #{fft_block.3} parent=51 // pred_check
                _
              $region76: #{fft_block.3} parent=51 // pred_check_branch
                %279 = sbr.rel target = $region78
              $region77: #{fft_block.3} parent=51 // pred_region
                _
              $region78: #{fft_block.3} parent=51 // pred_fallthru
                _
            $region52: #{fft_block.3} parent=47 // pred_fallthru
              _
            // Predicated region
            $region53: #{fft_block.3} parent=47 // pred_check
              _
            $region54: #{fft_block.3} parent=47 // pred_check_branch
              %242 = sbr.rel target = $region56
            $region55: #{fft_block.3} parent=47 // pred_region
              loop: start=0, step=1, limit=1
              $region57: #{fft_block.3} parent=55 // loop_pre_header
                _
              $region58: #{fft_block.3} parent=55 // loop_header
                %s245 = sphi 0, %s249
                %p246 = scmp.ge.s32.totalorder %s245, 1
                %s250 = sphi %s236, %s236
                %s251 = sphi %s234, %s234
              $region59: #{fft_block.3} parent=55 // loop_header_branch
                %248 = sbr.rel (%p246) target = $region63
              $region60: #{fft_block.3} parent=55 // loop_body
                %v252 = vld [vmem:[%s250] sm:$0xff]
                %253 = vst [vmem:[%s251] sm:$0xff] %v252
                %v254 = vld [vmem:[%s250 + $0x10] sm:$0xff]
                %255 = vst [vmem:[%s251 + $0x8] sm:$0xff] %v254
                %v256 = vld [vmem:[%s250 + $0x20] sm:$0xff]
                %257 = vst [vmem:[%s251 + $0x10] sm:$0xff] %v256
                %v258 = vld [vmem:[%s250 + $0x30] sm:$0xff]
                %259 = vst [vmem:[%s251 + $0x18] sm:$0xff] %v258
              $region61: #{fft_block.3} parent=55 // loop_footer
                %s249 = sadd.s32 1, %s245
              $region62: #{fft_block.3} parent=55 // loop_footer_branch
                %244 = sbr.rel target = $region58
              $region63: #{fft_block.3} parent=55 // loop_exit
                _
            $region56: #{fft_block.3} parent=47 // pred_fallthru
              _
          $region48: #{fft_block.3} parent=43 // pred_fallthru
            _
          %280 = vnop
        $region44: #{fft_block.3} parent=39 // pred_fallthru
          _
      $region40: #{fft_block.3} parent=5 // pred_fallthru
        _
      %p281 = scmp.le.s32.totalorder 1, %s13
      %p282 = scmp.lt.s32.totalorder %s13, 3
      %p283 = pnand %p281, %p282
      %p284 = pneg %p283
      // Predicated region
      $region79: #{fft_block.3} parent=5 // pred_check
        _
      $region80: #{fft_block.3} parent=5 // pred_check_branch
        %286 = sbr.rel (%p283) target = $region82
      $region81: #{fft_block.3} parent=5 // pred_region
        %s287 = ssub.s32 %s13, 1
        %s288 = sand.u32 %s26, 1
        %s289 = sand.u32 %s26, 1
        %s290 = smul.addr %s289, 32
        %s291 = scalar_lea.vmem [#allocation4], %s290
        // Predicated region
        $region83: #{fft_block.3} parent=81 // pred_check
          %p292 = pneg %p39
        $region84: #{fft_block.3} parent=81 // pred_check_branch
          %294 = sbr.rel (%p292) target = $region86
        $region85: #{fft_block.3} parent=81 // pred_region
          _
        $region86: #{fft_block.3} parent=81 // pred_fallthru
          _
        %s295 = sand.u32 %s26, 1
        %s296 = sand.u32 %s26, 1
        %s297 = smul.addr %s296, 32
        %s298 = scalar_lea.vmem [#allocation4], %s297
        %p299 = pneg %p39
        %p300 = pneg %p36
        %p301 = pneg %p60
        %p302 = pneg %p57
        %p303 = pneg %p81
        %p304 = pneg %p78
        %p305 = pneg %p102
        %p306 = pneg %p99
        %p307 = pneg %p123
        %p308 = pneg %p120
        %p309 = pneg %p144
        %p310 = pneg %p141
        %p311 = pneg %p165
        %p312 = pneg %p162
        %p313 = pneg %p191
        %p314 = pneg %p188
        %s315 = sand.u32 %s178, 1
        %s316 = sand.u32 %s178, 1
        %s317 = smul.addr %s316, 32
        %s318 = scalar_lea.vmem [#allocation5], %s317
        %v320 = vld [vmem:[%s291] sm:$0xff]
        %v321 = vld [vmem:[%s291 + $0x8] sm:$0xff]
        %v322 = vld [vmem:[%s291 + $0x10] sm:$0xff]
        %v323 = vld [vmem:[%s291 + $0x18] sm:$0xff]
        %324 = vst [vmem:[#allocation2] sm:$0xff] 0.0
        %325 = vst [vmem:[#allocation2 + $0x28] sm:$0xff] 0.0
        %326 = vst [vmem:[#allocation2 + $0x8] sm:$0xff] %v320
        %327 = vst [vmem:[#allocation2 + $0x10] sm:$0xff] %v321
        %328 = vst [vmem:[#allocation2 + $0x18] sm:$0xff] %v322
        %329 = vst [vmem:[#allocation2 + $0x20] sm:$0xff] %v323
        %v330 = vld [vmem:[#allocation2] sm:$0xff]
        %v331 = vld [vmem:[#allocation2 + $0x8] sm:$0xff]
        %v332 = vld [vmem:[#allocation2 + $0x10] sm:$0xff]
        %v333 = vld [vmem:[#allocation2 + $0x18] sm:$0xff]
        %v334 = vpack.c.bf16 %v331, %v330
        %v335 = vpack.c.bf16 %v333, %v332
        %v336 = vld [vmem:[%s1] sm:$0xff]
        %v337 = vld [vmem:[%s1 + $0x8] sm:$0xff]
        %v338 = vld [vmem:[%s1 + $0x10] sm:$0xff]
        %v339 = vld [vmem:[%s1 + $0x18] sm:$0xff]
        %v340 = vld [vmem:[%s1 + $0x20] sm:$0xff]
        %v341 = vld [vmem:[%s1 + $0x28] sm:$0xff]
        %v342 = vld [vmem:[%s1 + $0x30] sm:$0xff]
        %v343 = vld [vmem:[%s1 + $0x38] sm:$0xff]
        %v344 = vld [vmem:[%s1 + $0x40] sm:$0xff]
        %v345 = vld [vmem:[%s1 + $0x48] sm:$0xff]
        %v346 = vld [vmem:[%s1 + $0x50] sm:$0xff]
        %v347 = vld [vmem:[%s1 + $0x58] sm:$0xff]
        %v348 = vld [vmem:[%s1 + $0x60] sm:$0xff]
        %v349 = vld [vmem:[%s1 + $0x68] sm:$0xff]
        %v350 = vld [vmem:[%s1 + $0x70] sm:$0xff]
        %v351 = vld [vmem:[%s1 + $0x78] sm:$0xff]
        %v352 = vld [vmem:[#allocation2 + $0x20] sm:$0xff]
        %v353 = vpack.c.bf16 %v332, %v331
        %v354 = vpack.c.bf16 %v352, %v333
        %v355 = vld [vmem:[%s1 + $0x80] sm:$0xff]
        %v356 = vld [vmem:[%s1 + $0x88] sm:$0xff]
        %v357 = vld [vmem:[%s1 + $0x90] sm:$0xff]
        %v358 = vld [vmem:[%s1 + $0x98] sm:$0xff]
        %v359 = vld [vmem:[%s1 + $0xa0] sm:$0xff]
        %v360 = vld [vmem:[%s1 + $0xa8] sm:$0xff]
        %v361 = vld [vmem:[%s1 + $0xb0] sm:$0xff]
        %v362 = vld [vmem:[%s1 + $0xb8] sm:$0xff]
        %v363 = vld [vmem:[%s1 + $0xc0] sm:$0xff]
        %v364 = vld [vmem:[%s1 + $0xc8] sm:$0xff]
        %v365 = vld [vmem:[%s1 + $0xd0] sm:$0xff]
        %v366 = vld [vmem:[%s1 + $0xd8] sm:$0xff]
        %v367 = vld [vmem:[%s1 + $0xe0] sm:$0xff]
        %v368 = vld [vmem:[%s1 + $0xe8] sm:$0xff]
        %v369 = vld [vmem:[%s1 + $0xf0] sm:$0xff]
        %v370 = vld [vmem:[%s1 + $0xf8] sm:$0xff]
        %v387 = vunpack.c.l.b16 %v355
        %v388 = vunpack.c.h.b16 %v355
        %v389 = vunpack.c.l.b16 %v356
        %v390 = vunpack.c.h.b16 %v356
        %v391 = vunpack.c.l.b16 %v357
        %v392 = vunpack.c.h.b16 %v357
        %v393 = vunpack.c.l.b16 %v358
        %v394 = vunpack.c.h.b16 %v358
        %v395 = vunpack.c.l.b16 %v359
        %v396 = vunpack.c.h.b16 %v359
        %v397 = vunpack.c.l.b16 %v360
        %v398 = vunpack.c.h.b16 %v360
        %v399 = vunpack.c.l.b16 %v361
        %v400 = vunpack.c.h.b16 %v361
        %v401 = vunpack.c.l.b16 %v362
        %v402 = vunpack.c.h.b16 %v362
        %v403 = vunpack.c.l.b16 %v363
        %v404 = vunpack.c.h.b16 %v363
        %v405 = vunpack.c.l.b16 %v364
        %v406 = vunpack.c.h.b16 %v364
        %v407 = vunpack.c.l.b16 %v365
        %v408 = vunpack.c.h.b16 %v365
        %v409 = vunpack.c.l.b16 %v366
        %v410 = vunpack.c.h.b16 %v366
        %v411 = vunpack.c.l.b16 %v367
        %v412 = vunpack.c.h.b16 %v367
        %v413 = vunpack.c.l.b16 %v368
        %v414 = vunpack.c.h.b16 %v368
        %v415 = vunpack.c.l.b16 %v369
        %v416 = vunpack.c.h.b16 %v369
        %v417 = vunpack.c.l.b16 %v370
        %v418 = vunpack.c.h.b16 %v370
        %v419 = vpack.c.b16 %v389, %v387
        %v420 = vpack.c.b16 %v390, %v388
        %v421 = vpack.c.b16 %v393, %v391
        %v422 = vpack.c.b16 %v394, %v392
        %v423 = vpack.c.b16 %v397, %v395
        %v424 = vpack.c.b16 %v398, %v396
        %v425 = vpack.c.b16 %v401, %v399
        %v426 = vpack.c.b16 %v402, %v400
        %v427 = vpack.c.b16 %v405, %v403
        %v428 = vpack.c.b16 %v406, %v404
        %v429 = vpack.c.b16 %v409, %v407
        %v430 = vpack.c.b16 %v410, %v408
        %v431 = vpack.c.b16 %v413, %v411
        %v432 = vpack.c.b16 %v414, %v412
        %v433 = vpack.c.b16 %v417, %v415
        %v434 = vpack.c.b16 %v418, %v416
        %451 = vmatprep.subr.bf16.mxu0 %v420
        %452 = vmatpush1.bf16.msra.mxu0 %v419
        %453 = vmatprep.subr.bf16.mxu0 %v422
        %454 = vmatpush1.bf16.msra.mxu0 %v421
        %455 = vmatprep.subr.bf16.mxu0 %v424
        %456 = vmatpush1.bf16.msra.mxu0 %v423
        %457 = vmatprep.subr.bf16.mxu0 %v426
        %458 = vmatpush1.bf16.msra.mxu0 %v425
        %459 = vmatprep.subr.bf16.mxu0 %v428
        %460 = vmatpush1.bf16.msra.mxu0 %v427
        %461 = vmatprep.subr.bf16.mxu0 %v430
        %462 = vmatpush1.bf16.msra.mxu0 %v429
        %463 = vmatprep.subr.bf16.mxu0 %v432
        %464 = vmatpush1.bf16.msra.mxu0 %v431
        %465 = vmatprep.subr.bf16.mxu0 %v434
        %466 = vmatpush1.bf16.msra.mxu0 %v433
        %467 = vmatprep.subr.bf16.mxu0 0
        %468 = vmatpush1.bf16.msra.mxu0 0
        %469 = vmatprep.subr.bf16.mxu0 0
        %470 = vmatpush1.bf16.msra.mxu0 0
        %471 = vmatprep.subr.bf16.mxu0 0
        %472 = vmatpush1.bf16.msra.mxu0 0
        %473 = vmatprep.subr.bf16.mxu0 0
        %474 = vmatpush1.bf16.msra.mxu0 0
        %475 = vmatprep.subr.bf16.mxu0 0
        %476 = vmatpush1.bf16.msra.mxu0 0
        %477 = vmatprep.subr.bf16.mxu0 0
        %478 = vmatpush1.bf16.msra.mxu0 0
        %479 = vmatprep.subr.bf16.mxu0 0
        %480 = vmatpush1.bf16.msra.mxu0 0
        %481 = vmatprep.subr.bf16.mxu0 0
        %482 = vmatpush1.bf16.msra.mxu0 0
        %483 = vmatprep.mubr.bf16.mxu0 0
        %484 = vmatmul.mubr.bf16.gmra.mrb[0].mxu0 %v353
        %v485 = vpop.f32.mrb[0].mxu0
        %v486 = vadd.f32 0.0, %v485
        %v487 = vpop.f32.mrb[0].mxu0
        %v488 = vadd.f32 0.0, %v487
        %v489 = vpop.f32.mrb[0].mxu0
        %v490 = vadd.f32 0.0, %v489
        %v491 = vpop.f32.mrb[0].mxu0
        %v492 = vadd.f32 0.0, %v491
        %493 = vmatprep.mubr.bf16.mxu0 0
        %494 = vmatmul.mubr.bf16.gmra.mrb[0].mxu0 %v354
        %v495 = vpop.f32.mrb[0].mxu0
        %v496 = vadd.f32 0.0, %v495
        %v497 = vpop.f32.mrb[0].mxu0
        %v498 = vadd.f32 0.0, %v497
        %v499 = vpop.f32.mrb[0].mxu0
        %v500 = vadd.f32 0.0, %v499
        %v501 = vpop.f32.mrb[0].mxu0
        %v502 = vadd.f32 0.0, %v501
        %503 = vdwg.mxu0
        %v520 = vunpack.c.l.b16 %v336
        %v521 = vunpack.c.h.b16 %v336
        %v522 = vunpack.c.l.b16 %v337
        %v523 = vunpack.c.h.b16 %v337
        %v524 = vunpack.c.l.b16 %v338
        %v525 = vunpack.c.h.b16 %v338
        %v526 = vunpack.c.l.b16 %v339
        %v527 = vunpack.c.h.b16 %v339
        %v528 = vunpack.c.l.b16 %v340
        %v529 = vunpack.c.h.b16 %v340
        %v530 = vunpack.c.l.b16 %v341
        %v531 = vunpack.c.h.b16 %v341
        %v532 = vunpack.c.l.b16 %v342
        %v533 = vunpack.c.h.b16 %v342
        %v534 = vunpack.c.l.b16 %v343
        %v535 = vunpack.c.h.b16 %v343
        %v536 = vunpack.c.l.b16 %v344
        %v537 = vunpack.c.h.b16 %v344
        %v538 = vunpack.c.l.b16 %v345
        %v539 = vunpack.c.h.b16 %v345
        %v540 = vunpack.c.l.b16 %v346
        %v541 = vunpack.c.h.b16 %v346
        %v542 = vunpack.c.l.b16 %v347
        %v543 = vunpack.c.h.b16 %v347
        %v544 = vunpack.c.l.b16 %v348
        %v545 = vunpack.c.h.b16 %v348
        %v546 = vunpack.c.l.b16 %v349
        %v547 = vunpack.c.h.b16 %v349
        %v548 = vunpack.c.l.b16 %v350
        %v549 = vunpack.c.h.b16 %v350
        %v550 = vunpack.c.l.b16 %v351
        %v551 = vunpack.c.h.b16 %v351
        %v552 = vpack.c.b16 %v522, %v520
        %v553 = vpack.c.b16 %v523, %v521
        %v554 = vpack.c.b16 %v526, %v524
        %v555 = vpack.c.b16 %v527, %v525
        %v556 = vpack.c.b16 %v530, %v528
        %v557 = vpack.c.b16 %v531, %v529
        %v558 = vpack.c.b16 %v534, %v532
        %v559 = vpack.c.b16 %v535, %v533
        %v560 = vpack.c.b16 %v538, %v536
        %v561 = vpack.c.b16 %v539, %v537
        %v562 = vpack.c.b16 %v542, %v540
        %v563 = vpack.c.b16 %v543, %v541
        %v564 = vpack.c.b16 %v546, %v544
        %v565 = vpack.c.b16 %v547, %v545
        %v566 = vpack.c.b16 %v550, %v548
        %v567 = vpack.c.b16 %v551, %v549
        %584 = vmatprep.subr.bf16.mxu0 %v553
        %585 = vmatpush1.bf16.msra.mxu0 %v552
        %586 = vmatprep.subr.bf16.mxu0 %v555
        %587 = vmatpush1.bf16.msra.mxu0 %v554
        %588 = vmatprep.subr.bf16.mxu0 %v557
        %589 = vmatpush1.bf16.msra.mxu0 %v556
        %590 = vmatprep.subr.bf16.mxu0 %v559
        %591 = vmatpush1.bf16.msra.mxu0 %v558
        %592 = vmatprep.subr.bf16.mxu0 %v561
        %593 = vmatpush1.bf16.msra.mxu0 %v560
        %594 = vmatprep.subr.bf16.mxu0 %v563
        %595 = vmatpush1.bf16.msra.mxu0 %v562
        %596 = vmatprep.subr.bf16.mxu0 %v565
        %597 = vmatpush1.bf16.msra.mxu0 %v564
        %598 = vmatprep.subr.bf16.mxu0 %v567
        %599 = vmatpush1.bf16.msra.mxu0 %v566
        %600 = vmatprep.subr.bf16.mxu0 0
        %601 = vmatpush1.bf16.msra.mxu0 0
        %602 = vmatprep.subr.bf16.mxu0 0
        %603 = vmatpush1.bf16.msra.mxu0 0
        %604 = vmatprep.subr.bf16.mxu0 0
        %605 = vmatpush1.bf16.msra.mxu0 0
        %606 = vmatprep.subr.bf16.mxu0 0
        %607 = vmatpush1.bf16.msra.mxu0 0
        %608 = vmatprep.subr.bf16.mxu0 0
        %609 = vmatpush1.bf16.msra.mxu0 0
        %610 = vmatprep.subr.bf16.mxu0 0
        %611 = vmatpush1.bf16.msra.mxu0 0
        %612 = vmatprep.subr.bf16.mxu0 0
        %613 = vmatpush1.bf16.msra.mxu0 0
        %614 = vmatprep.subr.bf16.mxu0 0
        %615 = vmatpush1.bf16.msra.mxu0 0
        %616 = vmatprep.mubr.bf16.mxu0 0
        %617 = vmatmul.mubr.bf16.gmra.mrb[0].mxu0 %v334
        %v618 = vpop.f32.mrb[0].mxu0
        %v619 = vadd.f32 %v486, %v618
        %v620 = vpop.f32.mrb[0].mxu0
        %v621 = vadd.f32 %v488, %v620
        %v622 = vpop.f32.mrb[0].mxu0
        %v623 = vadd.f32 %v490, %v622
        %v624 = vpop.f32.mrb[0].mxu0
        %v625 = vadd.f32 %v492, %v624
        %626 = vmatprep.mubr.bf16.mxu0 0
        %627 = vmatmul.mubr.bf16.gmra.mrb[0].mxu0 %v335
        %v628 = vpop.f32.mrb[0].mxu0
        %v629 = vadd.f32 %v496, %v628
        %v630 = vpop.f32.mrb[0].mxu0
        %v631 = vadd.f32 %v498, %v630
        %v632 = vpop.f32.mrb[0].mxu0
        %v633 = vadd.f32 %v500, %v632
        %v634 = vpop.f32.mrb[0].mxu0
        %v635 = vadd.f32 %v502, %v634
        %636 = vdwg.mxu0
        %v637 = vld [vmem:[#allocation2 + $0x10] sm:$0xff]
        %v638 = vld [vmem:[#allocation2 + $0x18] sm:$0xff]
        %v639 = vld [vmem:[#allocation2 + $0x20] sm:$0xff]
        %v640 = vld [vmem:[#allocation2 + $0x28] sm:$0xff]
        %v641 = vpack.c.bf16 %v638, %v637
        %v642 = vpack.c.bf16 %v640, %v639
        %v643 = vld [vmem:[%s1 + $0x100] sm:$0xff]
        %v644 = vld [vmem:[%s1 + $0x108] sm:$0xff]
        %v645 = vld [vmem:[%s1 + $0x110] sm:$0xff]
        %v646 = vld [vmem:[%s1 + $0x118] sm:$0xff]
        %v647 = vld [vmem:[%s1 + $0x120] sm:$0xff]
        %v648 = vld [vmem:[%s1 + $0x128] sm:$0xff]
        %v649 = vld [vmem:[%s1 + $0x130] sm:$0xff]
        %v650 = vld [vmem:[%s1 + $0x138] sm:$0xff]
        %v651 = vld [vmem:[%s1 + $0x140] sm:$0xff]
        %v652 = vld [vmem:[%s1 + $0x148] sm:$0xff]
        %v653 = vld [vmem:[%s1 + $0x150] sm:$0xff]
        %v654 = vld [vmem:[%s1 + $0x158] sm:$0xff]
        %v655 = vld [vmem:[%s1 + $0x160] sm:$0xff]
        %v656 = vld [vmem:[%s1 + $0x168] sm:$0xff]
        %v657 = vld [vmem:[%s1 + $0x170] sm:$0xff]
        %v658 = vld [vmem:[%s1 + $0x178] sm:$0xff]
        %v675 = vunpack.c.l.b16 %v643
        %v676 = vunpack.c.h.b16 %v643
        %v677 = vunpack.c.l.b16 %v644
        %v678 = vunpack.c.h.b16 %v644
        %v679 = vunpack.c.l.b16 %v645
        %v680 = vunpack.c.h.b16 %v645
        %v681 = vunpack.c.l.b16 %v646
        %v682 = vunpack.c.h.b16 %v646
        %v683 = vunpack.c.l.b16 %v647
        %v684 = vunpack.c.h.b16 %v647
        %v685 = vunpack.c.l.b16 %v648
        %v686 = vunpack.c.h.b16 %v648
        %v687 = vunpack.c.l.b16 %v649
        %v688 = vunpack.c.h.b16 %v649
        %v689 = vunpack.c.l.b16 %v650
        %v690 = vunpack.c.h.b16 %v650
        %v691 = vunpack.c.l.b16 %v651
        %v692 = vunpack.c.h.b16 %v651
        %v693 = vunpack.c.l.b16 %v652
        %v694 = vunpack.c.h.b16 %v652
        %v695 = vunpack.c.l.b16 %v653
        %v696 = vunpack.c.h.b16 %v653
        %v697 = vunpack.c.l.b16 %v654
        %v698 = vunpack.c.h.b16 %v654
        %v699 = vunpack.c.l.b16 %v655
        %v700 = vunpack.c.h.b16 %v655
        %v701 = vunpack.c.l.b16 %v656
        %v702 = vunpack.c.h.b16 %v656
        %v703 = vunpack.c.l.b16 %v657
        %v704 = vunpack.c.h.b16 %v657
        %v705 = vunpack.c.l.b16 %v658
        %v706 = vunpack.c.h.b16 %v658
        %v707 = vpack.c.b16 %v677, %v675
        %v708 = vpack.c.b16 %v678, %v676
        %v709 = vpack.c.b16 %v681, %v679
        %v710 = vpack.c.b16 %v682, %v680
        %v711 = vpack.c.b16 %v685, %v683
        %v712 = vpack.c.b16 %v686, %v684
        %v713 = vpack.c.b16 %v689, %v687
        %v714 = vpack.c.b16 %v690, %v688
        %v715 = vpack.c.b16 %v693, %v691
        %v716 = vpack.c.b16 %v694, %v692
        %v717 = vpack.c.b16 %v697, %v695
        %v718 = vpack.c.b16 %v698, %v696
        %v719 = vpack.c.b16 %v701, %v699
        %v720 = vpack.c.b16 %v702, %v700
        %v721 = vpack.c.b16 %v705, %v703
        %v722 = vpack.c.b16 %v706, %v704
        %739 = vmatprep.subr.bf16.mxu0 %v708
        %740 = vmatpush1.bf16.msra.mxu0 %v707
        %741 = vmatprep.subr.bf16.mxu0 %v710
        %742 = vmatpush1.bf16.msra.mxu0 %v709
        %743 = vmatprep.subr.bf16.mxu0 %v712
        %744 = vmatpush1.bf16.msra.mxu0 %v711
        %745 = vmatprep.subr.bf16.mxu0 %v714
        %746 = vmatpush1.bf16.msra.mxu0 %v713
        %747 = vmatprep.subr.bf16.mxu0 %v716
        %748 = vmatpush1.bf16.msra.mxu0 %v715
        %749 = vmatprep.subr.bf16.mxu0 %v718
        %750 = vmatpush1.bf16.msra.mxu0 %v717
        %751 = vmatprep.subr.bf16.mxu0 %v720
        %752 = vmatpush1.bf16.msra.mxu0 %v719
        %753 = vmatprep.subr.bf16.mxu0 %v722
        %754 = vmatpush1.bf16.msra.mxu0 %v721
        %755 = vmatprep.subr.bf16.mxu0 0
        %756 = vmatpush1.bf16.msra.mxu0 0
        %757 = vmatprep.subr.bf16.mxu0 0
        %758 = vmatpush1.bf16.msra.mxu0 0
        %759 = vmatprep.subr.bf16.mxu0 0
        %760 = vmatpush1.bf16.msra.mxu0 0
        %761 = vmatprep.subr.bf16.mxu0 0
        %762 = vmatpush1.bf16.msra.mxu0 0
        %763 = vmatprep.subr.bf16.mxu0 0
        %764 = vmatpush1.bf16.msra.mxu0 0
        %765 = vmatprep.subr.bf16.mxu0 0
        %766 = vmatpush1.bf16.msra.mxu0 0
        %767 = vmatprep.subr.bf16.mxu0 0
        %768 = vmatpush1.bf16.msra.mxu0 0
        %769 = vmatprep.subr.bf16.mxu0 0
        %770 = vmatpush1.bf16.msra.mxu0 0
        %771 = vmatprep.mubr.bf16.mxu0 0
        %772 = vmatmul.mubr.bf16.gmra.mrb[0].mxu0 %v641
        %v773 = vpop.f32.mrb[0].mxu0
        %v774 = vadd.f32 0.0, %v773
        %v775 = vpop.f32.mrb[0].mxu0
        %v776 = vadd.f32 0.0, %v775
        %v777 = vpop.f32.mrb[0].mxu0
        %v778 = vadd.f32 0.0, %v777
        %v779 = vpop.f32.mrb[0].mxu0
        %v780 = vadd.f32 0.0, %v779
        %781 = vmatprep.mubr.bf16.mxu0 0
        %782 = vmatmul.mubr.bf16.gmra.mrb[0].mxu0 %v642
        %v783 = vpop.f32.mrb[0].mxu0
        %v784 = vadd.f32 0.0, %v783
        %v785 = vpop.f32.mrb[0].mxu0
        %v786 = vadd.f32 0.0, %v785
        %v787 = vpop.f32.mrb[0].mxu0
        %v788 = vadd.f32 0.0, %v787
        %v789 = vpop.f32.mrb[0].mxu0
        %v790 = vadd.f32 0.0, %v789
        %791 = vdwg.mxu0
        %v792 = vadd.f32 %v619, %v774
        %v793 = vadd.f32 %v621, %v776
        %v794 = vadd.f32 %v623, %v778
        %v795 = vadd.f32 %v625, %v780
        %v796 = vadd.f32 %v629, %v784
        %v797 = vadd.f32 %v631, %v786
        %v798 = vadd.f32 %v633, %v788
        %v799 = vadd.f32 %v635, %v790
        %v800 = vld [vmem:[%s2] sm:$0x3]
        %v802 = vlaneseq
        %v803 = vshrl.u32 %v802, 7
        %v804 = vsub.s32 0, %v803
        %v805 = vrot.slane %v800, %v804
        %v806 = vlaneseq
        %v807 = vshrl.u32 %v806, 7
        %v808 = vsub.s32 1, %v807
        %v809 = vrot.slane %v800, %v808
        %v812 = vadd.f32 %v792, %v805
        %v813 = vadd.f32 %v793, %v809
        %v814 = vadd.f32 %v794, %v805
        %v815 = vadd.f32 %v795, %v809
        %v816 = vadd.f32 %v796, %v805
        %v817 = vadd.f32 %v797, %v809
        %v818 = vadd.f32 %v798, %v805
        %v819 = vadd.f32 %v799, %v809
        %v820 = vmax.f32 %v812, 0.0
        %v821 = vmax.f32 %v813, 0.0
        %v822 = vmax.f32 %v814, 0.0
        %v823 = vmax.f32 %v815, 0.0
        %v824 = vmax.f32 %v816, 0.0
        %v825 = vmax.f32 %v817, 0.0
        %v826 = vmax.f32 %v818, 0.0
        %v827 = vmax.f32 %v819, 0.0
        %828 = vst [vmem:[#allocation3] sm:$0xff] 0.0
        %829 = vst [vmem:[#allocation3 + $0x8] sm:$0xff] 0.0
        %830 = vst [vmem:[#allocation3 + $0x50] sm:$0xff] 0.0
        %831 = vst [vmem:[#allocation3 + $0x58] sm:$0xff] 0.0
        %832 = vst [vmem:[#allocation3 + $0x10] sm:$0xff] %v820
        %833 = vst [vmem:[#allocation3 + $0x18] sm:$0xff] %v821
        %834 = vst [vmem:[#allocation3 + $0x20] sm:$0xff] %v822
        %835 = vst [vmem:[#allocation3 + $0x28] sm:$0xff] %v823
        %836 = vst [vmem:[#allocation3 + $0x30] sm:$0xff] %v824
        %837 = vst [vmem:[#allocation3 + $0x38] sm:$0xff] %v825
        %838 = vst [vmem:[#allocation3 + $0x40] sm:$0xff] %v826
        %839 = vst [vmem:[#allocation3 + $0x48] sm:$0xff] %v827
        %v840 = vld [vmem:[#allocation3] sm:$0xff]
        %v841 = vld [vmem:[#allocation3 + $0x8] sm:$0xff]
        %v842 = vld [vmem:[#allocation3 + $0x10] sm:$0xff]
        %v843 = vld [vmem:[#allocation3 + $0x18] sm:$0xff]
        %v844 = vld [vmem:[#allocation3 + $0x20] sm:$0xff]
        %v845 = vld [vmem:[#allocation3 + $0x28] sm:$0xff]
        %v846 = vld [vmem:[#allocation3 + $0x30] sm:$0xff]
        %v847 = vld [vmem:[#allocation3 + $0x38] sm:$0xff]
        %v848 = vpack.c.bf16 %v842, %v840
        %v849 = vpack.c.bf16 %v843, %v841
        %v850 = vpack.c.bf16 %v846, %v844
        %v851 = vpack.c.bf16 %v847, %v845
        %v852 = vld [vmem:[%s3] sm:$0xf]
        %v853 = vld [vmem:[%s3 + $0x4] sm:$0xf]
        %v854 = vld [vmem:[%s3 + $0x8] sm:$0xf]
        %v855 = vld [vmem:[%s3 + $0xc] sm:$0xf]
        %v856 = vld [vmem:[%s3 + $0x10] sm:$0xf]
        %v857 = vld [vmem:[%s3 + $0x14] sm:$0xf]
        %v858 = vld [vmem:[%s3 + $0x18] sm:$0xf]
        %v859 = vld [vmem:[%s3 + $0x1c] sm:$0xf]
        %v860 = vld [vmem:[%s3 + $0x20] sm:$0xf]
        %v861 = vld [vmem:[%s3 + $0x24] sm:$0xf]
        %v862 = vld [vmem:[%s3 + $0x28] sm:$0xf]
        %v863 = vld [vmem:[%s3 + $0x2c] sm:$0xf]
        %v864 = vld [vmem:[%s3 + $0x30] sm:$0xf]
        %v865 = vld [vmem:[%s3 + $0x34] sm:$0xf]
        %v866 = vld [vmem:[%s3 + $0x38] sm:$0xf]
        %v867 = vld [vmem:[%s3 + $0x3c] sm:$0xf]
        %v868 = vld [vmem:[%s3 + $0x40] sm:$0xf]
        %v869 = vld [vmem:[%s3 + $0x44] sm:$0xf]
        %v870 = vld [vmem:[%s3 + $0x48] sm:$0xf]
        %v871 = vld [vmem:[%s3 + $0x4c] sm:$0xf]
        %v872 = vld [vmem:[%s3 + $0x50] sm:$0xf]
        %v873 = vld [vmem:[%s3 + $0x54] sm:$0xf]
        %v874 = vld [vmem:[%s3 + $0x58] sm:$0xf]
        %v875 = vld [vmem:[%s3 + $0x5c] sm:$0xf]
        %v876 = vld [vmem:[%s3 + $0x60] sm:$0xf]
        %v877 = vld [vmem:[%s3 + $0x64] sm:$0xf]
        %v878 = vld [vmem:[%s3 + $0x68] sm:$0xf]
        %v879 = vld [vmem:[%s3 + $0x6c] sm:$0xf]
        %v880 = vld [vmem:[%s3 + $0x70] sm:$0xf]
        %v881 = vld [vmem:[%s3 + $0x74] sm:$0xf]
        %v882 = vld [vmem:[%s3 + $0x78] sm:$0xf]
        %v883 = vld [vmem:[%s3 + $0x7c] sm:$0xf]
        %v884 = vld [vmem:[#allocation3 + $0x40] sm:$0xff]
        %v885 = vld [vmem:[#allocation3 + $0x48] sm:$0xff]
        %v886 = vpack.c.bf16 %v844, %v842
        %v887 = vpack.c.bf16 %v845, %v843
        %v888 = vpack.c.bf16 %v884, %v846
        %v889 = vpack.c.bf16 %v885, %v847
        %v890 = vld [vmem:[%s3 + $0x80] sm:$0xf]
        %v891 = vld [vmem:[%s3 + $0x84] sm:$0xf]
        %v892 = vld [vmem:[%s3 + $0x88] sm:$0xf]
        %v893 = vld [vmem:[%s3 + $0x8c] sm:$0xf]
        %v894 = vld [vmem:[%s3 + $0x90] sm:$0xf]
        %v895 = vld [vmem:[%s3 + $0x94] sm:$0xf]
        %v896 = vld [vmem:[%s3 + $0x98] sm:$0xf]
        %v897 = vld [vmem:[%s3 + $0x9c] sm:$0xf]
        %v898 = vld [vmem:[%s3 + $0xa0] sm:$0xf]
        %v899 = vld [vmem:[%s3 + $0xa4] sm:$0xf]
        %v900 = vld [vmem:[%s3 + $0xa8] sm:$0xf]
        %v901 = vld [vmem:[%s3 + $0xac] sm:$0xf]
        %v902 = vld [vmem:[%s3 + $0xb0] sm:$0xf]
        %v903 = vld [vmem:[%s3 + $0xb4] sm:$0xf]
        %v904 = vld [vmem:[%s3 + $0xb8] sm:$0xf]
        %v905 = vld [vmem:[%s3 + $0xbc] sm:$0xf]
        %v906 = vld [vmem:[%s3 + $0xc0] sm:$0xf]
        %v907 = vld [vmem:[%s3 + $0xc4] sm:$0xf]
        %v908 = vld [vmem:[%s3 + $0xc8] sm:$0xf]
        %v909 = vld [vmem:[%s3 + $0xcc] sm:$0xf]
        %v910 = vld [vmem:[%s3 + $0xd0] sm:$0xf]
        %v911 = vld [vmem:[%s3 + $0xd4] sm:$0xf]
        %v912 = vld [vmem:[%s3 + $0xd8] sm:$0xf]
        %v913 = vld [vmem:[%s3 + $0xdc] sm:$0xf]
        %v914 = vld [vmem:[%s3 + $0xe0] sm:$0xf]
        %v915 = vld [vmem:[%s3 + $0xe4] sm:$0xf]
        %v916 = vld [vmem:[%s3 + $0xe8] sm:$0xf]
        %v917 = vld [vmem:[%s3 + $0xec] sm:$0xf]
        %v918 = vld [vmem:[%s3 + $0xf0] sm:$0xf]
        %v919 = vld [vmem:[%s3 + $0xf4] sm:$0xf]
        %v920 = vld [vmem:[%s3 + $0xf8] sm:$0xf]
        %v921 = vld [vmem:[%s3 + $0xfc] sm:$0xf]
        %v954 = vunpack.c.l.b16 %v890
        %v955 = vunpack.c.l.b16 %v891
        %v956 = vunpack.c.l.b16 %v892
        %v957 = vunpack.c.l.b16 %v893
        %v958 = vunpack.c.l.b16 %v894
        %v959 = vunpack.c.l.b16 %v895
        %v960 = vunpack.c.l.b16 %v896
        %v961 = vunpack.c.l.b16 %v897
        %v962 = vunpack.c.l.b16 %v898
        %v963 = vunpack.c.l.b16 %v899
        %v964 = vunpack.c.l.b16 %v900
        %v965 = vunpack.c.l.b16 %v901
        %v966 = vunpack.c.l.b16 %v902
        %v967 = vunpack.c.l.b16 %v903
        %v968 = vunpack.c.l.b16 %v904
        %v969 = vunpack.c.l.b16 %v905
        %v970 = vunpack.c.l.b16 %v906
        %v971 = vunpack.c.l.b16 %v907
        %v972 = vunpack.c.l.b16 %v908
        %v973 = vunpack.c.l.b16 %v909
        %v974 = vunpack.c.l.b16 %v910
        %v975 = vunpack.c.l.b16 %v911
        %v976 = vunpack.c.l.b16 %v912
        %v977 = vunpack.c.l.b16 %v913
        %v978 = vunpack.c.l.b16 %v914
        %v979 = vunpack.c.l.b16 %v915
        %v980 = vunpack.c.l.b16 %v916
        %v981 = vunpack.c.l.b16 %v917
        %v982 = vunpack.c.l.b16 %v918
        %v983 = vunpack.c.l.b16 %v919
        %v984 = vunpack.c.l.b16 %v920
        %v985 = vunpack.c.l.b16 %v921
        %v986 = vpack.c.b16 %v955, %v954
        %v987 = vpack.c.b16 %v957, %v956
        %v988 = vpack.c.b16 %v959, %v958
        %v989 = vpack.c.b16 %v961, %v960
        %v990 = vpack.c.b16 %v963, %v962
        %v991 = vpack.c.b16 %v965, %v964
        %v992 = vpack.c.b16 %v967, %v966
        %v993 = vpack.c.b16 %v969, %v968
        %v994 = vpack.c.b16 %v971, %v970
        %v995 = vpack.c.b16 %v973, %v972
        %v996 = vpack.c.b16 %v975, %v974
        %v997 = vpack.c.b16 %v977, %v976
        %v998 = vpack.c.b16 %v979, %v978
        %v999 = vpack.c.b16 %v981, %v980
        %v1000 = vpack.c.b16 %v983, %v982
        %v1001 = vpack.c.b16 %v985, %v984
        %1018 = vmatprep.subr.bf16.mxu0 0
        %1019 = vmatpush1.bf16.msra.mxu0 %v986
        %1020 = vmatprep.subr.bf16.mxu0 0
        %1021 = vmatpush1.bf16.msra.mxu0 %v987
        %1022 = vmatprep.subr.bf16.mxu0 0
        %1023 = vmatpush1.bf16.msra.mxu0 %v988
        %1024 = vmatprep.subr.bf16.mxu0 0
        %1025 = vmatpush1.bf16.msra.mxu0 %v989
        %1026 = vmatprep.subr.bf16.mxu0 0
        %1027 = vmatpush1.bf16.msra.mxu0 %v990
        %1028 = vmatprep.subr.bf16.mxu0 0
        %1029 = vmatpush1.bf16.msra.mxu0 %v991
        %1030 = vmatprep.subr.bf16.mxu0 0
        %1031 = vmatpush1.bf16.msra.mxu0 %v992
        %1032 = vmatprep.subr.bf16.mxu0 0
        %1033 = vmatpush1.bf16.msra.mxu0 %v993
        %1034 = vmatprep.subr.bf16.mxu0 0
        %1035 = vmatpush1.bf16.msra.mxu0 %v994
        %1036 = vmatprep.subr.bf16.mxu0 0
        %1037 = vmatpush1.bf16.msra.mxu0 %v995
        %1038 = vmatprep.subr.bf16.mxu0 0
        %1039 = vmatpush1.bf16.msra.mxu0 %v996
        %1040 = vmatprep.subr.bf16.mxu0 0
        %1041 = vmatpush1.bf16.msra.mxu0 %v997
        %1042 = vmatprep.subr.bf16.mxu0 0
        %1043 = vmatpush1.bf16.msra.mxu0 %v998
        %1044 = vmatprep.subr.bf16.mxu0 0
        %1045 = vmatpush1.bf16.msra.mxu0 %v999
        %1046 = vmatprep.subr.bf16.mxu0 0
        %1047 = vmatpush1.bf16.msra.mxu0 %v1000
        %1048 = vmatprep.subr.bf16.mxu0 0
        %1049 = vmatpush1.bf16.msra.mxu0 %v1001
        %1050 = vmatprep.mubr.bf16.mxu0 %v887
        %1051 = vmatmul.mubr.bf16.gmra.mrb[0].mxu0 %v886
        %v1052 = vpop.f32.mrb[0].mxu0
        %v1053 = vadd.f32 0.0, %v1052
        %v1054 = vpop.f32.mrb[0].mxu0
        %v1055 = vpop.f32.mrb[0].mxu0
        %v1056 = vadd.f32 0.0, %v1055
        %v1057 = vpop.f32.mrb[0].mxu0
        %1058 = vmatprep.mubr.bf16.mxu0 %v889
        %1059 = vmatmul.mubr.bf16.gmra.mrb[0].mxu0 %v888
        %v1060 = vpop.f32.mrb[0].mxu0
        %v1061 = vadd.f32 0.0, %v1060
        %v1062 = vpop.f32.mrb[0].mxu0
        %v1063 = vpop.f32.mrb[0].mxu0
        %v1064 = vadd.f32 0.0, %v1063
        %v1065 = vpop.f32.mrb[0].mxu0
        %1066 = vdwg.mxu0
        %v1099 = vunpack.c.l.b16 %v852
        %v1100 = vunpack.c.l.b16 %v853
        %v1101 = vunpack.c.l.b16 %v854
        %v1102 = vunpack.c.l.b16 %v855
        %v1103 = vunpack.c.l.b16 %v856
        %v1104 = vunpack.c.l.b16 %v857
        %v1105 = vunpack.c.l.b16 %v858
        %v1106 = vunpack.c.l.b16 %v859
        %v1107 = vunpack.c.l.b16 %v860
        %v1108 = vunpack.c.l.b16 %v861
        %v1109 = vunpack.c.l.b16 %v862
        %v1110 = vunpack.c.l.b16 %v863
        %v1111 = vunpack.c.l.b16 %v864
        %v1112 = vunpack.c.l.b16 %v865
        %v1113 = vunpack.c.l.b16 %v866
        %v1114 = vunpack.c.l.b16 %v867
        %v1115 = vunpack.c.l.b16 %v868
        %v1116 = vunpack.c.l.b16 %v869
        %v1117 = vunpack.c.l.b16 %v870
        %v1118 = vunpack.c.l.b16 %v871
        %v1119 = vunpack.c.l.b16 %v872
        %v1120 = vunpack.c.l.b16 %v873
        %v1121 = vunpack.c.l.b16 %v874
        %v1122 = vunpack.c.l.b16 %v875
        %v1123 = vunpack.c.l.b16 %v876
        %v1124 = vunpack.c.l.b16 %v877
        %v1125 = vunpack.c.l.b16 %v878
        %v1126 = vunpack.c.l.b16 %v879
        %v1127 = vunpack.c.l.b16 %v880
        %v1128 = vunpack.c.l.b16 %v881
        %v1129 = vunpack.c.l.b16 %v882
        %v1130 = vunpack.c.l.b16 %v883
        %v1131 = vpack.c.b16 %v1100, %v1099
        %v1132 = vpack.c.b16 %v1102, %v1101
        %v1133 = vpack.c.b16 %v1104, %v1103
        %v1134 = vpack.c.b16 %v1106, %v1105
        %v1135 = vpack.c.b16 %v1108, %v1107
        %v1136 = vpack.c.b16 %v1110, %v1109
        %v1137 = vpack.c.b16 %v1112, %v1111
        %v1138 = vpack.c.b16 %v1114, %v1113
        %v1139 = vpack.c.b16 %v1116, %v1115
        %v1140 = vpack.c.b16 %v1118, %v1117
        %v1141 = vpack.c.b16 %v1120, %v1119
        %v1142 = vpack.c.b16 %v1122, %v1121
        %v1143 = vpack.c.b16 %v1124, %v1123
        %v1144 = vpack.c.b16 %v1126, %v1125
        %v1145 = vpack.c.b16 %v1128, %v1127
        %v1146 = vpack.c.b16 %v1130, %v1129
        %1163 = vmatprep.subr.bf16.mxu0 0
        %1164 = vmatpush1.bf16.msra.mxu0 %v1131
        %1165 = vmatprep.subr.bf16.mxu0 0
        %1166 = vmatpush1.bf16.msra.mxu0 %v1132
        %1167 = vmatprep.subr.bf16.mxu0 0
        %1168 = vmatpush1.bf16.msra.mxu0 %v1133
        %1169 = vmatprep.subr.bf16.mxu0 0
        %1170 = vmatpush1.bf16.msra.mxu0 %v1134
        %1171 = vmatprep.subr.bf16.mxu0 0
        %1172 = vmatpush1.bf16.msra.mxu0 %v1135
        %1173 = vmatprep.subr.bf16.mxu0 0
        %1174 = vmatpush1.bf16.msra.mxu0 %v1136
        %1175 = vmatprep.subr.bf16.mxu0 0
        %1176 = vmatpush1.bf16.msra.mxu0 %v1137
        %1177 = vmatprep.subr.bf16.mxu0 0
        %1178 = vmatpush1.bf16.msra.mxu0 %v1138
        %1179 = vmatprep.subr.bf16.mxu0 0
        %1180 = vmatpush1.bf16.msra.mxu0 %v1139
        %1181 = vmatprep.subr.bf16.mxu0 0
        %1182 = vmatpush1.bf16.msra.mxu0 %v1140
        %1183 = vmatprep.subr.bf16.mxu0 0
        %1184 = vmatpush1.bf16.msra.mxu0 %v1141
        %1185 = vmatprep.subr.bf16.mxu0 0
        %1186 = vmatpush1.bf16.msra.mxu0 %v1142
        %1187 = vmatprep.subr.bf16.mxu0 0
        %1188 = vmatpush1.bf16.msra.mxu0 %v1143
        %1189 = vmatprep.subr.bf16.mxu0 0
        %1190 = vmatpush1.bf16.msra.mxu0 %v1144
        %1191 = vmatprep.subr.bf16.mxu0 0
        %1192 = vmatpush1.bf16.msra.mxu0 %v1145
        %1193 = vmatprep.subr.bf16.mxu0 0
        %1194 = vmatpush1.bf16.msra.mxu0 %v1146
        %1195 = vmatprep.mubr.bf16.mxu0 %v849
        %1196 = vmatmul.mubr.bf16.gmra.mrb[0].mxu0 %v848
        %v1197 = vpop.f32.mrb[0].mxu0
        %v1198 = vadd.f32 %v1053, %v1197
        %v1199 = vpop.f32.mrb[0].mxu0
        %v1200 = vpop.f32.mrb[0].mxu0
        %v1201 = vadd.f32 %v1056, %v1200
        %v1202 = vpop.f32.mrb[0].mxu0
        %1203 = vmatprep.mubr.bf16.mxu0 %v851
        %1204 = vmatmul.mubr.bf16.gmra.mrb[0].mxu0 %v850
        %v1205 = vpop.f32.mrb[0].mxu0
        %v1206 = vadd.f32 %v1061, %v1205
        %v1207 = vpop.f32.mrb[0].mxu0
        %v1208 = vpop.f32.mrb[0].mxu0
        %v1209 = vadd.f32 %v1064, %v1208
        %v1210 = vpop.f32.mrb[0].mxu0
        %1211 = vdwg.mxu0
        %v1212 = vld [vmem:[#allocation3 + $0x20] sm:$0xff]
        %v1213 = vld [vmem:[#allocation3 + $0x28] sm:$0xff]
        %v1214 = vld [vmem:[#allocation3 + $0x30] sm:$0xff]
        %v1215 = vld [vmem:[#allocation3 + $0x38] sm:$0xff]
        %v1216 = vld [vmem:[#allocation3 + $0x40] sm:$0xff]
        %v1217 = vld [vmem:[#allocation3 + $0x48] sm:$0xff]
        %v1218 = vld [vmem:[#allocation3 + $0x50] sm:$0xff]
        %v1219 = vld [vmem:[#allocation3 + $0x58] sm:$0xff]
        %v1220 = vpack.c.bf16 %v1214, %v1212
        %v1221 = vpack.c.bf16 %v1215, %v1213
        %v1222 = vpack.c.bf16 %v1218, %v1216
        %v1223 = vpack.c.bf16 %v1219, %v1217
        %v1224 = vld [vmem:[%s3 + $0x100] sm:$0xf]
        %v1225 = vld [vmem:[%s3 + $0x104] sm:$0xf]
        %v1226 = vld [vmem:[%s3 + $0x108] sm:$0xf]
        %v1227 = vld [vmem:[%s3 + $0x10c] sm:$0xf]
        %v1228 = vld [vmem:[%s3 + $0x110] sm:$0xf]
        %v1229 = vld [vmem:[%s3 + $0x114] sm:$0xf]
        %v1230 = vld [vmem:[%s3 + $0x118] sm:$0xf]
        %v1231 = vld [vmem:[%s3 + $0x11c] sm:$0xf]
        %v1232 = vld [vmem:[%s3 + $0x120] sm:$0xf]
        %v1233 = vld [vmem:[%s3 + $0x124] sm:$0xf]
        %v1234 = vld [vmem:[%s3 + $0x128] sm:$0xf]
        %v1235 = vld [vmem:[%s3 + $0x12c] sm:$0xf]
        %v1236 = vld [vmem:[%s3 + $0x130] sm:$0xf]
        %v1237 = vld [vmem:[%s3 + $0x134] sm:$0xf]
        %v1238 = vld [vmem:[%s3 + $0x138] sm:$0xf]
        %v1239 = vld [vmem:[%s3 + $0x13c] sm:$0xf]
        %v1240 = vld [vmem:[%s3 + $0x140] sm:$0xf]
        %v1241 = vld [vmem:[%s3 + $0x144] sm:$0xf]
        %v1242 = vld [vmem:[%s3 + $0x148] sm:$0xf]
        %v1243 = vld [vmem:[%s3 + $0x14c] sm:$0xf]
        %v1244 = vld [vmem:[%s3 + $0x150] sm:$0xf]
        %v1245 = vld [vmem:[%s3 + $0x154] sm:$0xf]
        %v1246 = vld [vmem:[%s3 + $0x158] sm:$0xf]
        %v1247 = vld [vmem:[%s3 + $0x15c] sm:$0xf]
        %v1248 = vld [vmem:[%s3 + $0x160] sm:$0xf]
        %v1249 = vld [vmem:[%s3 + $0x164] sm:$0xf]
        %v1250 = vld [vmem:[%s3 + $0x168] sm:$0xf]
        %v1251 = vld [vmem:[%s3 + $0x16c] sm:$0xf]
        %v1252 = vld [vmem:[%s3 + $0x170] sm:$0xf]
        %v1253 = vld [vmem:[%s3 + $0x174] sm:$0xf]
        %v1254 = vld [vmem:[%s3 + $0x178] sm:$0xf]
        %v1255 = vld [vmem:[%s3 + $0x17c] sm:$0xf]
        %v1288 = vunpack.c.l.b16 %v1224
        %v1289 = vunpack.c.l.b16 %v1225
        %v1290 = vunpack.c.l.b16 %v1226
        %v1291 = vunpack.c.l.b16 %v1227
        %v1292 = vunpack.c.l.b16 %v1228
        %v1293 = vunpack.c.l.b16 %v1229
        %v1294 = vunpack.c.l.b16 %v1230
        %v1295 = vunpack.c.l.b16 %v1231
        %v1296 = vunpack.c.l.b16 %v1232
        %v1297 = vunpack.c.l.b16 %v1233
        %v1298 = vunpack.c.l.b16 %v1234
        %v1299 = vunpack.c.l.b16 %v1235
        %v1300 = vunpack.c.l.b16 %v1236
        %v1301 = vunpack.c.l.b16 %v1237
        %v1302 = vunpack.c.l.b16 %v1238
        %v1303 = vunpack.c.l.b16 %v1239
        %v1304 = vunpack.c.l.b16 %v1240
        %v1305 = vunpack.c.l.b16 %v1241
        %v1306 = vunpack.c.l.b16 %v1242
        %v1307 = vunpack.c.l.b16 %v1243
        %v1308 = vunpack.c.l.b16 %v1244
        %v1309 = vunpack.c.l.b16 %v1245
        %v1310 = vunpack.c.l.b16 %v1246
        %v1311 = vunpack.c.l.b16 %v1247
        %v1312 = vunpack.c.l.b16 %v1248
        %v1313 = vunpack.c.l.b16 %v1249
        %v1314 = vunpack.c.l.b16 %v1250
        %v1315 = vunpack.c.l.b16 %v1251
        %v1316 = vunpack.c.l.b16 %v1252
        %v1317 = vunpack.c.l.b16 %v1253
        %v1318 = vunpack.c.l.b16 %v1254
        %v1319 = vunpack.c.l.b16 %v1255
        %v1320 = vpack.c.b16 %v1289, %v1288
        %v1321 = vpack.c.b16 %v1291, %v1290
        %v1322 = vpack.c.b16 %v1293, %v1292
        %v1323 = vpack.c.b16 %v1295, %v1294
        %v1324 = vpack.c.b16 %v1297, %v1296
        %v1325 = vpack.c.b16 %v1299, %v1298
        %v1326 = vpack.c.b16 %v1301, %v1300
        %v1327 = vpack.c.b16 %v1303, %v1302
        %v1328 = vpack.c.b16 %v1305, %v1304
        %v1329 = vpack.c.b16 %v1307, %v1306
        %v1330 = vpack.c.b16 %v1309, %v1308
        %v1331 = vpack.c.b16 %v1311, %v1310
        %v1332 = vpack.c.b16 %v1313, %v1312
        %v1333 = vpack.c.b16 %v1315, %v1314
        %v1334 = vpack.c.b16 %v1317, %v1316
        %v1335 = vpack.c.b16 %v1319, %v1318
        %1352 = vmatprep.subr.bf16.mxu0 0
        %1353 = vmatpush1.bf16.msra.mxu0 %v1320
        %1354 = vmatprep.subr.bf16.mxu0 0
        %1355 = vmatpush1.bf16.msra.mxu0 %v1321
        %1356 = vmatprep.subr.bf16.mxu0 0
        %1357 = vmatpush1.bf16.msra.mxu0 %v1322
        %1358 = vmatprep.subr.bf16.mxu0 0
        %1359 = vmatpush1.bf16.msra.mxu0 %v1323
        %1360 = vmatprep.subr.bf16.mxu0 0
        %1361 = vmatpush1.bf16.msra.mxu0 %v1324
        %1362 = vmatprep.subr.bf16.mxu0 0
        %1363 = vmatpush1.bf16.msra.mxu0 %v1325
        %1364 = vmatprep.subr.bf16.mxu0 0
        %1365 = vmatpush1.bf16.msra.mxu0 %v1326
        %1366 = vmatprep.subr.bf16.mxu0 0
        %1367 = vmatpush1.bf16.msra.mxu0 %v1327
        %1368 = vmatprep.subr.bf16.mxu0 0
        %1369 = vmatpush1.bf16.msra.mxu0 %v1328
        %1370 = vmatprep.subr.bf16.mxu0 0
        %1371 = vmatpush1.bf16.msra.mxu0 %v1329
        %1372 = vmatprep.subr.bf16.mxu0 0
        %1373 = vmatpush1.bf16.msra.mxu0 %v1330
        %1374 = vmatprep.subr.bf16.mxu0 0
        %1375 = vmatpush1.bf16.msra.mxu0 %v1331
        %1376 = vmatprep.subr.bf16.mxu0 0
        %1377 = vmatpush1.bf16.msra.mxu0 %v1332
        %1378 = vmatprep.subr.bf16.mxu0 0
        %1379 = vmatpush1.bf16.msra.mxu0 %v1333
        %1380 = vmatprep.subr.bf16.mxu0 0
        %1381 = vmatpush1.bf16.msra.mxu0 %v1334
        %1382 = vmatprep.subr.bf16.mxu0 0
        %1383 = vmatpush1.bf16.msra.mxu0 %v1335
        %1384 = vmatprep.mubr.bf16.mxu0 %v1221
        %1385 = vmatmul.mubr.bf16.gmra.mrb[0].mxu0 %v1220
        %v1386 = vpop.f32.mrb[0].mxu0
        %v1387 = vadd.f32 0.0, %v1386
        %v1388 = vpop.f32.mrb[0].mxu0
        %v1389 = vpop.f32.mrb[0].mxu0
        %v1390 = vadd.f32 0.0, %v1389
        %v1391 = vpop.f32.mrb[0].mxu0
        %1392 = vmatprep.mubr.bf16.mxu0 %v1223
        %1393 = vmatmul.mubr.bf16.gmra.mrb[0].mxu0 %v1222
        %v1394 = vpop.f32.mrb[0].mxu0
        %v1395 = vadd.f32 0.0, %v1394
        %v1396 = vpop.f32.mrb[0].mxu0
        %v1397 = vpop.f32.mrb[0].mxu0
        %v1398 = vadd.f32 0.0, %v1397
        %v1399 = vpop.f32.mrb[0].mxu0
        %1400 = vdwg.mxu0
        %v1401 = vadd.f32 %v1198, %v1387
        %v1402 = vadd.f32 %v1201, %v1390
        %v1403 = vadd.f32 %v1206, %v1395
        %v1404 = vadd.f32 %v1209, %v1398
        %v1405 = vld [vmem:[%s4] sm:$0x1]
        %v1407 = vlaneseq
        %v1408 = vshrl.u32 %v1407, 7
        %v1409 = vsub.s32 0, %v1408
        %v1410 = vrot.slane %v1405, %v1409
        %v1412 = vadd.f32 %v1401, %v1410
        %v1413 = vadd.f32 %v1402, %v1410
        %v1414 = vadd.f32 %v1403, %v1410
        %v1415 = vadd.f32 %v1404, %v1410
        %v1416 = vadd.f32 %v320, %v1412
        %v1417 = vadd.f32 %v321, %v1413
        %v1418 = vadd.f32 %v322, %v1414
        %v1419 = vadd.f32 %v323, %v1415
        %v1420 = vld [vmem:[%s5] sm:$0x1]
        %v1421 = vld [vmem:[%s6] sm:$0x1]
        %1422 = vadd.xlane.f32.xlu0 %v1416
        %v1423 = vpop.xlane.xlu0 %1422
        %1424 = vadd.xlane.f32.xlu0 %v1417
        %v1425 = vpop.xlane.xlu0 %1424
        %1426 = vadd.xlane.f32.xlu0 %v1418
        %v1427 = vpop.xlane.xlu0 %1426
        %1428 = vadd.xlane.f32.xlu0 %v1419
        %v1429 = vpop.xlane.xlu0 %1428
        %v1430 = vrcp.pop 128.0
        %v1431 = vmul.f32 %v1423, %v1430
        %v1432 = vmul.f32 %v1425, %v1430
        %v1433 = vmul.f32 %v1427, %v1430
        %v1434 = vmul.f32 %v1429, %v1430
        %v1435 = vsub.f32 %v1416, %v1431
        %v1436 = vsub.f32 %v1417, %v1432
        %v1437 = vsub.f32 %v1418, %v1433
        %v1438 = vsub.f32 %v1419, %v1434
        %v1439 = vmul.f32 %v1435, %v1435
        %v1440 = vmul.f32 %v1436, %v1436
        %v1441 = vmul.f32 %v1437, %v1437
        %v1442 = vmul.f32 %v1438, %v1438
        %1443 = vadd.xlane.f32.xlu0 %v1439
        %v1444 = vpop.xlane.xlu0 %1443
        %1445 = vadd.xlane.f32.xlu0 %v1440
        %v1446 = vpop.xlane.xlu0 %1445
        %1447 = vadd.xlane.f32.xlu0 %v1441
        %v1448 = vpop.xlane.xlu0 %1447
        %1449 = vadd.xlane.f32.xlu0 %v1442
        %v1450 = vpop.xlane.xlu0 %1449
        %v1451 = vmul.f32 %v1444, %v1430
        %v1452 = vmul.f32 %v1446, %v1430
        %v1453 = vmul.f32 %v1448, %v1430
        %v1454 = vmul.f32 %v1450, %v1430
        %v1455 = vadd.f32 %v1451, 1e-05
        %v1456 = vadd.f32 %v1452, 1e-05
        %v1457 = vadd.f32 %v1453, 1e-05
        %v1458 = vadd.f32 %v1454, 1e-05
        %v1459 = vrsqrt.pop %v1455
        %v1460 = vrsqrt.pop %v1456
        %v1461 = vrsqrt.pop %v1457
        %v1462 = vrsqrt.pop %v1458
        %v1463 = vmul.f32 %v1435, %v1459
        %v1464 = vmul.f32 %v1436, %v1460
        %v1465 = vmul.f32 %v1437, %v1461
        %v1466 = vmul.f32 %v1438, %v1462
        %v1468 = vlaneseq
        %v1469 = vshrl.u32 %v1468, 7
        %v1470 = vsub.s32 0, %v1469
        %v1471 = vrot.slane %v1420, %v1470
        %v1473 = vmul.f32 %v1463, %v1471
        %v1474 = vmul.f32 %v1464, %v1471
        %v1475 = vmul.f32 %v1465, %v1471
        %v1476 = vmul.f32 %v1466, %v1471
        %v1478 = vlaneseq
        %v1479 = vshrl.u32 %v1478, 7
        %v1480 = vsub.s32 0, %v1479
        %v1481 = vrot.slane %v1421, %v1480
        %v1483 = vadd.f32 %v1473, %v1481
        %v1484 = vadd.f32 %v1474, %v1481
        %v1485 = vadd.f32 %v1475, %v1481
        %v1486 = vadd.f32 %v1476, %v1481
        %1487 = vst [vmem:[%s318] sm:$0xff] %v1483
        %1488 = vst [vmem:[%s318 + $0x8] sm:$0xff] %v1484
        %1489 = vst [vmem:[%s318 + $0x10] sm:$0xff] %v1485
        %1490 = vst [vmem:[%s318 + $0x18] sm:$0xff] %v1486
        %s1491 = sand.u32 %s178, 1
        %s1492 = sand.u32 %s178, 1
        %s1493 = smul.addr %s1492, 32
        %s1494 = scalar_lea.vmem [#allocation5], %s1493
        // Predicated region
        $region87: #{fft_block.3} parent=81 // pred_check
          %p1495 = pneg %p188
        $region88: #{fft_block.3} parent=81 // pred_check_branch
          %1497 = sbr.rel (%p1495) target = $region90
        $region89: #{fft_block.3} parent=81 // pred_region
          %s1498 = smul.addr %s18, 8
          %s1499 = scalar_lea.vmem %s7, %s1498
          // Predicated region
          $region91: #{fft_block.3} parent=89 // pred_check
            _
          $region92: #{fft_block.3} parent=89 // pred_check_branch
            %1501 = sbr.rel (0) target = $region94
          $region93: #{fft_block.3} parent=89 // pred_region
            // Predicated region
            $region95: #{fft_block.3} parent=93 // pred_check
              _
            $region96: #{fft_block.3} parent=93 // pred_check_branch
              %1503 = sbr.rel (0) target = $region98
            $region97: #{fft_block.3} parent=93 // pred_region
              // Predicated region
              $region110: #{fft_block.3} parent=97 // pred_check
                _
              $region111: #{fft_block.3} parent=97 // pred_check_branch
                %1524 = sbr.rel (0) target = $region113
              $region112: #{fft_block.3} parent=97 // pred_region
                loop: start=0, step=1, limit=1
                $region114: #{fft_block.3} parent=112 // loop_pre_header
                  _
                $region115: #{fft_block.3} parent=112 // loop_header
                  %s1526 = sphi 0, %s1530
                  %p1527 = scmp.ge.s32.totalorder %s1526, 1
                  %s1531 = sphi %s1494, %s1494
                  %s1532 = sphi %s1499, %s1499
                $region116: #{fft_block.3} parent=112 // loop_header_branch
                  %1529 = sbr.rel (%p1527) target = $region120
                $region117: #{fft_block.3} parent=112 // loop_body
                  %v1533 = vld [vmem:[%s1531] sm:$0xff]
                  %1534 = vst [vmem:[%s1532] sm:$0xff] %v1533
                  %v1535 = vld [vmem:[%s1531 + $0x8] sm:$0xff]
                  %1536 = vst [vmem:[%s1532 + $0x10] sm:$0xff] %v1535
                  %v1537 = vld [vmem:[%s1531 + $0x10] sm:$0xff]
                  %1538 = vst [vmem:[%s1532 + $0x20] sm:$0xff] %v1537
                  %v1539 = vld [vmem:[%s1531 + $0x18] sm:$0xff]
                  %1540 = vst [vmem:[%s1532 + $0x30] sm:$0xff] %v1539
                $region118: #{fft_block.3} parent=112 // loop_footer
                  %s1530 = sadd.s32 1, %s1526
                $region119: #{fft_block.3} parent=112 // loop_footer_branch
                  %1525 = sbr.rel target = $region115
                $region120: #{fft_block.3} parent=112 // loop_exit
                  _
              $region113: #{fft_block.3} parent=97 // pred_fallthru
                _
              // Predicated region
              $region121: #{fft_block.3} parent=97 // pred_check
                _
              $region122: #{fft_block.3} parent=97 // pred_check_branch
                %1542 = sbr.rel target = $region124
              $region123: #{fft_block.3} parent=97 // pred_region
                _
              $region124: #{fft_block.3} parent=97 // pred_fallthru
                _
            $region98: #{fft_block.3} parent=93 // pred_fallthru
              _
            // Predicated region
            $region99: #{fft_block.3} parent=93 // pred_check
              _
            $region100: #{fft_block.3} parent=93 // pred_check_branch
              %1505 = sbr.rel target = $region102
            $region101: #{fft_block.3} parent=93 // pred_region
              loop: start=0, step=1, limit=1
              $region103: #{fft_block.3} parent=101 // loop_pre_header
                _
              $region104: #{fft_block.3} parent=101 // loop_header
                %s1508 = sphi 0, %s1512
                %p1509 = scmp.ge.s32.totalorder %s1508, 1
                %s1513 = sphi %s1494, %s1494
                %s1514 = sphi %s1499, %s1499
              $region105: #{fft_block.3} parent=101 // loop_header_branch
                %1511 = sbr.rel (%p1509) target = $region109
              $region106: #{fft_block.3} parent=101 // loop_body
                %v1515 = vld [vmem:[%s1513] sm:$0xff]
                %1516 = vst [vmem:[%s1514] sm:$0xff] %v1515
                %v1517 = vld [vmem:[%s1513 + $0x8] sm:$0xff]
                %1518 = vst [vmem:[%s1514 + $0x10] sm:$0xff] %v1517
                %v1519 = vld [vmem:[%s1513 + $0x10] sm:$0xff]
                %1520 = vst [vmem:[%s1514 + $0x20] sm:$0xff] %v1519
                %v1521 = vld [vmem:[%s1513 + $0x18] sm:$0xff]
                %1522 = vst [vmem:[%s1514 + $0x30] sm:$0xff] %v1521
              $region107: #{fft_block.3} parent=101 // loop_footer
                %s1512 = sadd.s32 1, %s1508
              $region108: #{fft_block.3} parent=101 // loop_footer_branch
                %1507 = sbr.rel target = $region104
              $region109: #{fft_block.3} parent=101 // loop_exit
                _
            $region102: #{fft_block.3} parent=93 // pred_fallthru
              _
          $region94: #{fft_block.3} parent=89 // pred_fallthru
            _
          %1543 = vnop
        $region90: #{fft_block.3} parent=81 // pred_fallthru
          _
      $region82: #{fft_block.3} parent=5 // pred_fallthru
        _
      %p1544 = scmp.le.s32.totalorder 2, %s13
      // Predicated region
      $region125: #{fft_block.3} parent=5 // pred_check
        %p1545 = pneg %p1544
      $region126: #{fft_block.3} parent=5 // pred_check_branch
        %1547 = sbr.rel (%p1545) target = $region128
      $region127: #{fft_block.3} parent=5 // pred_region
        %s1548 = ssub.s32 %s13, 2
        // Predicated region
        $region129: #{fft_block.3} parent=127 // pred_check
          %p1549 = pneg %p194
        $region130: #{fft_block.3} parent=127 // pred_check_branch
          %1551 = sbr.rel (%p1549) target = $region132
        $region131: #{fft_block.3} parent=127 // pred_region
          %s1552 = sand.u32 %s179, 1
          %s1553 = sand.u32 %s179, 1
          %s1554 = smul.addr %s1553, 32
          %s1555 = scalar_lea.vmem [#allocation5], %s1554
        $region132: #{fft_block.3} parent=127 // pred_fallthru
          _
      $region128: #{fft_block.3} parent=5 // pred_fallthru
        _
    $region6: #{fft_block.3} parent=1 // loop_footer
      %s17 = sadd.s32 1, %s13
    $region7: #{fft_block.3} parent=1 // loop_footer_branch
      %12 = sbr.rel target = $region3
    $region8: #{fft_block.3} parent=1 // loop_exit
      _

// kernel: fft_block.2
$region0: #{fft_block.2}
  #allocation0 [shape = 'u32[]', space=smem, size = 0x4, offset = 0x4, fixed_abs, tag = 'smem constant byte address 0x4 - core index']
  #allocation1 [shape = 'u32[144,128]{1,0:T(1,128)}', space=vmem, size = 0x12000, scoped, tag = 'internal scratch']
  %s0 = inlined_call_operand.vmem [shape: f32[4,16,128], index: 0, kind: input, shape index: {}]
  %s1 = inlined_call_operand.vmem [shape: bf16[128,384], index: 1, kind: input, shape index: {}]
  %s2 = inlined_call_operand.vmem [shape: f32[1,384], index: 2, kind: input, shape index: {}]
  %s3 = inlined_call_operand.vmem [shape: bf16[128,128], index: 3, kind: input, shape index: {}]
  %s4 = inlined_call_operand.vmem [shape: f32[1,128], index: 4, kind: input, shape index: {}]
  %s5 = inlined_call_operand.vmem [shape: f32[1,128], index: 5, kind: input, shape index: {}]
  %s6 = inlined_call_operand.vmem [shape: f32[1,128], index: 6, kind: input, shape index: {}]
  %s7 = inlined_call_operand.vmem [shape: f32[4,16,128], index: 7, kind: output, shape index: {}]
  %s8 = sld [smem:[#allocation0]]
  $region61: #{fft_block.2} parent=0
    _
  %s10 = ssub.s32 1, %s8
  %s11 = scalar_select 0, %s10, %s8
  loop: start=0, step=1, limit=4
  $region2: #{fft_block.2} parent=0 // loop_pre_header
    _
  $region3: #{fft_block.2} parent=0 // loop_header
    %s13 = sphi 0, %s17
    %p14 = scmp.ge.s32.totalorder %s13, 4
    %s23 = sphi 0, %s25
    %s26 = sphi 0, %s23
    %s27 = sphi 0, %s26
    %s43 = sphi 0, %s27
    %s47 = sphi 0, %s47
    %s49 = sphi 0, %s47
    %s50 = sphi 0, %s49
    %s64 = sphi 0, %s50
    %s68 = sphi 0, %s68
    %s70 = sphi 0, %s68
    %s71 = sphi 0, %s70
    %s85 = sphi 0, %s71
    %s89 = sphi 0, %s89
    %s91 = sphi 0, %s89
    %s92 = sphi 0, %s91
    %s106 = sphi 0, %s92
    %s110 = sphi 0, %s110
    %s112 = sphi 0, %s110
    %s113 = sphi 0, %s112
    %s127 = sphi 0, %s113
    %s131 = sphi 0, %s131
    %s133 = sphi 0, %s131
    %s134 = sphi 0, %s133
    %s148 = sphi 0, %s134
    %s152 = sphi 0, %s152
    %s154 = sphi 0, %s152
    %s155 = sphi 0, %s154
    %s169 = sphi 0, %s155
    %s175 = sphi 0, %s177
    %s178 = sphi 0, %s175
    %s179 = sphi 0, %s178
    %s195 = sphi 0, %s179
  $region4: #{fft_block.2} parent=0 // loop_header_branch
    %16 = sbr.rel (%p14) target = $region8
  $region5: #{fft_block.2} parent=0 // loop_body
    %s18 = ssub.s32 %s13, 1
    %s19 = ssub.s32 %s13, 2
    %s20 = sadd.s32 %s13, 1
    %s21 = ssub.s32 %s13, %s20
    %p22 = scmp.eq.s32.totalorder %s21, 0
    %s24 = sadd.s32 %s23, 1
    %s25 = scalar_select %p22, %s23, %s24
    %p28 = pneg %p22
    %p29 = scmp.eq.s32.totalorder %s13, 1
    %p30 = por %p28, %p29
    %p31 = scmp.ne.s32.totalorder %s23, %s26
    %p32 = scmp.eq.s32.totalorder %s13, 0
    %p33 = por %p31, %p32
    %p34 = scmp.ne.s32.totalorder %s23, %s26
    %p35 = scmp.eq.s32.totalorder %s18, 1
    %p36 = por %p34, %p35
    %p37 = scmp.ne.s32.totalorder %s26, %s27
    %p38 = scmp.eq.s32.totalorder %s18, 0
    %p39 = por %p37, %p38
    %p40 = scmp.ne.s32.totalorder %s26, %s27
    %p41 = scmp.eq.s32.totalorder %s19, 1
    %p42 = por %p40, %p41
    %p44 = scmp.ne.s32.totalorder %s27, %s43
    %p45 = scmp.eq.s32.totalorder %s19, 0
    %p46 = por %p44, %p45
    %s48 = sadd.s32 %s47, 1
    %p51 = scmp.eq.s32.totalorder %s13, 1
    %p52 = scmp.ne.s32.totalorder %s47, %s49
    %p53 = scmp.eq.s32.totalorder %s13, 0
    %p54 = por %p52, %p53
    %p55 = scmp.ne.s32.totalorder %s47, %s49
    %p56 = scmp.eq.s32.totalorder %s18, 1
    %p57 = por %p55, %p56
    %p58 = scmp.ne.s32.totalorder %s49, %s50
    %p59 = scmp.eq.s32.totalorder %s18, 0
    %p60 = por %p58, %p59
    %p61 = scmp.ne.s32.totalorder %s49, %s50
    %p62 = scmp.eq.s32.totalorder %s19, 1
    %p63 = por %p61, %p62
    %p65 = scmp.ne.s32.totalorder %s50, %s64
    %p66 = scmp.eq.s32.totalorder %s19, 0
    %p67 = por %p65, %p66
    %s69 = sadd.s32 %s68, 1
    %p72 = scmp.eq.s32.totalorder %s13, 1
    %p73 = scmp.ne.s32.totalorder %s68, %s70
    %p74 = scmp.eq.s32.totalorder %s13, 0
    %p75 = por %p73, %p74
    %p76 = scmp.ne.s32.totalorder %s68, %s70
    %p77 = scmp.eq.s32.totalorder %s18, 1
    %p78 = por %p76, %p77
    %p79 = scmp.ne.s32.totalorder %s70, %s71
    %p80 = scmp.eq.s32.totalorder %s18, 0
    %p81 = por %p79, %p80
    %p82 = scmp.ne.s32.totalorder %s70, %s71
    %p83 = scmp.eq.s32.totalorder %s19, 1
    %p84 = por %p82, %p83
    %p86 = scmp.ne.s32.totalorder %s71, %s85
    %p87 = scmp.eq.s32.totalorder %s19, 0
    %p88 = por %p86, %p87
    %s90 = sadd.s32 %s89, 1
    %p93 = scmp.eq.s32.totalorder %s13, 1
    %p94 = scmp.ne.s32.totalorder %s89, %s91
    %p95 = scmp.eq.s32.totalorder %s13, 0
    %p96 = por %p94, %p95
    %p97 = scmp.ne.s32.totalorder %s89, %s91
    %p98 = scmp.eq.s32.totalorder %s18, 1
    %p99 = por %p97, %p98
    %p100 = scmp.ne.s32.totalorder %s91, %s92
    %p101 = scmp.eq.s32.totalorder %s18, 0
    %p102 = por %p100, %p101
    %p103 = scmp.ne.s32.totalorder %s91, %s92
    %p104 = scmp.eq.s32.totalorder %s19, 1
    %p105 = por %p103, %p104
    %p107 = scmp.ne.s32.totalorder %s92, %s106
    %p108 = scmp.eq.s32.totalorder %s19, 0
    %p109 = por %p107, %p108
    %s111 = sadd.s32 %s110, 1
    %p114 = scmp.eq.s32.totalorder %s13, 1
    %p115 = scmp.ne.s32.totalorder %s110, %s112
    %p116 = scmp.eq.s32.totalorder %s13, 0
    %p117 = por %p115, %p116
    %p118 = scmp.ne.s32.totalorder %s110, %s112
    %p119 = scmp.eq.s32.totalorder %s18, 1
    %p120 = por %p118, %p119
    %p121 = scmp.ne.s32.totalorder %s112, %s113
    %p122 = scmp.eq.s32.totalorder %s18, 0
    %p123 = por %p121, %p122
    %p124 = scmp.ne.s32.totalorder %s112, %s113
    %p125 = scmp.eq.s32.totalorder %s19, 1
    %p126 = por %p124, %p125
    %p128 = scmp.ne.s32.totalorder %s113, %s127
    %p129 = scmp.eq.s32.totalorder %s19, 0
    %p130 = por %p128, %p129
    %s132 = sadd.s32 %s131, 1
    %p135 = scmp.eq.s32.totalorder %s13, 1
    %p136 = scmp.ne.s32.totalorder %s131, %s133
    %p137 = scmp.eq.s32.totalorder %s13, 0
    %p138 = por %p136, %p137
    %p139 = scmp.ne.s32.totalorder %s131, %s133
    %p140 = scmp.eq.s32.totalorder %s18, 1
    %p141 = por %p139, %p140
    %p142 = scmp.ne.s32.totalorder %s133, %s134
    %p143 = scmp.eq.s32.totalorder %s18, 0
    %p144 = por %p142, %p143
    %p145 = scmp.ne.s32.totalorder %s133, %s134
    %p146 = scmp.eq.s32.totalorder %s19, 1
    %p147 = por %p145, %p146
    %p149 = scmp.ne.s32.totalorder %s134, %s148
    %p150 = scmp.eq.s32.totalorder %s19, 0
    %p151 = por %p149, %p150
    %s153 = sadd.s32 %s152, 1
    %p156 = scmp.eq.s32.totalorder %s13, 1
    %p157 = scmp.ne.s32.totalorder %s152, %s154
    %p158 = scmp.eq.s32.totalorder %s13, 0
    %p159 = por %p157, %p158
    %p160 = scmp.ne.s32.totalorder %s152, %s154
    %p161 = scmp.eq.s32.totalorder %s18, 1
    %p162 = por %p160, %p161
    %p163 = scmp.ne.s32.totalorder %s154, %s155
    %p164 = scmp.eq.s32.totalorder %s18, 0
    %p165 = por %p163, %p164
    %p166 = scmp.ne.s32.totalorder %s154, %s155
    %p167 = scmp.eq.s32.totalorder %s19, 1
    %p168 = por %p166, %p167
    %p170 = scmp.ne.s32.totalorder %s155, %s169
    %p171 = scmp.eq.s32.totalorder %s19, 0
    %p172 = por %p170, %p171
    %s173 = ssub.s32 %s13, %s20
    %p174 = scmp.eq.s32.totalorder %s173, 0
    %s176 = sadd.s32 %s175, 1
    %s177 = scalar_select %p174, %s175, %s176
    %p180 = pneg %p174
    %p181 = scmp.eq.s32.totalorder %s13, 1
    %p182 = por %p180, %p181
    %p183 = scmp.ne.s32.totalorder %s175, %s178
    %p184 = scmp.eq.s32.totalorder %s13, 0
    %p185 = por %p183, %p184
    %p186 = scmp.ne.s32.totalorder %s175, %s178
    %p187 = scmp.eq.s32.totalorder %s18, 1
    %p188 = por %p186, %p187
    %p189 = scmp.ne.s32.totalorder %s178, %s179
    %p190 = scmp.eq.s32.totalorder %s18, 0
    %p191 = por %p189, %p190
    %p192 = scmp.ne.s32.totalorder %s178, %s179
    %p193 = scmp.eq.s32.totalorder %s19, 1
    %p194 = por %p192, %p193
    %p196 = scmp.ne.s32.totalorder %s179, %s195
    %p197 = scmp.eq.s32.totalorder %s19, 0
    %p198 = por %p196, %p197
    %p199 = scmp.le.s32.totalorder 1, %s13
    %p200 = scmp.lt.s32.totalorder %s13, 3
    %p201 = pnand %p199, %p200
    %p202 = pneg %p201
    // Predicated region
    $region9: #{fft_block.2} parent=5 // pred_check
      _
    $region10: #{fft_block.2} parent=5 // pred_check_branch
      %204 = sbr.rel (%p201) target = $region12
    $region11: #{fft_block.2} parent=5 // pred_region
      %s205 = ssub.s32 %s13, 1
      // Predicated region
      $region13: #{fft_block.2} parent=11 // pred_check
        %p206 = pneg %p60
      $region14: #{fft_block.2} parent=11 // pred_check_branch
        %208 = sbr.rel (%p206) target = $region16
      $region15: #{fft_block.2} parent=11 // pred_region
        _
      $region16: #{fft_block.2} parent=11 // pred_fallthru
        _
      // Predicated region
      $region17: #{fft_block.2} parent=11 // pred_check
        %p209 = pneg %p81
      $region18: #{fft_block.2} parent=11 // pred_check_branch
        %211 = sbr.rel (%p209) target = $region20
      $region19: #{fft_block.2} parent=11 // pred_region
        _
      $region20: #{fft_block.2} parent=11 // pred_fallthru
        _
      // Predicated region
      $region21: #{fft_block.2} parent=11 // pred_check
        %p212 = pneg %p102
      $region22: #{fft_block.2} parent=11 // pred_check_branch
        %214 = sbr.rel (%p212) target = $region24
      $region23: #{fft_block.2} parent=11 // pred_region
        _
      $region24: #{fft_block.2} parent=11 // pred_fallthru
        _
      // Predicated region
      $region25: #{fft_block.2} parent=11 // pred_check
        %p215 = pneg %p123
      $region26: #{fft_block.2} parent=11 // pred_check_branch
        %217 = sbr.rel (%p215) target = $region28
      $region27: #{fft_block.2} parent=11 // pred_region
        _
      $region28: #{fft_block.2} parent=11 // pred_fallthru
        _
      // Predicated region
      $region29: #{fft_block.2} parent=11 // pred_check
        %p218 = pneg %p144
      $region30: #{fft_block.2} parent=11 // pred_check_branch
        %220 = sbr.rel (%p218) target = $region32
      $region31: #{fft_block.2} parent=11 // pred_region
        _
      $region32: #{fft_block.2} parent=11 // pred_fallthru
        _
      // Predicated region
      $region33: #{fft_block.2} parent=11 // pred_check
        %p221 = pneg %p165
      $region34: #{fft_block.2} parent=11 // pred_check_branch
        %223 = sbr.rel (%p221) target = $region36
      $region35: #{fft_block.2} parent=11 // pred_region
        _
      $region36: #{fft_block.2} parent=11 // pred_fallthru
        _
    $region12: #{fft_block.2} parent=5 // pred_fallthru
      _
    %p224 = scmp.lt.s32.totalorder %s13, 2
    // Predicated region
    $region37: #{fft_block.2} parent=5 // pred_check
      %p225 = pneg %p224
    $region38: #{fft_block.2} parent=5 // pred_check_branch
      %227 = sbr.rel (%p225) target = $region40
    $region39: #{fft_block.2} parent=5 // pred_region
      // Predicated region
      $region41: #{fft_block.2} parent=39 // pred_check
        %p228 = pneg %p33
      $region42: #{fft_block.2} parent=39 // pred_check_branch
        %230 = sbr.rel (%p228) target = $region44
      $region43: #{fft_block.2} parent=39 // pred_region
        %s231 = smul.u32 2, %s13
        %p232 = scmp.lt.s32.totalorder %s231, 3
        %s233 = scalar_select %p232, %s231, 3
        %s234 = smul.addr %s233, 2
        %s235 = smul.addr %s234, 8
        %s236 = scalar_lea.vmem %s0, %s235
        %s237 = smul.u32 2, %s13
      $region44: #{fft_block.2} parent=39 // pred_fallthru
        _
    $region40: #{fft_block.2} parent=5 // pred_fallthru
      _
    %p238 = scmp.le.s32.totalorder 1, %s13
    %p239 = scmp.lt.s32.totalorder %s13, 3
    %p240 = pnand %p238, %p239
    %p241 = pneg %p240
    // Predicated region
    $region45: #{fft_block.2} parent=5 // pred_check
      _
    $region46: #{fft_block.2} parent=5 // pred_check_branch
      %243 = sbr.rel (%p240) target = $region48
    $region47: #{fft_block.2} parent=5 // pred_region
      %s244 = ssub.s32 %s13, 1
      %s245 = smul.u32 2, %s18
      %p246 = scmp.lt.s32.totalorder %s245, 3
      %s247 = scalar_select %p246, %s245, 3
      %s248 = smul.addr %s247, 2
      %s249 = smul.addr %s248, 8
      %s250 = scalar_lea.vmem %s0, %s249
      %p251 = pneg %p39
      %p252 = pneg %p36
      %p253 = pneg %p60
      %p254 = pneg %p57
      %p255 = pneg %p81
      %p256 = pneg %p78
      %p257 = pneg %p102
      %p258 = pneg %p99
      %p259 = pneg %p123
      %p260 = pneg %p120
      %p261 = pneg %p144
      %p262 = pneg %p141
      %p263 = pneg %p165
      %p264 = pneg %p162
      %p265 = pneg %p191
      %p266 = pneg %p188
      %s267 = smul.u32 2, %s18
      %p268 = scmp.lt.s32.totalorder %s267, 3
      %s269 = scalar_select %p268, %s267, 3
      %s270 = smul.addr %s269, 2
      %s271 = smul.addr %s270, 8
      %s272 = scalar_lea.vmem %s7, %s271
      %s273 = smul.u32 2, %s18
      %p274 = scmp.lt.s32.totalorder %s273, 3
      %s275 = scalar_select %p274, %s273, 3
      %s276 = smul.addr %s275, 2
      %s277 = smul.addr %s276, 8
      %s278 = scalar_lea.vmem %s0, %s277
      %s279 = smul.u32 2, %s18
      %s280 = smul.u32 2, %s18
      %p281 = scmp.lt.s32.totalorder %s280, 3
      %s282 = scalar_select %p281, %s280, 3
      %s283 = smul.addr %s282, 2
      %s284 = smul.addr %s283, 8
      %s285 = scalar_lea.vmem %s7, %s284
      %s286 = smul.u32 2, %s18
      %v288 = vld [vmem:[%s278] sm:$0xff]
      %v289 = vld [vmem:[%s278 + $0x8] sm:$0xff]
      %v290 = vld [vmem:[%s278 + $0x10] sm:$0xff]
      %v291 = vld [vmem:[%s278 + $0x18] sm:$0xff]
      %v292 = vpack.c.bf16 %v289, %v288
      %v293 = vpack.c.bf16 %v291, %v290
      %v294 = vld [vmem:[%s1] sm:$0xff]
      %v295 = vld [vmem:[%s1 + $0x8] sm:$0xf]
      %v296 = vld [vmem:[%s1 + $0xc] sm:$0xff]
      %v297 = vld [vmem:[%s1 + $0x14] sm:$0xf]
      %v298 = vld [vmem:[%s1 + $0x18] sm:$0xff]
      %v299 = vld [vmem:[%s1 + $0x20] sm:$0xf]
      %v300 = vld [vmem:[%s1 + $0x24] sm:$0xff]
      %v301 = vld [vmem:[%s1 + $0x2c] sm:$0xf]
      %v302 = vld [vmem:[%s1 + $0x30] sm:$0xff]
      %v303 = vld [vmem:[%s1 + $0x38] sm:$0xf]
      %v304 = vld [vmem:[%s1 + $0x3c] sm:$0xff]
      %v305 = vld [vmem:[%s1 + $0x44] sm:$0xf]
      %v306 = vld [vmem:[%s1 + $0x48] sm:$0xff]
      %v307 = vld [vmem:[%s1 + $0x50] sm:$0xf]
      %v308 = vld [vmem:[%s1 + $0x54] sm:$0xff]
      %v309 = vld [vmem:[%s1 + $0x5c] sm:$0xf]
      %v310 = vld [vmem:[%s1 + $0x60] sm:$0xff]
      %v311 = vld [vmem:[%s1 + $0x68] sm:$0xf]
      %v312 = vld [vmem:[%s1 + $0x6c] sm:$0xff]
      %v313 = vld [vmem:[%s1 + $0x74] sm:$0xf]
      %v314 = vld [vmem:[%s1 + $0x78] sm:$0xff]
      %v315 = vld [vmem:[%s1 + $0x80] sm:$0xf]
      %v316 = vld [vmem:[%s1 + $0x84] sm:$0xff]
      %v317 = vld [vmem:[%s1 + $0x8c] sm:$0xf]
      %v318 = vld [vmem:[%s1 + $0x90] sm:$0xff]
      %v319 = vld [vmem:[%s1 + $0x98] sm:$0xf]
      %v320 = vld [vmem:[%s1 + $0x9c] sm:$0xff]
      %v321 = vld [vmem:[%s1 + $0xa4] sm:$0xf]
      %v322 = vld [vmem:[%s1 + $0xa8] sm:$0xff]
      %v323 = vld [vmem:[%s1 + $0xb0] sm:$0xf]
      %v324 = vld [vmem:[%s1 + $0xb4] sm:$0xff]
      %v325 = vld [vmem:[%s1 + $0xbc] sm:$0xf]
      %v326 = vld [vmem:[%s2] sm:$0x7]
      %v328 = vlaneseq
      %v329 = vshrl.u32 %v328, 7
      %v330 = vsub.s32 0, %v329
      %v331 = vrot.slane %v326, %v330
      %v332 = vlaneseq
      %v333 = vshrl.u32 %v332, 7
      %v334 = vsub.s32 1, %v333
      %v335 = vrot.slane %v326, %v334
      %v336 = vlaneseq
      %v337 = vshrl.u32 %v336, 7
      %v338 = vsub.s32 2, %v337
      %v339 = vrot.slane %v326, %v338
      %v375 = vunpack.c.l.b16 %v294
      %v376 = vunpack.c.h.b16 %v294
      %v377 = vunpack.c.l.b16 %v295
      %v378 = vunpack.c.l.b16 %v296
      %v379 = vunpack.c.h.b16 %v296
      %v380 = vunpack.c.l.b16 %v297
      %v381 = vunpack.c.l.b16 %v298
      %v382 = vunpack.c.h.b16 %v298
      %v383 = vunpack.c.l.b16 %v299
      %v384 = vunpack.c.l.b16 %v300
      %v385 = vunpack.c.h.b16 %v300
      %v386 = vunpack.c.l.b16 %v301
      %v387 = vunpack.c.l.b16 %v302
      %v388 = vunpack.c.h.b16 %v302
      %v389 = vunpack.c.l.b16 %v303
      %v390 = vunpack.c.l.b16 %v304
      %v391 = vunpack.c.h.b16 %v304
      %v392 = vunpack.c.l.b16 %v305
      %v393 = vunpack.c.l.b16 %v306
      %v394 = vunpack.c.h.b16 %v306
      %v395 = vunpack.c.l.b16 %v307
      %v396 = vunpack.c.l.b16 %v308
      %v397 = vunpack.c.h.b16 %v308
      %v398 = vunpack.c.l.b16 %v309
      %v399 = vunpack.c.l.b16 %v310
      %v400 = vunpack.c.h.b16 %v310
      %v401 = vunpack.c.l.b16 %v311
      %v402 = vunpack.c.l.b16 %v312
      %v403 = vunpack.c.h.b16 %v312
      %v404 = vunpack.c.l.b16 %v313
      %v405 = vunpack.c.l.b16 %v314
      %v406 = vunpack.c.h.b16 %v314
      %v407 = vunpack.c.l.b16 %v315
      %v408 = vunpack.c.l.b16 %v316
      %v409 = vunpack.c.h.b16 %v316
      %v410 = vunpack.c.l.b16 %v317
      %v411 = vunpack.c.l.b16 %v318
      %v412 = vunpack.c.h.b16 %v318
      %v413 = vunpack.c.l.b16 %v319
      %v414 = vunpack.c.l.b16 %v320
      %v415 = vunpack.c.h.b16 %v320
      %v416 = vunpack.c.l.b16 %v321
      %v417 = vunpack.c.l.b16 %v322
      %v418 = vunpack.c.h.b16 %v322
      %v419 = vunpack.c.l.b16 %v323
      %v420 = vunpack.c.l.b16 %v324
      %v421 = vunpack.c.h.b16 %v324
      %v422 = vunpack.c.l.b16 %v325
      %v423 = vpack.c.b16 %v378, %v375
      %v424 = vpack.c.b16 %v379, %v376
      %v425 = vpack.c.b16 %v380, %v377
      %v426 = vpack.c.b16 %v384, %v381
      %v427 = vpack.c.b16 %v385, %v382
      %v428 = vpack.c.b16 %v386, %v383
      %v429 = vpack.c.b16 %v390, %v387
      %v430 = vpack.c.b16 %v391, %v388
      %v431 = vpack.c.b16 %v392, %v389
      %v432 = vpack.c.b16 %v396, %v393
      %v433 = vpack.c.b16 %v397, %v394
      %v434 = vpack.c.b16 %v398, %v395
      %v435 = vpack.c.b16 %v402, %v399
      %v436 = vpack.c.b16 %v403, %v400
      %v437 = vpack.c.b16 %v404, %v401
      %v438 = vpack.c.b16 %v408, %v405
      %v439 = vpack.c.b16 %v409, %v406
      %v440 = vpack.c.b16 %v410, %v407
      %v441 = vpack.c.b16 %v414, %v411
      %v442 = vpack.c.b16 %v415, %v412
      %v443 = vpack.c.b16 %v416, %v413
      %v444 = vpack.c.b16 %v420, %v417
      %v445 = vpack.c.b16 %v421, %v418
      %v446 = vpack.c.b16 %v422, %v419
      %471 = vmatprep.subr.bf16.mxu0 %v424
      %472 = vmatpush1.bf16.msra.mxu0 %v423
      %473 = vmatprep.subr.bf16.mxu0 %v427
      %474 = vmatpush1.bf16.msra.mxu0 %v426
      %475 = vmatprep.subr.bf16.mxu0 %v430
      %476 = vmatpush1.bf16.msra.mxu0 %v429
      %477 = vmatprep.subr.bf16.mxu0 %v433
      %478 = vmatpush1.bf16.msra.mxu0 %v432
      %479 = vmatprep.subr.bf16.mxu0 %v436
      %480 = vmatpush1.bf16.msra.mxu0 %v435
      %481 = vmatprep.subr.bf16.mxu0 %v439
      %482 = vmatpush1.bf16.msra.mxu0 %v438
      %483 = vmatprep.subr.bf16.mxu0 %v442
      %484 = vmatpush1.bf16.msra.mxu0 %v441
      %485 = vmatprep.subr.bf16.mxu0 %v445
      %486 = vmatpush1.bf16.msra.mxu0 %v444
      %487 = vmatprep.subr.bf16.mxu0 0
      %488 = vmatpush1.bf16.msra.mxu0 0
      %489 = vmatprep.subr.bf16.mxu0 0
      %490 = vmatpush1.bf16.msra.mxu0 0
      %491 = vmatprep.subr.bf16.mxu0 0
      %492 = vmatpush1.bf16.msra.mxu0 0
      %493 = vmatprep.subr.bf16.mxu0 0
      %494 = vmatpush1.bf16.msra.mxu0 0
      %495 = vmatprep.subr.bf16.mxu0 0
      %496 = vmatpush1.bf16.msra.mxu0 0
      %497 = vmatprep.subr.bf16.mxu0 0
      %498 = vmatpush1.bf16.msra.mxu0 0
      %499 = vmatprep.subr.bf16.mxu0 0
      %500 = vmatpush1.bf16.msra.mxu0 0
      %501 = vmatprep.subr.bf16.mxu0 0
      %502 = vmatpush1.bf16.msra.mxu0 0
      %503 = vmatprep.mubr.bf16.mxu0 0
      %504 = vmatmul.mubr.bf16.gmra.mrb[0].mxu0 %v292
      %v505 = vpop.f32.mrb[0].mxu0
      %v506 = vadd.f32 %v331, %v505
      %v507 = vpop.f32.mrb[0].mxu0
      %v508 = vadd.f32 %v335, %v507
      %v509 = vpop.f32.mrb[0].mxu0
      %v510 = vadd.f32 %v331, %v509
      %v511 = vpop.f32.mrb[0].mxu0
      %v512 = vadd.f32 %v335, %v511
      %513 = vmatprep.mubr.bf16.mxu0 0
      %514 = vmatmul.mubr.bf16.gmra.mrb[0].mxu0 %v293
      %v515 = vpop.f32.mrb[0].mxu0
      %v516 = vadd.f32 %v331, %v515
      %v517 = vpop.f32.mrb[0].mxu0
      %v518 = vadd.f32 %v335, %v517
      %v519 = vpop.f32.mrb[0].mxu0
      %v520 = vadd.f32 %v331, %v519
      %v521 = vpop.f32.mrb[0].mxu0
      %v522 = vadd.f32 %v335, %v521
      %523 = vdwg.mxu0
      %524 = vmatprep.subr.bf16.mxu0 0
      %525 = vmatpush1.bf16.msra.mxu0 %v425
      %526 = vmatprep.subr.bf16.mxu0 0
      %527 = vmatpush1.bf16.msra.mxu0 %v428
      %528 = vmatprep.subr.bf16.mxu0 0
      %529 = vmatpush1.bf16.msra.mxu0 %v431
      %530 = vmatprep.subr.bf16.mxu0 0
      %531 = vmatpush1.bf16.msra.mxu0 %v434
      %532 = vmatprep.subr.bf16.mxu0 0
      %533 = vmatpush1.bf16.msra.mxu0 %v437
      %534 = vmatprep.subr.bf16.mxu0 0
      %535 = vmatpush1.bf16.msra.mxu0 %v440
      %536 = vmatprep.subr.bf16.mxu0 0
      %537 = vmatpush1.bf16.msra.mxu0 %v443
      %538 = vmatprep.subr.bf16.mxu0 0
      %539 = vmatpush1.bf16.msra.mxu0 %v446
      %540 = vmatprep.subr.bf16.mxu0 0
      %541 = vmatpush1.bf16.msra.mxu0 0
      %542 = vmatprep.subr.bf16.mxu0 0
      %543 = vmatpush1.bf16.msra.mxu0 0
      %544 = vmatprep.subr.bf16.mxu0 0
      %545 = vmatpush1.bf16.msra.mxu0 0
      %546 = vmatprep.subr.bf16.mxu0 0
      %547 = vmatpush1.bf16.msra.mxu0 0
      %548 = vmatprep.subr.bf16.mxu0 0
      %549 = vmatpush1.bf16.msra.mxu0 0
      %550 = vmatprep.subr.bf16.mxu0 0
      %551 = vmatpush1.bf16.msra.mxu0 0
      %552 = vmatprep.subr.bf16.mxu0 0
      %553 = vmatpush1.bf16.msra.mxu0 0
      %554 = vmatprep.subr.bf16.mxu0 0
      %555 = vmatpush1.bf16.msra.mxu0 0
      %556 = vmatprep.mubr.bf16.mxu0 0
      %557 = vmatmul.mubr.bf16.gmra.mrb[0].mxu0 %v292
      %v558 = vpop.f32.mrb[0].mxu0
      %v559 = vadd.f32 %v339, %v558
      %v560 = vpop.f32.mrb[0].mxu0
      %v561 = vpop.f32.mrb[0].mxu0
      %v562 = vadd.f32 %v339, %v561
      %v563 = vpop.f32.mrb[0].mxu0
      %564 = vmatprep.mubr.bf16.mxu0 0
      %565 = vmatmul.mubr.bf16.gmra.mrb[0].mxu0 %v293
      %v566 = vpop.f32.mrb[0].mxu0
      %v567 = vadd.f32 %v339, %v566
      %v568 = vpop.f32.mrb[0].mxu0
      %v569 = vpop.f32.mrb[0].mxu0
      %v570 = vadd.f32 %v339, %v569
      %v571 = vpop.f32.mrb[0].mxu0
      %572 = vdwg.mxu0
      %v573 = vmul.f32 %v506, 0.17677669
      %v574 = vmul.f32 %v510, 0.17677669
      %v575 = vmul.f32 %v516, 0.17677669
      %v576 = vmul.f32 %v520, 0.17677669
      %579 = vrot.lane.b32.xlu0 %v573, 96
      %v580 = vpop.permute.xlu0 %579
      %581 = vrot.lane.b32.xlu0 %v574, 96
      %v582 = vpop.permute.xlu0 %581
      %585 = vrot.lane.b32.xlu0 %v573, 64
      %v586 = vpop.permute.xlu0 %585
      %587 = vrot.lane.b32.xlu0 %v574, 64
      %v588 = vpop.permute.xlu0 %587
      %591 = vrot.lane.b32.xlu0 %v573, 32
      %v592 = vpop.permute.xlu0 %591
      %593 = vrot.lane.b32.xlu0 %v574, 32
      %v594 = vpop.permute.xlu0 %593
      %v597 = vcombine.low %v573, %v586
      %v598 = vcombine.high %v573, %v586
      %v600 = vunpack.c.l.s4 1983009808
      %v601 = vunpack.c.0.s8 %v600
      %v602 = vlaneseq
      %v603 = vshrl.u32 %v602, 7
      %v604 = vsub.s32 %v601, %v603
      %v605 = vrot.slane %v597, %v604
      %v607 = vunpack.c.l.s4 1983009808
      %v608 = vunpack.c.0.s8 %v607
      %v609 = vlaneseq
      %v610 = vshrl.u32 %v609, 7
      %v611 = vsub.s32 %v608, %v610
      %v612 = vrot.slane %v598, %v611
      %v613 = vcombine.low %v580, %v592
      %v614 = vcombine.high %v580, %v592
      %v616 = vunpack.c.l.s4 1983009808
      %v617 = vunpack.c.0.s8 %v616
      %v618 = vlaneseq
      %v619 = vshrl.u32 %v618, 7
      %v620 = vsub.s32 %v617, %v619
      %v621 = vrot.slane %v613, %v620
      %v623 = vunpack.c.l.s4 1983009808
      %v624 = vunpack.c.0.s8 %v623
      %v625 = vlaneseq
      %v626 = vshrl.u32 %v625, 7
      %v627 = vsub.s32 %v624, %v626
      %v628 = vrot.slane %v614, %v627
      %v629 = vcombine.low %v605, %v621
      %v630 = vcombine.high %v605, %v621
      %v632 = vunpack.c.l.s4 1934713408
      %v633 = vunpack.c.0.s8 %v632
      %v634 = vlaneseq
      %v635 = vshrl.u32 %v634, 7
      %v636 = vsub.s32 %v633, %v635
      %v637 = vrot.slane %v629, %v636
      %v639 = vunpack.c.l.s4 1934713408
      %v640 = vunpack.c.0.s8 %v639
      %v641 = vlaneseq
      %v642 = vshrl.u32 %v641, 7
      %v643 = vsub.s32 %v640, %v642
      %v644 = vrot.slane %v630, %v643
      %v645 = vcombine.low %v612, %v628
      %v646 = vcombine.high %v612, %v628
      %v648 = vunpack.c.l.s4 1934713408
      %v649 = vunpack.c.0.s8 %v648
      %v650 = vlaneseq
      %v651 = vshrl.u32 %v650, 7
      %v652 = vsub.s32 %v649, %v651
      %v653 = vrot.slane %v645, %v652
      %v655 = vunpack.c.l.s4 1934713408
      %v656 = vunpack.c.0.s8 %v655
      %v657 = vlaneseq
      %v658 = vshrl.u32 %v657, 7
      %v659 = vsub.s32 %v656, %v658
      %v660 = vrot.slane %v646, %v659
      %v661 = vcombine.high %v637, 0.0
      %v662 = vcombine.high %v644, 0.0
      %v663 = vcombine.high %v653, 0.0
      %v664 = vcombine.high %v660, 0.0
      %v665 = vcombine.low %v574, %v588
      %v666 = vcombine.high %v574, %v588
      %v668 = vunpack.c.l.s4 1983009808
      %v669 = vunpack.c.0.s8 %v668
      %v670 = vlaneseq
      %v671 = vshrl.u32 %v670, 7
      %v672 = vsub.s32 %v669, %v671
      %v673 = vrot.slane %v665, %v672
      %v675 = vunpack.c.l.s4 1983009808
      %v676 = vunpack.c.0.s8 %v675
      %v677 = vlaneseq
      %v678 = vshrl.u32 %v677, 7
      %v679 = vsub.s32 %v676, %v678
      %v680 = vrot.slane %v666, %v679
      %v681 = vcombine.low %v582, %v594
      %v682 = vcombine.high %v582, %v594
      %v684 = vunpack.c.l.s4 1983009808
      %v685 = vunpack.c.0.s8 %v684
      %v686 = vlaneseq
      %v687 = vshrl.u32 %v686, 7
      %v688 = vsub.s32 %v685, %v687
      %v689 = vrot.slane %v681, %v688
      %v691 = vunpack.c.l.s4 1983009808
      %v692 = vunpack.c.0.s8 %v691
      %v693 = vlaneseq
      %v694 = vshrl.u32 %v693, 7
      %v695 = vsub.s32 %v692, %v694
      %v696 = vrot.slane %v682, %v695
      %v697 = vcombine.low %v673, %v689
      %v698 = vcombine.high %v673, %v689
      %v700 = vunpack.c.l.s4 1934713408
      %v701 = vunpack.c.0.s8 %v700
      %v702 = vlaneseq
      %v703 = vshrl.u32 %v702, 7
      %v704 = vsub.s32 %v701, %v703
      %v705 = vrot.slane %v697, %v704
      %v707 = vunpack.c.l.s4 1934713408
      %v708 = vunpack.c.0.s8 %v707
      %v709 = vlaneseq
      %v710 = vshrl.u32 %v709, 7
      %v711 = vsub.s32 %v708, %v710
      %v712 = vrot.slane %v698, %v711
      %v713 = vcombine.low %v680, %v696
      %v714 = vcombine.high %v680, %v696
      %v716 = vunpack.c.l.s4 1934713408
      %v717 = vunpack.c.0.s8 %v716
      %v718 = vlaneseq
      %v719 = vshrl.u32 %v718, 7
      %v720 = vsub.s32 %v717, %v719
      %v721 = vrot.slane %v713, %v720
      %v723 = vunpack.c.l.s4 1934713408
      %v724 = vunpack.c.0.s8 %v723
      %v725 = vlaneseq
      %v726 = vshrl.u32 %v725, 7
      %v727 = vsub.s32 %v724, %v726
      %v728 = vrot.slane %v714, %v727
      %v729 = vcombine.high %v705, 0.0
      %v730 = vcombine.high %v712, 0.0
      %v731 = vcombine.high %v721, 0.0
      %v732 = vcombine.high %v728, 0.0
      %v733 = vcombine.low %v637, %v644
      %v735 = vunpack.c.l.s4 1983009808
      %v736 = vunpack.c.0.s8 %v735
      %v737 = vlaneseq
      %v738 = vshrl.u32 %v737, 7
      %v739 = vsub.s32 %v736, %v738
      %v740 = vrot.slane %v733, %v739
      %v741 = vcombine.low %v661, %v662
      %v743 = vunpack.c.l.s4 1983009808
      %v744 = vunpack.c.0.s8 %v743
      %v745 = vlaneseq
      %v746 = vshrl.u32 %v745, 7
      %v747 = vsub.s32 %v744, %v746
      %v748 = vrot.slane %v741, %v747
      %v749 = vcombine.low %v653, %v660
      %v751 = vunpack.c.l.s4 1983009808
      %v752 = vunpack.c.0.s8 %v751
      %v753 = vlaneseq
      %v754 = vshrl.u32 %v753, 7
      %v755 = vsub.s32 %v752, %v754
      %v756 = vrot.slane %v749, %v755
      %v757 = vcombine.low %v663, %v664
      %v759 = vunpack.c.l.s4 1983009808
      %v760 = vunpack.c.0.s8 %v759
      %v761 = vlaneseq
      %v762 = vshrl.u32 %v761, 7
      %v763 = vsub.s32 %v760, %v762
      %v764 = vrot.slane %v757, %v763
      %v765 = vcombine.low %v740, %v748
      %v766 = vcombine.high %v740, %v748
      %v768 = vunpack.c.l.s4 1934713408
      %v769 = vunpack.c.0.s8 %v768
      %v770 = vlaneseq
      %v771 = vshrl.u32 %v770, 7
      %v772 = vsub.s32 %v769, %v771
      %v773 = vrot.slane %v765, %v772
      %v775 = vunpack.c.l.s4 1934713408
      %v776 = vunpack.c.0.s8 %v775
      %v777 = vlaneseq
      %v778 = vshrl.u32 %v777, 7
      %v779 = vsub.s32 %v776, %v778
      %v780 = vrot.slane %v766, %v779
      %v781 = vcombine.low %v756, %v764
      %v782 = vcombine.high %v756, %v764
      %v784 = vunpack.c.l.s4 1934713408
      %v785 = vunpack.c.0.s8 %v784
      %v786 = vlaneseq
      %v787 = vshrl.u32 %v786, 7
      %v788 = vsub.s32 %v785, %v787
      %v789 = vrot.slane %v781, %v788
      %v791 = vunpack.c.l.s4 1934713408
      %v792 = vunpack.c.0.s8 %v791
      %v793 = vlaneseq
      %v794 = vshrl.u32 %v793, 7
      %v795 = vsub.s32 %v792, %v794
      %v796 = vrot.slane %v782, %v795
      %v797 = vcombine.low %v773, %v789
      %v798 = vcombine.high %v773, %v789
      %v799 = vcombine.low %v780, %v796
      %v800 = vcombine.high %v780, %v796
      %v801 = vcombine.low %v705, %v712
      %v803 = vunpack.c.l.s4 1983009808
      %v804 = vunpack.c.0.s8 %v803
      %v805 = vlaneseq
      %v806 = vshrl.u32 %v805, 7
      %v807 = vsub.s32 %v804, %v806
      %v808 = vrot.slane %v801, %v807
      %v809 = vcombine.low %v729, %v730
      %v811 = vunpack.c.l.s4 1983009808
      %v812 = vunpack.c.0.s8 %v811
      %v813 = vlaneseq
      %v814 = vshrl.u32 %v813, 7
      %v815 = vsub.s32 %v812, %v814
      %v816 = vrot.slane %v809, %v815
      %v817 = vcombine.low %v721, %v728
      %v819 = vunpack.c.l.s4 1983009808
      %v820 = vunpack.c.0.s8 %v819
      %v821 = vlaneseq
      %v822 = vshrl.u32 %v821, 7
      %v823 = vsub.s32 %v820, %v822
      %v824 = vrot.slane %v817, %v823
      %v825 = vcombine.low %v731, %v732
      %v827 = vunpack.c.l.s4 1983009808
      %v828 = vunpack.c.0.s8 %v827
      %v829 = vlaneseq
      %v830 = vshrl.u32 %v829, 7
      %v831 = vsub.s32 %v828, %v830
      %v832 = vrot.slane %v825, %v831
      %v833 = vcombine.low %v808, %v816
      %v834 = vcombine.high %v808, %v816
      %v836 = vunpack.c.l.s4 1934713408
      %v837 = vunpack.c.0.s8 %v836
      %v838 = vlaneseq
      %v839 = vshrl.u32 %v838, 7
      %v840 = vsub.s32 %v837, %v839
      %v841 = vrot.slane %v833, %v840
      %v843 = vunpack.c.l.s4 1934713408
      %v844 = vunpack.c.0.s8 %v843
      %v845 = vlaneseq
      %v846 = vshrl.u32 %v845, 7
      %v847 = vsub.s32 %v844, %v846
      %v848 = vrot.slane %v834, %v847
      %v849 = vcombine.low %v824, %v832
      %v850 = vcombine.high %v824, %v832
      %v852 = vunpack.c.l.s4 1934713408
      %v853 = vunpack.c.0.s8 %v852
      %v854 = vlaneseq
      %v855 = vshrl.u32 %v854, 7
      %v856 = vsub.s32 %v853, %v855
      %v857 = vrot.slane %v849, %v856
      %v859 = vunpack.c.l.s4 1934713408
      %v860 = vunpack.c.0.s8 %v859
      %v861 = vlaneseq
      %v862 = vshrl.u32 %v861, 7
      %v863 = vsub.s32 %v860, %v862
      %v864 = vrot.slane %v850, %v863
      %v865 = vcombine.low %v841, %v857
      %v866 = vcombine.high %v841, %v857
      %v867 = vcombine.low %v848, %v864
      %v868 = vcombine.high %v848, %v864
      %871 = vrot.lane.b32.xlu0 %v508, 96
      %v872 = vpop.permute.xlu0 %871
      %873 = vrot.lane.b32.xlu0 %v512, 96
      %v874 = vpop.permute.xlu0 %873
      %877 = vrot.lane.b32.xlu0 %v508, 64
      %v878 = vpop.permute.xlu0 %877
      %879 = vrot.lane.b32.xlu0 %v512, 64
      %v880 = vpop.permute.xlu0 %879
      %883 = vrot.lane.b32.xlu0 %v508, 32
      %v884 = vpop.permute.xlu0 %883
      %885 = vrot.lane.b32.xlu0 %v512, 32
      %v886 = vpop.permute.xlu0 %885
      %v889 = vcombine.low %v508, %v878
      %v890 = vcombine.high %v508, %v878
      %v892 = vunpack.c.l.s4 1983009808
      %v893 = vunpack.c.0.s8 %v892
      %v894 = vlaneseq
      %v895 = vshrl.u32 %v894, 7
      %v896 = vsub.s32 %v893, %v895
      %v897 = vrot.slane %v889, %v896
      %v899 = vunpack.c.l.s4 1983009808
      %v900 = vunpack.c.0.s8 %v899
      %v901 = vlaneseq
      %v902 = vshrl.u32 %v901, 7
      %v903 = vsub.s32 %v900, %v902
      %v904 = vrot.slane %v890, %v903
      %v905 = vcombine.low %v872, %v884
      %v906 = vcombine.high %v872, %v884
      %v908 = vunpack.c.l.s4 1983009808
      %v909 = vunpack.c.0.s8 %v908
      %v910 = vlaneseq
      %v911 = vshrl.u32 %v910, 7
      %v912 = vsub.s32 %v909, %v911
      %v913 = vrot.slane %v905, %v912
      %v915 = vunpack.c.l.s4 1983009808
      %v916 = vunpack.c.0.s8 %v915
      %v917 = vlaneseq
      %v918 = vshrl.u32 %v917, 7
      %v919 = vsub.s32 %v916, %v918
      %v920 = vrot.slane %v906, %v919
      %v921 = vcombine.low %v897, %v913
      %v922 = vcombine.high %v897, %v913
      %v924 = vunpack.c.l.s4 1934713408
      %v925 = vunpack.c.0.s8 %v924
      %v926 = vlaneseq
      %v927 = vshrl.u32 %v926, 7
      %v928 = vsub.s32 %v925, %v927
      %v929 = vrot.slane %v921, %v928
      %v931 = vunpack.c.l.s4 1934713408
      %v932 = vunpack.c.0.s8 %v931
      %v933 = vlaneseq
      %v934 = vshrl.u32 %v933, 7
      %v935 = vsub.s32 %v932, %v934
      %v936 = vrot.slane %v922, %v935
      %v937 = vcombine.low %v904, %v920
      %v938 = vcombine.high %v904, %v920
      %v940 = vunpack.c.l.s4 1934713408
      %v941 = vunpack.c.0.s8 %v940
      %v942 = vlaneseq
      %v943 = vshrl.u32 %v942, 7
      %v944 = vsub.s32 %v941, %v943
      %v945 = vrot.slane %v937, %v944
      %v947 = vunpack.c.l.s4 1934713408
      %v948 = vunpack.c.0.s8 %v947
      %v949 = vlaneseq
      %v950 = vshrl.u32 %v949, 7
      %v951 = vsub.s32 %v948, %v950
      %v952 = vrot.slane %v938, %v951
      %v953 = vcombine.high %v929, 0.0
      %v954 = vcombine.high %v936, 0.0
      %v955 = vcombine.high %v945, 0.0
      %v956 = vcombine.high %v952, 0.0
      %v957 = vcombine.low %v512, %v880
      %v958 = vcombine.high %v512, %v880
      %v960 = vunpack.c.l.s4 1983009808
      %v961 = vunpack.c.0.s8 %v960
      %v962 = vlaneseq
      %v963 = vshrl.u32 %v962, 7
      %v964 = vsub.s32 %v961, %v963
      %v965 = vrot.slane %v957, %v964
      %v967 = vunpack.c.l.s4 1983009808
      %v968 = vunpack.c.0.s8 %v967
      %v969 = vlaneseq
      %v970 = vshrl.u32 %v969, 7
      %v971 = vsub.s32 %v968, %v970
      %v972 = vrot.slane %v958, %v971
      %v973 = vcombine.low %v874, %v886
      %v974 = vcombine.high %v874, %v886
      %v976 = vunpack.c.l.s4 1983009808
      %v977 = vunpack.c.0.s8 %v976
      %v978 = vlaneseq
      %v979 = vshrl.u32 %v978, 7
      %v980 = vsub.s32 %v977, %v979
      %v981 = vrot.slane %v973, %v980
      %v983 = vunpack.c.l.s4 1983009808
      %v984 = vunpack.c.0.s8 %v983
      %v985 = vlaneseq
      %v986 = vshrl.u32 %v985, 7
      %v987 = vsub.s32 %v984, %v986
      %v988 = vrot.slane %v974, %v987
      %v989 = vcombine.low %v965, %v981
      %v990 = vcombine.high %v965, %v981
      %v992 = vunpack.c.l.s4 1934713408
      %v993 = vunpack.c.0.s8 %v992
      %v994 = vlaneseq
      %v995 = vshrl.u32 %v994, 7
      %v996 = vsub.s32 %v993, %v995
      %v997 = vrot.slane %v989, %v996
      %v999 = vunpack.c.l.s4 1934713408
      %v1000 = vunpack.c.0.s8 %v999
      %v1001 = vlaneseq
      %v1002 = vshrl.u32 %v1001, 7
      %v1003 = vsub.s32 %v1000, %v1002
      %v1004 = vrot.slane %v990, %v1003
      %v1005 = vcombine.low %v972, %v988
      %v1006 = vcombine.high %v972, %v988
      %v1008 = vunpack.c.l.s4 1934713408
      %v1009 = vunpack.c.0.s8 %v1008
      %v1010 = vlaneseq
      %v1011 = vshrl.u32 %v1010, 7
      %v1012 = vsub.s32 %v1009, %v1011
      %v1013 = vrot.slane %v1005, %v1012
      %v1015 = vunpack.c.l.s4 1934713408
      %v1016 = vunpack.c.0.s8 %v1015
      %v1017 = vlaneseq
      %v1018 = vshrl.u32 %v1017, 7
      %v1019 = vsub.s32 %v1016, %v1018
      %v1020 = vrot.slane %v1006, %v1019
      %v1021 = vcombine.high %v997, 0.0
      %v1022 = vcombine.high %v1004, 0.0
      %v1023 = vcombine.high %v1013, 0.0
      %v1024 = vcombine.high %v1020, 0.0
      %v1025 = vcombine.low %v929, %v936
      %v1027 = vunpack.c.l.s4 1983009808
      %v1028 = vunpack.c.0.s8 %v1027
      %v1029 = vlaneseq
      %v1030 = vshrl.u32 %v1029, 7
      %v1031 = vsub.s32 %v1028, %v1030
      %v1032 = vrot.slane %v1025, %v1031
      %v1033 = vcombine.low %v953, %v954
      %v1035 = vunpack.c.l.s4 1983009808
      %v1036 = vunpack.c.0.s8 %v1035
      %v1037 = vlaneseq
      %v1038 = vshrl.u32 %v1037, 7
      %v1039 = vsub.s32 %v1036, %v1038
      %v1040 = vrot.slane %v1033, %v1039
      %v1041 = vcombine.low %v945, %v952
      %v1043 = vunpack.c.l.s4 1983009808
      %v1044 = vunpack.c.0.s8 %v1043
      %v1045 = vlaneseq
      %v1046 = vshrl.u32 %v1045, 7
      %v1047 = vsub.s32 %v1044, %v1046
      %v1048 = vrot.slane %v1041, %v1047
      %v1049 = vcombine.low %v955, %v956
      %v1051 = vunpack.c.l.s4 1983009808
      %v1052 = vunpack.c.0.s8 %v1051
      %v1053 = vlaneseq
      %v1054 = vshrl.u32 %v1053, 7
      %v1055 = vsub.s32 %v1052, %v1054
      %v1056 = vrot.slane %v1049, %v1055
      %v1057 = vcombine.low %v1032, %v1040
      %v1058 = vcombine.high %v1032, %v1040
      %v1060 = vunpack.c.l.s4 1934713408
      %v1061 = vunpack.c.0.s8 %v1060
      %v1062 = vlaneseq
      %v1063 = vshrl.u32 %v1062, 7
      %v1064 = vsub.s32 %v1061, %v1063
      %v1065 = vrot.slane %v1057, %v1064
      %v1067 = vunpack.c.l.s4 1934713408
      %v1068 = vunpack.c.0.s8 %v1067
      %v1069 = vlaneseq
      %v1070 = vshrl.u32 %v1069, 7
      %v1071 = vsub.s32 %v1068, %v1070
      %v1072 = vrot.slane %v1058, %v1071
      %v1073 = vcombine.low %v1048, %v1056
      %v1074 = vcombine.high %v1048, %v1056
      %v1076 = vunpack.c.l.s4 1934713408
      %v1077 = vunpack.c.0.s8 %v1076
      %v1078 = vlaneseq
      %v1079 = vshrl.u32 %v1078, 7
      %v1080 = vsub.s32 %v1077, %v1079
      %v1081 = vrot.slane %v1073, %v1080
      %v1083 = vunpack.c.l.s4 1934713408
      %v1084 = vunpack.c.0.s8 %v1083
      %v1085 = vlaneseq
      %v1086 = vshrl.u32 %v1085, 7
      %v1087 = vsub.s32 %v1084, %v1086
      %v1088 = vrot.slane %v1074, %v1087
      %v1089 = vcombine.low %v1065, %v1081
      %v1090 = vcombine.high %v1065, %v1081
      %v1091 = vcombine.low %v1072, %v1088
      %v1092 = vcombine.high %v1072, %v1088
      %v1093 = vcombine.low %v997, %v1004
      %v1095 = vunpack.c.l.s4 1983009808
      %v1096 = vunpack.c.0.s8 %v1095
      %v1097 = vlaneseq
      %v1098 = vshrl.u32 %v1097, 7
      %v1099 = vsub.s32 %v1096, %v1098
      %v1100 = vrot.slane %v1093, %v1099
      %v1101 = vcombine.low %v1021, %v1022
      %v1103 = vunpack.c.l.s4 1983009808
      %v1104 = vunpack.c.0.s8 %v1103
      %v1105 = vlaneseq
      %v1106 = vshrl.u32 %v1105, 7
      %v1107 = vsub.s32 %v1104, %v1106
      %v1108 = vrot.slane %v1101, %v1107
      %v1109 = vcombine.low %v1013, %v1020
      %v1111 = vunpack.c.l.s4 1983009808
      %v1112 = vunpack.c.0.s8 %v1111
      %v1113 = vlaneseq
      %v1114 = vshrl.u32 %v1113, 7
      %v1115 = vsub.s32 %v1112, %v1114
      %v1116 = vrot.slane %v1109, %v1115
      %v1117 = vcombine.low %v1023, %v1024
      %v1119 = vunpack.c.l.s4 1983009808
      %v1120 = vunpack.c.0.s8 %v1119
      %v1121 = vlaneseq
      %v1122 = vshrl.u32 %v1121, 7
      %v1123 = vsub.s32 %v1120, %v1122
      %v1124 = vrot.slane %v1117, %v1123
      %v1125 = vcombine.low %v1100, %v1108
      %v1126 = vcombine.high %v1100, %v1108
      %v1128 = vunpack.c.l.s4 1934713408
      %v1129 = vunpack.c.0.s8 %v1128
      %v1130 = vlaneseq
      %v1131 = vshrl.u32 %v1130, 7
      %v1132 = vsub.s32 %v1129, %v1131
      %v1133 = vrot.slane %v1125, %v1132
      %v1135 = vunpack.c.l.s4 1934713408
      %v1136 = vunpack.c.0.s8 %v1135
      %v1137 = vlaneseq
      %v1138 = vshrl.u32 %v1137, 7
      %v1139 = vsub.s32 %v1136, %v1138
      %v1140 = vrot.slane %v1126, %v1139
      %v1141 = vcombine.low %v1116, %v1124
      %v1142 = vcombine.high %v1116, %v1124
      %v1144 = vunpack.c.l.s4 1934713408
      %v1145 = vunpack.c.0.s8 %v1144
      %v1146 = vlaneseq
      %v1147 = vshrl.u32 %v1146, 7
      %v1148 = vsub.s32 %v1145, %v1147
      %v1149 = vrot.slane %v1141, %v1148
      %v1151 = vunpack.c.l.s4 1934713408
      %v1152 = vunpack.c.0.s8 %v1151
      %v1153 = vlaneseq
      %v1154 = vshrl.u32 %v1153, 7
      %v1155 = vsub.s32 %v1152, %v1154
      %v1156 = vrot.slane %v1142, %v1155
      %v1157 = vcombine.low %v1133, %v1149
      %v1158 = vcombine.high %v1133, %v1149
      %v1159 = vcombine.low %v1140, %v1156
      %v1160 = vcombine.high %v1140, %v1156
      %1163 = vrot.lane.b32.xlu0 %v559, 96
      %v1164 = vpop.permute.xlu0 %1163
      %1165 = vrot.lane.b32.xlu0 %v562, 96
      %v1166 = vpop.permute.xlu0 %1165
      %1169 = vrot.lane.b32.xlu0 %v559, 64
      %v1170 = vpop.permute.xlu0 %1169
      %1171 = vrot.lane.b32.xlu0 %v562, 64
      %v1172 = vpop.permute.xlu0 %1171
      %1175 = vrot.lane.b32.xlu0 %v559, 32
      %v1176 = vpop.permute.xlu0 %1175
      %1177 = vrot.lane.b32.xlu0 %v562, 32
      %v1178 = vpop.permute.xlu0 %1177
      %v1181 = vcombine.low %v559, %v1170
      %v1182 = vcombine.high %v559, %v1170
      %v1184 = vunpack.c.l.s4 1983009808
      %v1185 = vunpack.c.0.s8 %v1184
      %v1186 = vlaneseq
      %v1187 = vshrl.u32 %v1186, 7
      %v1188 = vsub.s32 %v1185, %v1187
      %v1189 = vrot.slane %v1181, %v1188
      %v1191 = vunpack.c.l.s4 1983009808
      %v1192 = vunpack.c.0.s8 %v1191
      %v1193 = vlaneseq
      %v1194 = vshrl.u32 %v1193, 7
      %v1195 = vsub.s32 %v1192, %v1194
      %v1196 = vrot.slane %v1182, %v1195
      %v1197 = vcombine.low %v1164, %v1176
      %v1198 = vcombine.high %v1164, %v1176
      %v1200 = vunpack.c.l.s4 1983009808
      %v1201 = vunpack.c.0.s8 %v1200
      %v1202 = vlaneseq
      %v1203 = vshrl.u32 %v1202, 7
      %v1204 = vsub.s32 %v1201, %v1203
      %v1205 = vrot.slane %v1197, %v1204
      %v1207 = vunpack.c.l.s4 1983009808
      %v1208 = vunpack.c.0.s8 %v1207
      %v1209 = vlaneseq
      %v1210 = vshrl.u32 %v1209, 7
      %v1211 = vsub.s32 %v1208, %v1210
      %v1212 = vrot.slane %v1198, %v1211
      %v1213 = vcombine.low %v1189, %v1205
      %v1214 = vcombine.high %v1189, %v1205
      %v1216 = vunpack.c.l.s4 1934713408
      %v1217 = vunpack.c.0.s8 %v1216
      %v1218 = vlaneseq
      %v1219 = vshrl.u32 %v1218, 7
      %v1220 = vsub.s32 %v1217, %v1219
      %v1221 = vrot.slane %v1213, %v1220
      %v1223 = vunpack.c.l.s4 1934713408
      %v1224 = vunpack.c.0.s8 %v1223
      %v1225 = vlaneseq
      %v1226 = vshrl.u32 %v1225, 7
      %v1227 = vsub.s32 %v1224, %v1226
      %v1228 = vrot.slane %v1214, %v1227
      %v1229 = vcombine.low %v1196, %v1212
      %v1230 = vcombine.high %v1196, %v1212
      %v1232 = vunpack.c.l.s4 1934713408
      %v1233 = vunpack.c.0.s8 %v1232
      %v1234 = vlaneseq
      %v1235 = vshrl.u32 %v1234, 7
      %v1236 = vsub.s32 %v1233, %v1235
      %v1237 = vrot.slane %v1229, %v1236
      %v1239 = vunpack.c.l.s4 1934713408
      %v1240 = vunpack.c.0.s8 %v1239
      %v1241 = vlaneseq
      %v1242 = vshrl.u32 %v1241, 7
      %v1243 = vsub.s32 %v1240, %v1242
      %v1244 = vrot.slane %v1230, %v1243
      %v1245 = vcombine.high %v1221, 0.0
      %v1246 = vcombine.high %v1228, 0.0
      %v1247 = vcombine.high %v1237, 0.0
      %v1248 = vcombine.high %v1244, 0.0
      %v1249 = vcombine.low %v562, %v1172
      %v1250 = vcombine.high %v562, %v1172
      %v1252 = vunpack.c.l.s4 1983009808
      %v1253 = vunpack.c.0.s8 %v1252
      %v1254 = vlaneseq
      %v1255 = vshrl.u32 %v1254, 7
      %v1256 = vsub.s32 %v1253, %v1255
      %v1257 = vrot.slane %v1249, %v1256
      %v1259 = vunpack.c.l.s4 1983009808
      %v1260 = vunpack.c.0.s8 %v1259
      %v1261 = vlaneseq
      %v1262 = vshrl.u32 %v1261, 7
      %v1263 = vsub.s32 %v1260, %v1262
      %v1264 = vrot.slane %v1250, %v1263
      %v1265 = vcombine.low %v1166, %v1178
      %v1266 = vcombine.high %v1166, %v1178
      %v1268 = vunpack.c.l.s4 1983009808
      %v1269 = vunpack.c.0.s8 %v1268
      %v1270 = vlaneseq
      %v1271 = vshrl.u32 %v1270, 7
      %v1272 = vsub.s32 %v1269, %v1271
      %v1273 = vrot.slane %v1265, %v1272
      %v1275 = vunpack.c.l.s4 1983009808
      %v1276 = vunpack.c.0.s8 %v1275
      %v1277 = vlaneseq
      %v1278 = vshrl.u32 %v1277, 7
      %v1279 = vsub.s32 %v1276, %v1278
      %v1280 = vrot.slane %v1266, %v1279
      %v1281 = vcombine.low %v1257, %v1273
      %v1282 = vcombine.high %v1257, %v1273
      %v1284 = vunpack.c.l.s4 1934713408
      %v1285 = vunpack.c.0.s8 %v1284
      %v1286 = vlaneseq
      %v1287 = vshrl.u32 %v1286, 7
      %v1288 = vsub.s32 %v1285, %v1287
      %v1289 = vrot.slane %v1281, %v1288
      %v1291 = vunpack.c.l.s4 1934713408
      %v1292 = vunpack.c.0.s8 %v1291
      %v1293 = vlaneseq
      %v1294 = vshrl.u32 %v1293, 7
      %v1295 = vsub.s32 %v1292, %v1294
      %v1296 = vrot.slane %v1282, %v1295
      %v1297 = vcombine.low %v1264, %v1280
      %v1298 = vcombine.high %v1264, %v1280
      %v1300 = vunpack.c.l.s4 1934713408
      %v1301 = vunpack.c.0.s8 %v1300
      %v1302 = vlaneseq
      %v1303 = vshrl.u32 %v1302, 7
      %v1304 = vsub.s32 %v1301, %v1303
      %v1305 = vrot.slane %v1297, %v1304
      %v1307 = vunpack.c.l.s4 1934713408
      %v1308 = vunpack.c.0.s8 %v1307
      %v1309 = vlaneseq
      %v1310 = vshrl.u32 %v1309, 7
      %v1311 = vsub.s32 %v1308, %v1310
      %v1312 = vrot.slane %v1298, %v1311
      %v1313 = vcombine.high %v1289, 0.0
      %v1314 = vcombine.high %v1296, 0.0
      %v1315 = vcombine.high %v1305, 0.0
      %v1316 = vcombine.high %v1312, 0.0
      %v1317 = vcombine.low %v1221, %v1228
      %v1319 = vunpack.c.l.s4 1983009808
      %v1320 = vunpack.c.0.s8 %v1319
      %v1321 = vlaneseq
      %v1322 = vshrl.u32 %v1321, 7
      %v1323 = vsub.s32 %v1320, %v1322
      %v1324 = vrot.slane %v1317, %v1323
      %v1325 = vcombine.low %v1245, %v1246
      %v1327 = vunpack.c.l.s4 1983009808
      %v1328 = vunpack.c.0.s8 %v1327
      %v1329 = vlaneseq
      %v1330 = vshrl.u32 %v1329, 7
      %v1331 = vsub.s32 %v1328, %v1330
      %v1332 = vrot.slane %v1325, %v1331
      %v1333 = vcombine.low %v1237, %v1244
      %v1335 = vunpack.c.l.s4 1983009808
      %v1336 = vunpack.c.0.s8 %v1335
      %v1337 = vlaneseq
      %v1338 = vshrl.u32 %v1337, 7
      %v1339 = vsub.s32 %v1336, %v1338
      %v1340 = vrot.slane %v1333, %v1339
      %v1341 = vcombine.low %v1247, %v1248
      %v1343 = vunpack.c.l.s4 1983009808
      %v1344 = vunpack.c.0.s8 %v1343
      %v1345 = vlaneseq
      %v1346 = vshrl.u32 %v1345, 7
      %v1347 = vsub.s32 %v1344, %v1346
      %v1348 = vrot.slane %v1341, %v1347
      %v1349 = vcombine.low %v1324, %v1332
      %v1350 = vcombine.high %v1324, %v1332
      %v1352 = vunpack.c.l.s4 1934713408
      %v1353 = vunpack.c.0.s8 %v1352
      %v1354 = vlaneseq
      %v1355 = vshrl.u32 %v1354, 7
      %v1356 = vsub.s32 %v1353, %v1355
      %v1357 = vrot.slane %v1349, %v1356
      %v1359 = vunpack.c.l.s4 1934713408
      %v1360 = vunpack.c.0.s8 %v1359
      %v1361 = vlaneseq
      %v1362 = vshrl.u32 %v1361, 7
      %v1363 = vsub.s32 %v1360, %v1362
      %v1364 = vrot.slane %v1350, %v1363
      %v1365 = vcombine.low %v1340, %v1348
      %v1366 = vcombine.high %v1340, %v1348
      %v1368 = vunpack.c.l.s4 1934713408
      %v1369 = vunpack.c.0.s8 %v1368
      %v1370 = vlaneseq
      %v1371 = vshrl.u32 %v1370, 7
      %v1372 = vsub.s32 %v1369, %v1371
      %v1373 = vrot.slane %v1365, %v1372
      %v1375 = vunpack.c.l.s4 1934713408
      %v1376 = vunpack.c.0.s8 %v1375
      %v1377 = vlaneseq
      %v1378 = vshrl.u32 %v1377, 7
      %v1379 = vsub.s32 %v1376, %v1378
      %v1380 = vrot.slane %v1366, %v1379
      %v1381 = vcombine.low %v1357, %v1373
      %v1382 = vcombine.high %v1357, %v1373
      %v1383 = vcombine.low %v1364, %v1380
      %v1384 = vcombine.high %v1364, %v1380
      %v1385 = vcombine.low %v1289, %v1296
      %v1387 = vunpack.c.l.s4 1983009808
      %v1388 = vunpack.c.0.s8 %v1387
      %v1389 = vlaneseq
      %v1390 = vshrl.u32 %v1389, 7
      %v1391 = vsub.s32 %v1388, %v1390
      %v1392 = vrot.slane %v1385, %v1391
      %v1393 = vcombine.low %v1313, %v1314
      %v1395 = vunpack.c.l.s4 1983009808
      %v1396 = vunpack.c.0.s8 %v1395
      %v1397 = vlaneseq
      %v1398 = vshrl.u32 %v1397, 7
      %v1399 = vsub.s32 %v1396, %v1398
      %v1400 = vrot.slane %v1393, %v1399
      %v1401 = vcombine.low %v1305, %v1312
      %v1403 = vunpack.c.l.s4 1983009808
      %v1404 = vunpack.c.0.s8 %v1403
      %v1405 = vlaneseq
      %v1406 = vshrl.u32 %v1405, 7
      %v1407 = vsub.s32 %v1404, %v1406
      %v1408 = vrot.slane %v1401, %v1407
      %v1409 = vcombine.low %v1315, %v1316
      %v1411 = vunpack.c.l.s4 1983009808
      %v1412 = vunpack.c.0.s8 %v1411
      %v1413 = vlaneseq
      %v1414 = vshrl.u32 %v1413, 7
      %v1415 = vsub.s32 %v1412, %v1414
      %v1416 = vrot.slane %v1409, %v1415
      %v1417 = vcombine.low %v1392, %v1400
      %v1418 = vcombine.high %v1392, %v1400
      %v1420 = vunpack.c.l.s4 1934713408
      %v1421 = vunpack.c.0.s8 %v1420
      %v1422 = vlaneseq
      %v1423 = vshrl.u32 %v1422, 7
      %v1424 = vsub.s32 %v1421, %v1423
      %v1425 = vrot.slane %v1417, %v1424
      %v1427 = vunpack.c.l.s4 1934713408
      %v1428 = vunpack.c.0.s8 %v1427
      %v1429 = vlaneseq
      %v1430 = vshrl.u32 %v1429, 7
      %v1431 = vsub.s32 %v1428, %v1430
      %v1432 = vrot.slane %v1418, %v1431
      %v1433 = vcombine.low %v1408, %v1416
      %v1434 = vcombine.high %v1408, %v1416
      %v1436 = vunpack.c.l.s4 1934713408
      %v1437 = vunpack.c.0.s8 %v1436
      %v1438 = vlaneseq
      %v1439 = vshrl.u32 %v1438, 7
      %v1440 = vsub.s32 %v1437, %v1439
      %v1441 = vrot.slane %v1433, %v1440
      %v1443 = vunpack.c.l.s4 1934713408
      %v1444 = vunpack.c.0.s8 %v1443
      %v1445 = vlaneseq
      %v1446 = vshrl.u32 %v1445, 7
      %v1447 = vsub.s32 %v1444, %v1446
      %v1448 = vrot.slane %v1434, %v1447
      %v1449 = vcombine.low %v1425, %v1441
      %v1450 = vcombine.high %v1425, %v1441
      %v1451 = vcombine.low %v1432, %v1448
      %v1452 = vcombine.high %v1432, %v1448
      %v1453 = vpack.c.bf16 %v865, %v797
      %v1454 = vpack.c.bf16 %v866, %v798
      %v1455 = vpack.c.bf16 %v867, %v799
      %v1456 = vpack.c.bf16 %v868, %v800
      %v1457 = vpack.c.bf16 %v1157, %v1089
      %v1458 = vpack.c.bf16 %v1158, %v1090
      %v1459 = vpack.c.bf16 %v1159, %v1091
      %v1460 = vpack.c.bf16 %v1160, %v1092
      %vm1461 = vcmask 261120
      %v1463 = vsel %vm1461, %v1453, 0
      %v1466 = vsel %vm1461, %v1457, 0
      %1468 = vmatprep.subr.bf16.mxu0 0
      %1469 = vmatpush1.bf16.xpose.msra.mxu0 %v1466
      %1470 = vmatprep.subr.bf16.mxu0 0
      %1471 = vmatpush1.bf16.xpose.msra.mxu0 0
      %1472 = vmatprep.subr.bf16.mxu0 0
      %1473 = vmatpush1.bf16.xpose.msra.mxu0 0
      %1474 = vmatprep.subr.bf16.mxu0 0
      %1475 = vmatpush1.bf16.xpose.msra.mxu0 0
      %1476 = vmatprep.subr.bf16.mxu0 0
      %1477 = vmatpush1.bf16.xpose.msra.mxu0 0
      %1478 = vmatprep.subr.bf16.mxu0 0
      %1479 = vmatpush1.bf16.xpose.msra.mxu0 0
      %1480 = vmatprep.subr.bf16.mxu0 0
      %1481 = vmatpush1.bf16.xpose.msra.mxu0 0
      %1482 = vmatprep.subr.bf16.mxu0 0
      %1483 = vmatpush1.bf16.xpose.msra.mxu0 0
      %1484 = vmatprep.subr.bf16.mxu0 0
      %1485 = vmatpush1.bf16.xpose.msra.mxu0 0
      %1486 = vmatprep.subr.bf16.mxu0 0
      %1487 = vmatpush1.bf16.xpose.msra.mxu0 0
      %1488 = vmatprep.subr.bf16.mxu0 0
      %1489 = vmatpush1.bf16.xpose.msra.mxu0 0
      %1490 = vmatprep.subr.bf16.mxu0 0
      %1491 = vmatpush1.bf16.xpose.msra.mxu0 0
      %1492 = vmatprep.subr.bf16.mxu0 0
      %1493 = vmatpush1.bf16.xpose.msra.mxu0 0
      %1494 = vmatprep.subr.bf16.mxu0 0
      %1495 = vmatpush1.bf16.xpose.msra.mxu0 0
      %1496 = vmatprep.subr.bf16.mxu0 0
      %1497 = vmatpush1.bf16.xpose.msra.mxu0 0
      %1498 = vmatprep.subr.bf16.mxu0 0
      %1499 = vmatpush1.bf16.xpose.msra.mxu0 0
      %1500 = vmatprep.mubr.bf16.mxu0 0
      %1501 = vmatmul.mubr.bf16.gmra.mrb[0].mxu0 %v1463
      %v1502 = vpop.f32.mrb[0].mxu0
      %v1503 = vadd.f32 0.0, %v1502
      %v1504 = vpop.f32.mrb[0].mxu0
      %v1505 = vpop.f32.mrb[0].mxu0
      %v1506 = vadd.f32 0.0, %v1505
      %v1507 = vpop.f32.mrb[0].mxu0
      %1508 = vdwg.mxu0
      %v1510 = vsel %vm1461, %v1454, 0
      %v1513 = vsel %vm1461, %v1458, 0
      %1515 = vmatprep.subr.bf16.mxu0 0
      %1516 = vmatpush1.bf16.xpose.msra.mxu0 %v1513
      %1517 = vmatprep.subr.bf16.mxu0 0
      %1518 = vmatpush1.bf16.xpose.msra.mxu0 0
      %1519 = vmatprep.subr.bf16.mxu0 0
      %1520 = vmatpush1.bf16.xpose.msra.mxu0 0
      %1521 = vmatprep.subr.bf16.mxu0 0
      %1522 = vmatpush1.bf16.xpose.msra.mxu0 0
      %1523 = vmatprep.subr.bf16.mxu0 0
      %1524 = vmatpush1.bf16.xpose.msra.mxu0 0
      %1525 = vmatprep.subr.bf16.mxu0 0
      %1526 = vmatpush1.bf16.xpose.msra.mxu0 0
      %1527 = vmatprep.subr.bf16.mxu0 0
      %1528 = vmatpush1.bf16.xpose.msra.mxu0 0
      %1529 = vmatprep.subr.bf16.mxu0 0
      %1530 = vmatpush1.bf16.xpose.msra.mxu0 0
      %1531 = vmatprep.subr.bf16.mxu0 0
      %1532 = vmatpush1.bf16.xpose.msra.mxu0 0
      %1533 = vmatprep.subr.bf16.mxu0 0
      %1534 = vmatpush1.bf16.xpose.msra.mxu0 0
      %1535 = vmatprep.subr.bf16.mxu0 0
      %1536 = vmatpush1.bf16.xpose.msra.mxu0 0
      %1537 = vmatprep.subr.bf16.mxu0 0
      %1538 = vmatpush1.bf16.xpose.msra.mxu0 0
      %1539 = vmatprep.subr.bf16.mxu0 0
      %1540 = vmatpush1.bf16.xpose.msra.mxu0 0
      %1541 = vmatprep.subr.bf16.mxu0 0
      %1542 = vmatpush1.bf16.xpose.msra.mxu0 0
      %1543 = vmatprep.subr.bf16.mxu0 0
      %1544 = vmatpush1.bf16.xpose.msra.mxu0 0
      %1545 = vmatprep.subr.bf16.mxu0 0
      %1546 = vmatpush1.bf16.xpose.msra.mxu0 0
      %1547 = vmatprep.mubr.bf16.mxu0 0
      %1548 = vmatmul.mubr.bf16.gmra.mrb[0].mxu0 %v1510
      %v1549 = vpop.f32.mrb[0].mxu0
      %v1550 = vadd.f32 0.0, %v1549
      %v1551 = vpop.f32.mrb[0].mxu0
      %v1552 = vpop.f32.mrb[0].mxu0
      %v1553 = vadd.f32 0.0, %v1552
      %v1554 = vpop.f32.mrb[0].mxu0
      %1555 = vdwg.mxu0
      %v1557 = vsel %vm1461, %v1455, 0
      %v1560 = vsel %vm1461, %v1459, 0
      %1562 = vmatprep.subr.bf16.mxu0 0
      %1563 = vmatpush1.bf16.xpose.msra.mxu0 %v1560
      %1564 = vmatprep.subr.bf16.mxu0 0
      %1565 = vmatpush1.bf16.xpose.msra.mxu0 0
      %1566 = vmatprep.subr.bf16.mxu0 0
      %1567 = vmatpush1.bf16.xpose.msra.mxu0 0
      %1568 = vmatprep.subr.bf16.mxu0 0
      %1569 = vmatpush1.bf16.xpose.msra.mxu0 0
      %1570 = vmatprep.subr.bf16.mxu0 0
      %1571 = vmatpush1.bf16.xpose.msra.mxu0 0
      %1572 = vmatprep.subr.bf16.mxu0 0
      %1573 = vmatpush1.bf16.xpose.msra.mxu0 0
      %1574 = vmatprep.subr.bf16.mxu0 0
      %1575 = vmatpush1.bf16.xpose.msra.mxu0 0
      %1576 = vmatprep.subr.bf16.mxu0 0
      %1577 = vmatpush1.bf16.xpose.msra.mxu0 0
      %1578 = vmatprep.subr.bf16.mxu0 0
      %1579 = vmatpush1.bf16.xpose.msra.mxu0 0
      %1580 = vmatprep.subr.bf16.mxu0 0
      %1581 = vmatpush1.bf16.xpose.msra.mxu0 0
      %1582 = vmatprep.subr.bf16.mxu0 0
      %1583 = vmatpush1.bf16.xpose.msra.mxu0 0
      %1584 = vmatprep.subr.bf16.mxu0 0
      %1585 = vmatpush1.bf16.xpose.msra.mxu0 0
      %1586 = vmatprep.subr.bf16.mxu0 0
      %1587 = vmatpush1.bf16.xpose.msra.mxu0 0
      %1588 = vmatprep.subr.bf16.mxu0 0
      %1589 = vmatpush1.bf16.xpose.msra.mxu0 0
      %1590 = vmatprep.subr.bf16.mxu0 0
      %1591 = vmatpush1.bf16.xpose.msra.mxu0 0
      %1592 = vmatprep.subr.bf16.mxu0 0
      %1593 = vmatpush1.bf16.xpose.msra.mxu0 0
      %1594 = vmatprep.mubr.bf16.mxu0 0
      %1595 = vmatmul.mubr.bf16.gmra.mrb[0].mxu0 %v1557
      %v1596 = vpop.f32.mrb[0].mxu0
      %v1597 = vadd.f32 0.0, %v1596
      %v1598 = vpop.f32.mrb[0].mxu0
      %v1599 = vpop.f32.mrb[0].mxu0
      %v1600 = vadd.f32 0.0, %v1599
      %v1601 = vpop.f32.mrb[0].mxu0
      %1602 = vdwg.mxu0
      %v1604 = vsel %vm1461, %v1456, 0
      %v1607 = vsel %vm1461, %v1460, 0
      %1609 = vmatprep.subr.bf16.mxu0 0
      %1610 = vmatpush1.bf16.xpose.msra.mxu0 %v1607
      %1611 = vmatprep.subr.bf16.mxu0 0
      %1612 = vmatpush1.bf16.xpose.msra.mxu0 0
      %1613 = vmatprep.subr.bf16.mxu0 0
      %1614 = vmatpush1.bf16.xpose.msra.mxu0 0
      %1615 = vmatprep.subr.bf16.mxu0 0
      %1616 = vmatpush1.bf16.xpose.msra.mxu0 0
      %1617 = vmatprep.subr.bf16.mxu0 0
      %1618 = vmatpush1.bf16.xpose.msra.mxu0 0
      %1619 = vmatprep.subr.bf16.mxu0 0
      %1620 = vmatpush1.bf16.xpose.msra.mxu0 0
      %1621 = vmatprep.subr.bf16.mxu0 0
      %1622 = vmatpush1.bf16.xpose.msra.mxu0 0
      %1623 = vmatprep.subr.bf16.mxu0 0
      %1624 = vmatpush1.bf16.xpose.msra.mxu0 0
      %1625 = vmatprep.subr.bf16.mxu0 0
      %1626 = vmatpush1.bf16.xpose.msra.mxu0 0
      %1627 = vmatprep.subr.bf16.mxu0 0
      %1628 = vmatpush1.bf16.xpose.msra.mxu0 0
      %1629 = vmatprep.subr.bf16.mxu0 0
      %1630 = vmatpush1.bf16.xpose.msra.mxu0 0
      %1631 = vmatprep.subr.bf16.mxu0 0
      %1632 = vmatpush1.bf16.xpose.msra.mxu0 0
      %1633 = vmatprep.subr.bf16.mxu0 0
      %1634 = vmatpush1.bf16.xpose.msra.mxu0 0
      %1635 = vmatprep.subr.bf16.mxu0 0
      %1636 = vmatpush1.bf16.xpose.msra.mxu0 0
      %1637 = vmatprep.subr.bf16.mxu0 0
      %1638 = vmatpush1.bf16.xpose.msra.mxu0 0
      %1639 = vmatprep.subr.bf16.mxu0 0
      %1640 = vmatpush1.bf16.xpose.msra.mxu0 0
      %1641 = vmatprep.mubr.bf16.mxu0 0
      %1642 = vmatmul.mubr.bf16.gmra.mrb[0].mxu0 %v1604
      %v1643 = vpop.f32.mrb[0].mxu0
      %v1644 = vadd.f32 0.0, %v1643
      %v1645 = vpop.f32.mrb[0].mxu0
      %v1646 = vpop.f32.mrb[0].mxu0
      %v1647 = vadd.f32 0.0, %v1646
      %v1648 = vpop.f32.mrb[0].mxu0
      %1649 = vdwg.mxu0
      %vm1650 = vcmask 130048
      %v1651 = vsel %vm1650, %v1503, -inf
      %1652 = vmax.xlane.f32.xlu0 %v1651
      %v1653 = vpop.xlane.xlu0 %1652
      %v1654 = vsel %vm1650, %v1506, -inf
      %1655 = vmax.xlane.f32.xlu0 %v1654
      %v1656 = vpop.xlane.xlu0 %1655
      %v1657 = vsel %vm1650, %v1550, -inf
      %1658 = vmax.xlane.f32.xlu0 %v1657
      %v1659 = vpop.xlane.xlu0 %1658
      %v1660 = vsel %vm1650, %v1553, -inf
      %1661 = vmax.xlane.f32.xlu0 %v1660
      %v1662 = vpop.xlane.xlu0 %1661
      %v1663 = vsel %vm1650, %v1597, -inf
      %1664 = vmax.xlane.f32.xlu0 %v1663
      %v1665 = vpop.xlane.xlu0 %1664
      %v1666 = vsel %vm1650, %v1600, -inf
      %1667 = vmax.xlane.f32.xlu0 %v1666
      %v1668 = vpop.xlane.xlu0 %1667
      %v1669 = vsel %vm1650, %v1644, -inf
      %1670 = vmax.xlane.f32.xlu0 %v1669
      %v1671 = vpop.xlane.xlu0 %1670
      %v1672 = vsel %vm1650, %v1647, -inf
      %1673 = vmax.xlane.f32.xlu0 %v1672
      %v1674 = vpop.xlane.xlu0 %1673
      %v1675 = vsub.f32 %v1503, %v1653
      %v1676 = vsub.f32 %v1506, %v1656
      %v1677 = vsub.f32 %v1550, %v1659
      %v1678 = vsub.f32 %v1553, %v1662
      %v1679 = vsub.f32 %v1597, %v1665
      %v1680 = vsub.f32 %v1600, %v1668
      %v1681 = vsub.f32 %v1644, %v1671
      %v1682 = vsub.f32 %v1647, %v1674
      %v1683 = vmul.f32 %v1675, 1.442695
      %v1684 = vpow.pop %v1683
      %v1685 = vmul.f32 %v1676, 1.442695
      %v1686 = vpow.pop %v1685
      %v1687 = vmul.f32 %v1677, 1.442695
      %v1688 = vpow.pop %v1687
      %v1689 = vmul.f32 %v1678, 1.442695
      %v1690 = vpow.pop %v1689
      %v1691 = vmul.f32 %v1679, 1.442695
      %v1692 = vpow.pop %v1691
      %v1693 = vmul.f32 %v1680, 1.442695
      %v1694 = vpow.pop %v1693
      %v1695 = vmul.f32 %v1681, 1.442695
      %v1696 = vpow.pop %v1695
      %v1697 = vmul.f32 %v1682, 1.442695
      %v1698 = vpow.pop %v1697
      %v1699 = vsel %vm1650, %v1684, 0.0
      %1700 = vadd.xlane.f32.xlu0 %v1699
      %v1701 = vpop.xlane.xlu0 %1700
      %v1702 = vsel %vm1650, %v1686, 0.0
      %1703 = vadd.xlane.f32.xlu0 %v1702
      %v1704 = vpop.xlane.xlu0 %1703
      %v1705 = vsel %vm1650, %v1688, 0.0
      %1706 = vadd.xlane.f32.xlu0 %v1705
      %v1707 = vpop.xlane.xlu0 %1706
      %v1708 = vsel %vm1650, %v1690, 0.0
      %1709 = vadd.xlane.f32.xlu0 %v1708
      %v1710 = vpop.xlane.xlu0 %1709
      %v1711 = vsel %vm1650, %v1692, 0.0
      %1712 = vadd.xlane.f32.xlu0 %v1711
      %v1713 = vpop.xlane.xlu0 %1712
      %v1714 = vsel %vm1650, %v1694, 0.0
      %1715 = vadd.xlane.f32.xlu0 %v1714
      %v1716 = vpop.xlane.xlu0 %1715
      %v1717 = vsel %vm1650, %v1696, 0.0
      %1718 = vadd.xlane.f32.xlu0 %v1717
      %v1719 = vpop.xlane.xlu0 %1718
      %v1720 = vsel %vm1650, %v1698, 0.0
      %1721 = vadd.xlane.f32.xlu0 %v1720
      %v1722 = vpop.xlane.xlu0 %1721
      %v1723 = vpack.c.bf16 %v1686, %v1684
      %v1724 = vpack.c.bf16 %v1690, %v1688
      %v1725 = vpack.c.bf16 %v1694, %v1692
      %v1726 = vpack.c.bf16 %v1698, %v1696
      %v1727 = vpack.c.bf16 %v1449, %v1381
      %v1728 = vpack.c.bf16 %v1450, %v1382
      %v1729 = vpack.c.bf16 %v1451, %v1383
      %v1730 = vpack.c.bf16 %v1452, %v1384
      %v1732 = vsel %vm1650, %v1723, 0
      %1734 = vmatprep.subr.bf16.mxu0 0
      %1735 = vmatpush1.bf16.msra.mxu0 %v1727
      %1736 = vmatprep.subr.bf16.mxu0 0
      %1737 = vmatpush1.bf16.msra.mxu0 0
      %1738 = vmatprep.subr.bf16.mxu0 0
      %1739 = vmatpush1.bf16.msra.mxu0 0
      %1740 = vmatprep.subr.bf16.mxu0 0
      %1741 = vmatpush1.bf16.msra.mxu0 0
      %1742 = vmatprep.subr.bf16.mxu0 0
      %1743 = vmatpush1.bf16.msra.mxu0 0
      %1744 = vmatprep.subr.bf16.mxu0 0
      %1745 = vmatpush1.bf16.msra.mxu0 0
      %1746 = vmatprep.subr.bf16.mxu0 0
      %1747 = vmatpush1.bf16.msra.mxu0 0
      %1748 = vmatprep.subr.bf16.mxu0 0
      %1749 = vmatpush1.bf16.msra.mxu0 0
      %1750 = vmatprep.subr.bf16.mxu0 0
      %1751 = vmatpush1.bf16.msra.mxu0 0
      %1752 = vmatprep.subr.bf16.mxu0 0
      %1753 = vmatpush1.bf16.msra.mxu0 0
      %1754 = vmatprep.subr.bf16.mxu0 0
      %1755 = vmatpush1.bf16.msra.mxu0 0
      %1756 = vmatprep.subr.bf16.mxu0 0
      %1757 = vmatpush1.bf16.msra.mxu0 0
      %1758 = vmatprep.subr.bf16.mxu0 0
      %1759 = vmatpush1.bf16.msra.mxu0 0
      %1760 = vmatprep.subr.bf16.mxu0 0
      %1761 = vmatpush1.bf16.msra.mxu0 0
      %1762 = vmatprep.subr.bf16.mxu0 0
      %1763 = vmatpush1.bf16.msra.mxu0 0
      %1764 = vmatprep.subr.bf16.mxu0 0
      %1765 = vmatpush1.bf16.msra.mxu0 0
      %1766 = vmatprep.mubr.bf16.mxu0 0
      %1767 = vmatmul.mubr.bf16.gmra.mrb[0].mxu0 %v1732
      %v1768 = vpop.f32.mrb[0].mxu0
      %v1769 = vadd.f32 0.0, %v1768
      %v1770 = vpop.f32.mrb[0].mxu0
      %v1771 = vpop.f32.mrb[0].mxu0
      %v1772 = vadd.f32 0.0, %v1771
      %v1773 = vpop.f32.mrb[0].mxu0
      %1774 = vdwg.mxu0
      %v1776 = vsel %vm1650, %v1724, 0
      %1778 = vmatprep.subr.bf16.mxu0 0
      %1779 = vmatpush1.bf16.msra.mxu0 %v1728
      %1780 = vmatprep.subr.bf16.mxu0 0
      %1781 = vmatpush1.bf16.msra.mxu0 0
      %1782 = vmatprep.subr.bf16.mxu0 0
      %1783 = vmatpush1.bf16.msra.mxu0 0
      %1784 = vmatprep.subr.bf16.mxu0 0
      %1785 = vmatpush1.bf16.msra.mxu0 0
      %1786 = vmatprep.subr.bf16.mxu0 0
      %1787 = vmatpush1.bf16.msra.mxu0 0
      %1788 = vmatprep.subr.bf16.mxu0 0
      %1789 = vmatpush1.bf16.msra.mxu0 0
      %1790 = vmatprep.subr.bf16.mxu0 0
      %1791 = vmatpush1.bf16.msra.mxu0 0
      %1792 = vmatprep.subr.bf16.mxu0 0
      %1793 = vmatpush1.bf16.msra.mxu0 0
      %1794 = vmatprep.subr.bf16.mxu0 0
      %1795 = vmatpush1.bf16.msra.mxu0 0
      %1796 = vmatprep.subr.bf16.mxu0 0
      %1797 = vmatpush1.bf16.msra.mxu0 0
      %1798 = vmatprep.subr.bf16.mxu0 0
      %1799 = vmatpush1.bf16.msra.mxu0 0
      %1800 = vmatprep.subr.bf16.mxu0 0
      %1801 = vmatpush1.bf16.msra.mxu0 0
      %1802 = vmatprep.subr.bf16.mxu0 0
      %1803 = vmatpush1.bf16.msra.mxu0 0
      %1804 = vmatprep.subr.bf16.mxu0 0
      %1805 = vmatpush1.bf16.msra.mxu0 0
      %1806 = vmatprep.subr.bf16.mxu0 0
      %1807 = vmatpush1.bf16.msra.mxu0 0
      %1808 = vmatprep.subr.bf16.mxu0 0
      %1809 = vmatpush1.bf16.msra.mxu0 0
      %1810 = vmatprep.mubr.bf16.mxu0 0
      %1811 = vmatmul.mubr.bf16.gmra.mrb[0].mxu0 %v1776
      %v1812 = vpop.f32.mrb[0].mxu0
      %v1813 = vadd.f32 0.0, %v1812
      %v1814 = vpop.f32.mrb[0].mxu0
      %v1815 = vpop.f32.mrb[0].mxu0
      %v1816 = vadd.f32 0.0, %v1815
      %v1817 = vpop.f32.mrb[0].mxu0
      %1818 = vdwg.mxu0
      %v1820 = vsel %vm1650, %v1725, 0
      %1822 = vmatprep.subr.bf16.mxu0 0
      %1823 = vmatpush1.bf16.msra.mxu0 %v1729
      %1824 = vmatprep.subr.bf16.mxu0 0
      %1825 = vmatpush1.bf16.msra.mxu0 0
      %1826 = vmatprep.subr.bf16.mxu0 0
      %1827 = vmatpush1.bf16.msra.mxu0 0
      %1828 = vmatprep.subr.bf16.mxu0 0
      %1829 = vmatpush1.bf16.msra.mxu0 0
      %1830 = vmatprep.subr.bf16.mxu0 0
      %1831 = vmatpush1.bf16.msra.mxu0 0
      %1832 = vmatprep.subr.bf16.mxu0 0
      %1833 = vmatpush1.bf16.msra.mxu0 0
      %1834 = vmatprep.subr.bf16.mxu0 0
      %1835 = vmatpush1.bf16.msra.mxu0 0
      %1836 = vmatprep.subr.bf16.mxu0 0
      %1837 = vmatpush1.bf16.msra.mxu0 0
      %1838 = vmatprep.subr.bf16.mxu0 0
      %1839 = vmatpush1.bf16.msra.mxu0 0
      %1840 = vmatprep.subr.bf16.mxu0 0
      %1841 = vmatpush1.bf16.msra.mxu0 0
      %1842 = vmatprep.subr.bf16.mxu0 0
      %1843 = vmatpush1.bf16.msra.mxu0 0
      %1844 = vmatprep.subr.bf16.mxu0 0
      %1845 = vmatpush1.bf16.msra.mxu0 0
      %1846 = vmatprep.subr.bf16.mxu0 0
      %1847 = vmatpush1.bf16.msra.mxu0 0
      %1848 = vmatprep.subr.bf16.mxu0 0
      %1849 = vmatpush1.bf16.msra.mxu0 0
      %1850 = vmatprep.subr.bf16.mxu0 0
      %1851 = vmatpush1.bf16.msra.mxu0 0
      %1852 = vmatprep.subr.bf16.mxu0 0
      %1853 = vmatpush1.bf16.msra.mxu0 0
      %1854 = vmatprep.mubr.bf16.mxu0 0
      %1855 = vmatmul.mubr.bf16.gmra.mrb[0].mxu0 %v1820
      %v1856 = vpop.f32.mrb[0].mxu0
      %v1857 = vadd.f32 0.0, %v1856
      %v1858 = vpop.f32.mrb[0].mxu0
      %v1859 = vpop.f32.mrb[0].mxu0
      %v1860 = vadd.f32 0.0, %v1859
      %v1861 = vpop.f32.mrb[0].mxu0
      %1862 = vdwg.mxu0
      %v1864 = vsel %vm1650, %v1726, 0
      %1866 = vmatprep.subr.bf16.mxu0 0
      %1867 = vmatpush1.bf16.msra.mxu0 %v1730
      %1868 = vmatprep.subr.bf16.mxu0 0
      %1869 = vmatpush1.bf16.msra.mxu0 0
      %1870 = vmatprep.subr.bf16.mxu0 0
      %1871 = vmatpush1.bf16.msra.mxu0 0
      %1872 = vmatprep.subr.bf16.mxu0 0
      %1873 = vmatpush1.bf16.msra.mxu0 0
      %1874 = vmatprep.subr.bf16.mxu0 0
      %1875 = vmatpush1.bf16.msra.mxu0 0
      %1876 = vmatprep.subr.bf16.mxu0 0
      %1877 = vmatpush1.bf16.msra.mxu0 0
      %1878 = vmatprep.subr.bf16.mxu0 0
      %1879 = vmatpush1.bf16.msra.mxu0 0
      %1880 = vmatprep.subr.bf16.mxu0 0
      %1881 = vmatpush1.bf16.msra.mxu0 0
      %1882 = vmatprep.subr.bf16.mxu0 0
      %1883 = vmatpush1.bf16.msra.mxu0 0
      %1884 = vmatprep.subr.bf16.mxu0 0
      %1885 = vmatpush1.bf16.msra.mxu0 0
      %1886 = vmatprep.subr.bf16.mxu0 0
      %1887 = vmatpush1.bf16.msra.mxu0 0
      %1888 = vmatprep.subr.bf16.mxu0 0
      %1889 = vmatpush1.bf16.msra.mxu0 0
      %1890 = vmatprep.subr.bf16.mxu0 0
      %1891 = vmatpush1.bf16.msra.mxu0 0
      %1892 = vmatprep.subr.bf16.mxu0 0
      %1893 = vmatpush1.bf16.msra.mxu0 0
      %1894 = vmatprep.subr.bf16.mxu0 0
      %1895 = vmatpush1.bf16.msra.mxu0 0
      %1896 = vmatprep.subr.bf16.mxu0 0
      %1897 = vmatpush1.bf16.msra.mxu0 0
      %1898 = vmatprep.mubr.bf16.mxu0 0
      %1899 = vmatmul.mubr.bf16.gmra.mrb[0].mxu0 %v1864
      %v1900 = vpop.f32.mrb[0].mxu0
      %v1901 = vadd.f32 0.0, %v1900
      %v1902 = vpop.f32.mrb[0].mxu0
      %v1903 = vpop.f32.mrb[0].mxu0
      %v1904 = vadd.f32 0.0, %v1903
      %v1905 = vpop.f32.mrb[0].mxu0
      %1906 = vdwg.mxu0
      %v1907 = vrcp.pop %v1701
      %v1908 = vrcp.pop %v1704
      %v1909 = vrcp.pop %v1707
      %v1910 = vrcp.pop %v1710
      %v1911 = vrcp.pop %v1713
      %v1912 = vrcp.pop %v1716
      %v1913 = vrcp.pop %v1719
      %v1914 = vrcp.pop %v1722
      %v1915 = vmul.f32 %v1769, %v1907
      %v1916 = vmul.f32 %v1772, %v1908
      %v1917 = vmul.f32 %v1813, %v1909
      %v1918 = vmul.f32 %v1816, %v1910
      %v1919 = vmul.f32 %v1857, %v1911
      %v1920 = vmul.f32 %v1860, %v1912
      %v1921 = vmul.f32 %v1901, %v1913
      %v1922 = vmul.f32 %v1904, %v1914
      %v1923 = vcombine.low %v1915, %v1919
      %v1924 = vcombine.high %v1915, %v1919
      %v1926 = vunpack.c.l.s4 1983009808
      %v1927 = vunpack.c.0.s8 %v1926
      %v1928 = vlaneseq
      %v1929 = vshrl.u32 %v1928, 7
      %v1930 = vsub.s32 %v1927, %v1929
      %v1931 = vrot.slane %v1923, %v1930
      %v1933 = vunpack.c.l.s4 1983009808
      %v1934 = vunpack.c.0.s8 %v1933
      %v1935 = vlaneseq
      %v1936 = vshrl.u32 %v1935, 7
      %v1937 = vsub.s32 %v1934, %v1936
      %v1938 = vrot.slane %v1924, %v1937
      %v1939 = vcombine.low %v1917, %v1921
      %v1940 = vcombine.high %v1917, %v1921
      %v1942 = vunpack.c.l.s4 1983009808
      %v1943 = vunpack.c.0.s8 %v1942
      %v1944 = vlaneseq
      %v1945 = vshrl.u32 %v1944, 7
      %v1946 = vsub.s32 %v1943, %v1945
      %v1947 = vrot.slane %v1939, %v1946
      %v1949 = vunpack.c.l.s4 1983009808
      %v1950 = vunpack.c.0.s8 %v1949
      %v1951 = vlaneseq
      %v1952 = vshrl.u32 %v1951, 7
      %v1953 = vsub.s32 %v1950, %v1952
      %v1954 = vrot.slane %v1940, %v1953
      %v1955 = vcombine.low %v1931, %v1947
      %v1956 = vcombine.high %v1931, %v1947
      %v1958 = vunpack.c.l.s4 1934713408
      %v1959 = vunpack.c.0.s8 %v1958
      %v1960 = vlaneseq
      %v1961 = vshrl.u32 %v1960, 7
      %v1962 = vsub.s32 %v1959, %v1961
      %v1963 = vrot.slane %v1955, %v1962
      %v1965 = vunpack.c.l.s4 1934713408
      %v1966 = vunpack.c.0.s8 %v1965
      %v1967 = vlaneseq
      %v1968 = vshrl.u32 %v1967, 7
      %v1969 = vsub.s32 %v1966, %v1968
      %v1970 = vrot.slane %v1956, %v1969
      %v1971 = vcombine.low %v1938, %v1954
      %v1972 = vcombine.high %v1938, %v1954
      %v1974 = vunpack.c.l.s4 1934713408
      %v1975 = vunpack.c.0.s8 %v1974
      %v1976 = vlaneseq
      %v1977 = vshrl.u32 %v1976, 7
      %v1978 = vsub.s32 %v1975, %v1977
      %v1979 = vrot.slane %v1971, %v1978
      %v1981 = vunpack.c.l.s4 1934713408
      %v1982 = vunpack.c.0.s8 %v1981
      %v1983 = vlaneseq
      %v1984 = vshrl.u32 %v1983, 7
      %v1985 = vsub.s32 %v1982, %v1984
      %v1986 = vrot.slane %v1972, %v1985
      %v1987 = vcombine.high %v1963, 0.0
      %v1988 = vcombine.high %v1970, 0.0
      %v1989 = vcombine.high %v1979, 0.0
      %v1990 = vcombine.high %v1986, 0.0
      %v1991 = vcombine.low %v1916, %v1920
      %v1992 = vcombine.high %v1916, %v1920
      %v1994 = vunpack.c.l.s4 1983009808
      %v1995 = vunpack.c.0.s8 %v1994
      %v1996 = vlaneseq
      %v1997 = vshrl.u32 %v1996, 7
      %v1998 = vsub.s32 %v1995, %v1997
      %v1999 = vrot.slane %v1991, %v1998
      %v2001 = vunpack.c.l.s4 1983009808
      %v2002 = vunpack.c.0.s8 %v2001
      %v2003 = vlaneseq
      %v2004 = vshrl.u32 %v2003, 7
      %v2005 = vsub.s32 %v2002, %v2004
      %v2006 = vrot.slane %v1992, %v2005
      %v2007 = vcombine.low %v1918, %v1922
      %v2008 = vcombine.high %v1918, %v1922
      %v2010 = vunpack.c.l.s4 1983009808
      %v2011 = vunpack.c.0.s8 %v2010
      %v2012 = vlaneseq
      %v2013 = vshrl.u32 %v2012, 7
      %v2014 = vsub.s32 %v2011, %v2013
      %v2015 = vrot.slane %v2007, %v2014
      %v2017 = vunpack.c.l.s4 1983009808
      %v2018 = vunpack.c.0.s8 %v2017
      %v2019 = vlaneseq
      %v2020 = vshrl.u32 %v2019, 7
      %v2021 = vsub.s32 %v2018, %v2020
      %v2022 = vrot.slane %v2008, %v2021
      %v2023 = vcombine.low %v1999, %v2015
      %v2024 = vcombine.high %v1999, %v2015
      %v2026 = vunpack.c.l.s4 1934713408
      %v2027 = vunpack.c.0.s8 %v2026
      %v2028 = vlaneseq
      %v2029 = vshrl.u32 %v2028, 7
      %v2030 = vsub.s32 %v2027, %v2029
      %v2031 = vrot.slane %v2023, %v2030
      %v2033 = vunpack.c.l.s4 1934713408
      %v2034 = vunpack.c.0.s8 %v2033
      %v2035 = vlaneseq
      %v2036 = vshrl.u32 %v2035, 7
      %v2037 = vsub.s32 %v2034, %v2036
      %v2038 = vrot.slane %v2024, %v2037
      %v2039 = vcombine.low %v2006, %v2022
      %v2040 = vcombine.high %v2006, %v2022
      %v2042 = vunpack.c.l.s4 1934713408
      %v2043 = vunpack.c.0.s8 %v2042
      %v2044 = vlaneseq
      %v2045 = vshrl.u32 %v2044, 7
      %v2046 = vsub.s32 %v2043, %v2045
      %v2047 = vrot.slane %v2039, %v2046
      %v2049 = vunpack.c.l.s4 1934713408
      %v2050 = vunpack.c.0.s8 %v2049
      %v2051 = vlaneseq
      %v2052 = vshrl.u32 %v2051, 7
      %v2053 = vsub.s32 %v2050, %v2052
      %v2054 = vrot.slane %v2040, %v2053
      %v2055 = vcombine.high %v2031, 0.0
      %v2056 = vcombine.high %v2038, 0.0
      %v2057 = vcombine.high %v2047, 0.0
      %v2058 = vcombine.high %v2054, 0.0
      %v2059 = vcombine.low %v1963, %v1970
      %v2061 = vunpack.c.l.s4 1983009808
      %v2062 = vunpack.c.0.s8 %v2061
      %v2063 = vlaneseq
      %v2064 = vshrl.u32 %v2063, 7
      %v2065 = vsub.s32 %v2062, %v2064
      %v2066 = vrot.slane %v2059, %v2065
      %v2067 = vcombine.low %v1987, %v1988
      %v2069 = vunpack.c.l.s4 1983009808
      %v2070 = vunpack.c.0.s8 %v2069
      %v2071 = vlaneseq
      %v2072 = vshrl.u32 %v2071, 7
      %v2073 = vsub.s32 %v2070, %v2072
      %v2074 = vrot.slane %v2067, %v2073
      %v2075 = vcombine.low %v1979, %v1986
      %v2077 = vunpack.c.l.s4 1983009808
      %v2078 = vunpack.c.0.s8 %v2077
      %v2079 = vlaneseq
      %v2080 = vshrl.u32 %v2079, 7
      %v2081 = vsub.s32 %v2078, %v2080
      %v2082 = vrot.slane %v2075, %v2081
      %v2083 = vcombine.low %v1989, %v1990
      %v2085 = vunpack.c.l.s4 1983009808
      %v2086 = vunpack.c.0.s8 %v2085
      %v2087 = vlaneseq
      %v2088 = vshrl.u32 %v2087, 7
      %v2089 = vsub.s32 %v2086, %v2088
      %v2090 = vrot.slane %v2083, %v2089
      %v2091 = vcombine.low %v2066, %v2074
      %v2092 = vcombine.high %v2066, %v2074
      %v2094 = vunpack.c.l.s4 1934713408
      %v2095 = vunpack.c.0.s8 %v2094
      %v2096 = vlaneseq
      %v2097 = vshrl.u32 %v2096, 7
      %v2098 = vsub.s32 %v2095, %v2097
      %v2099 = vrot.slane %v2091, %v2098
      %v2101 = vunpack.c.l.s4 1934713408
      %v2102 = vunpack.c.0.s8 %v2101
      %v2103 = vlaneseq
      %v2104 = vshrl.u32 %v2103, 7
      %v2105 = vsub.s32 %v2102, %v2104
      %v2106 = vrot.slane %v2092, %v2105
      %v2107 = vcombine.low %v2082, %v2090
      %v2108 = vcombine.high %v2082, %v2090
      %v2110 = vunpack.c.l.s4 1934713408
      %v2111 = vunpack.c.0.s8 %v2110
      %v2112 = vlaneseq
      %v2113 = vshrl.u32 %v2112, 7
      %v2114 = vsub.s32 %v2111, %v2113
      %v2115 = vrot.slane %v2107, %v2114
      %v2117 = vunpack.c.l.s4 1934713408
      %v2118 = vunpack.c.0.s8 %v2117
      %v2119 = vlaneseq
      %v2120 = vshrl.u32 %v2119, 7
      %v2121 = vsub.s32 %v2118, %v2120
      %v2122 = vrot.slane %v2108, %v2121
      %v2123 = vcombine.low %v2099, %v2115
      %v2124 = vcombine.high %v2099, %v2115
      %v2125 = vcombine.low %v2106, %v2122
      %v2126 = vcombine.high %v2106, %v2122
      %v2127 = vcombine.low %v2031, %v2038
      %v2129 = vunpack.c.l.s4 1983009808
      %v2130 = vunpack.c.0.s8 %v2129
      %v2131 = vlaneseq
      %v2132 = vshrl.u32 %v2131, 7
      %v2133 = vsub.s32 %v2130, %v2132
      %v2134 = vrot.slane %v2127, %v2133
      %v2135 = vcombine.low %v2055, %v2056
      %v2137 = vunpack.c.l.s4 1983009808
      %v2138 = vunpack.c.0.s8 %v2137
      %v2139 = vlaneseq
      %v2140 = vshrl.u32 %v2139, 7
      %v2141 = vsub.s32 %v2138, %v2140
      %v2142 = vrot.slane %v2135, %v2141
      %v2143 = vcombine.low %v2047, %v2054
      %v2145 = vunpack.c.l.s4 1983009808
      %v2146 = vunpack.c.0.s8 %v2145
      %v2147 = vlaneseq
      %v2148 = vshrl.u32 %v2147, 7
      %v2149 = vsub.s32 %v2146, %v2148
      %v2150 = vrot.slane %v2143, %v2149
      %v2151 = vcombine.low %v2057, %v2058
      %v2153 = vunpack.c.l.s4 1983009808
      %v2154 = vunpack.c.0.s8 %v2153
      %v2155 = vlaneseq
      %v2156 = vshrl.u32 %v2155, 7
      %v2157 = vsub.s32 %v2154, %v2156
      %v2158 = vrot.slane %v2151, %v2157
      %v2159 = vcombine.low %v2134, %v2142
      %v2160 = vcombine.high %v2134, %v2142
      %v2162 = vunpack.c.l.s4 1934713408
      %v2163 = vunpack.c.0.s8 %v2162
      %v2164 = vlaneseq
      %v2165 = vshrl.u32 %v2164, 7
      %v2166 = vsub.s32 %v2163, %v2165
      %v2167 = vrot.slane %v2159, %v2166
      %v2169 = vunpack.c.l.s4 1934713408
      %v2170 = vunpack.c.0.s8 %v2169
      %v2171 = vlaneseq
      %v2172 = vshrl.u32 %v2171, 7
      %v2173 = vsub.s32 %v2170, %v2172
      %v2174 = vrot.slane %v2160, %v2173
      %v2175 = vcombine.low %v2150, %v2158
      %v2176 = vcombine.high %v2150, %v2158
      %v2178 = vunpack.c.l.s4 1934713408
      %v2179 = vunpack.c.0.s8 %v2178
      %v2180 = vlaneseq
      %v2181 = vshrl.u32 %v2180, 7
      %v2182 = vsub.s32 %v2179, %v2181
      %v2183 = vrot.slane %v2175, %v2182
      %v2185 = vunpack.c.l.s4 1934713408
      %v2186 = vunpack.c.0.s8 %v2185
      %v2187 = vlaneseq
      %v2188 = vshrl.u32 %v2187, 7
      %v2189 = vsub.s32 %v2186, %v2188
      %v2190 = vrot.slane %v2176, %v2189
      %v2191 = vcombine.low %v2167, %v2183
      %v2192 = vcombine.high %v2167, %v2183
      %v2193 = vcombine.low %v2174, %v2190
      %v2194 = vcombine.high %v2174, %v2190
      %2197 = vrot.lane.b32.xlu0 %v2124, 32
      %v2198 = vpop.permute.xlu0 %2197
      %2199 = vrot.lane.b32.xlu0 %v2192, 32
      %v2200 = vpop.permute.xlu0 %2199
      %2205 = vrot.lane.b32.xlu0 %v2125, 64
      %v2206 = vpop.permute.xlu0 %2205
      %2207 = vrot.lane.b32.xlu0 %v2193, 64
      %v2208 = vpop.permute.xlu0 %2207
      %2213 = vrot.lane.b32.xlu0 %v2126, 96
      %v2214 = vpop.permute.xlu0 %2213
      %2215 = vrot.lane.b32.xlu0 %v2194, 96
      %v2216 = vpop.permute.xlu0 %2215
      %v2219 = vsel %vm1461, %v2123, %v2198
      %v2220 = vsel %vm1461, %v2191, %v2200
      %vm2221 = vcmask 523264
      %v2222 = vsel %vm2221, %v2219, %v2206
      %v2223 = vsel %vm2221, %v2220, %v2208
      %vm2224 = vcmask 785408
      %v2225 = vsel %vm2224, %v2222, %v2214
      %v2226 = vsel %vm2224, %v2223, %v2216
      %v2227 = vpack.c.bf16 %v2226, %v2225
      %v2228 = vld [vmem:[%s3] sm:$0xf]
      %v2229 = vld [vmem:[%s3 + $0x4] sm:$0xf]
      %v2230 = vld [vmem:[%s3 + $0x8] sm:$0xf]
      %v2231 = vld [vmem:[%s3 + $0xc] sm:$0xf]
      %v2232 = vld [vmem:[%s3 + $0x10] sm:$0xf]
      %v2233 = vld [vmem:[%s3 + $0x14] sm:$0xf]
      %v2234 = vld [vmem:[%s3 + $0x18] sm:$0xf]
      %v2235 = vld [vmem:[%s3 + $0x1c] sm:$0xf]
      %v2236 = vld [vmem:[%s3 + $0x20] sm:$0xf]
      %v2237 = vld [vmem:[%s3 + $0x24] sm:$0xf]
      %v2238 = vld [vmem:[%s3 + $0x28] sm:$0xf]
      %v2239 = vld [vmem:[%s3 + $0x2c] sm:$0xf]
      %v2240 = vld [vmem:[%s3 + $0x30] sm:$0xf]
      %v2241 = vld [vmem:[%s3 + $0x34] sm:$0xf]
      %v2242 = vld [vmem:[%s3 + $0x38] sm:$0xf]
      %v2243 = vld [vmem:[%s3 + $0x3c] sm:$0xf]
      %v2244 = vld [vmem:[%s4] sm:$0x1]
      %v2246 = vlaneseq
      %v2247 = vshrl.u32 %v2246, 7
      %v2248 = vsub.s32 0, %v2247
      %v2249 = vrot.slane %v2244, %v2248
      %v2267 = vunpack.c.l.b16 %v2228
      %v2268 = vunpack.c.l.b16 %v2229
      %v2269 = vunpack.c.l.b16 %v2230
      %v2270 = vunpack.c.l.b16 %v2231
      %v2271 = vunpack.c.l.b16 %v2232
      %v2272 = vunpack.c.l.b16 %v2233
      %v2273 = vunpack.c.l.b16 %v2234
      %v2274 = vunpack.c.l.b16 %v2235
      %v2275 = vunpack.c.l.b16 %v2236
      %v2276 = vunpack.c.l.b16 %v2237
      %v2277 = vunpack.c.l.b16 %v2238
      %v2278 = vunpack.c.l.b16 %v2239
      %v2279 = vunpack.c.l.b16 %v2240
      %v2280 = vunpack.c.l.b16 %v2241
      %v2281 = vunpack.c.l.b16 %v2242
      %v2282 = vunpack.c.l.b16 %v2243
      %v2283 = vpack.c.b16 %v2268, %v2267
      %v2284 = vpack.c.b16 %v2270, %v2269
      %v2285 = vpack.c.b16 %v2272, %v2271
      %v2286 = vpack.c.b16 %v2274, %v2273
      %v2287 = vpack.c.b16 %v2276, %v2275
      %v2288 = vpack.c.b16 %v2278, %v2277
      %v2289 = vpack.c.b16 %v2280, %v2279
      %v2290 = vpack.c.b16 %v2282, %v2281
      %2299 = vmatprep.subr.bf16.mxu0 0
      %2300 = vmatpush1.bf16.msra.mxu0 %v2283
      %2301 = vmatprep.subr.bf16.mxu0 0
      %2302 = vmatpush1.bf16.msra.mxu0 %v2284
      %2303 = vmatprep.subr.bf16.mxu0 0
      %2304 = vmatpush1.bf16.msra.mxu0 %v2285
      %2305 = vmatprep.subr.bf16.mxu0 0
      %2306 = vmatpush1.bf16.msra.mxu0 %v2286
      %2307 = vmatprep.subr.bf16.mxu0 0
      %2308 = vmatpush1.bf16.msra.mxu0 %v2287
      %2309 = vmatprep.subr.bf16.mxu0 0
      %2310 = vmatpush1.bf16.msra.mxu0 %v2288
      %2311 = vmatprep.subr.bf16.mxu0 0
      %2312 = vmatpush1.bf16.msra.mxu0 %v2289
      %2313 = vmatprep.subr.bf16.mxu0 0
      %2314 = vmatpush1.bf16.msra.mxu0 %v2290
      %2315 = vmatprep.subr.bf16.mxu0 0
      %2316 = vmatpush1.bf16.msra.mxu0 0
      %2317 = vmatprep.subr.bf16.mxu0 0
      %2318 = vmatpush1.bf16.msra.mxu0 0
      %2319 = vmatprep.subr.bf16.mxu0 0
      %2320 = vmatpush1.bf16.msra.mxu0 0
      %2321 = vmatprep.subr.bf16.mxu0 0
      %2322 = vmatpush1.bf16.msra.mxu0 0
      %2323 = vmatprep.subr.bf16.mxu0 0
      %2324 = vmatpush1.bf16.msra.mxu0 0
      %2325 = vmatprep.subr.bf16.mxu0 0
      %2326 = vmatpush1.bf16.msra.mxu0 0
      %2327 = vmatprep.subr.bf16.mxu0 0
      %2328 = vmatpush1.bf16.msra.mxu0 0
      %2329 = vmatprep.subr.bf16.mxu0 0
      %2330 = vmatpush1.bf16.msra.mxu0 0
      %2331 = vmatprep.mubr.bf16.mxu0 0
      %2332 = vmatmul.mubr.bf16.gmra.mrb[0].mxu0 %v2227
      %v2333 = vpop.f32.mrb[0].mxu0
      %v2334 = vadd.f32 %v2249, %v2333
      %v2335 = vpop.f32.mrb[0].mxu0
      %v2336 = vpop.f32.mrb[0].mxu0
      %v2337 = vadd.f32 %v2249, %v2336
      %v2338 = vpop.f32.mrb[0].mxu0
      %2339 = vdwg.mxu0
      %v2340 = vadd.f32 %v288, %v2334
      %v2341 = vadd.f32 %v289, %v2337
      %v2342 = vld [vmem:[%s5] sm:$0x1]
      %v2343 = vld [vmem:[%s6] sm:$0x1]
      %2344 = vadd.xlane.f32.xlu0 %v2340
      %v2345 = vpop.xlane.xlu0 %2344
      %2346 = vadd.xlane.f32.xlu0 %v2341
      %v2347 = vpop.xlane.xlu0 %2346
      %v2348 = vrcp.pop 128.0
      %v2349 = vmul.f32 %v2345, %v2348
      %v2350 = vmul.f32 %v2347, %v2348
      %v2351 = vsub.f32 %v2340, %v2349
      %v2352 = vsub.f32 %v2341, %v2350
      %v2353 = vmul.f32 %v2351, %v2351
      %v2354 = vmul.f32 %v2352, %v2352
      %2355 = vadd.xlane.f32.xlu0 %v2353
      %v2356 = vpop.xlane.xlu0 %2355
      %2357 = vadd.xlane.f32.xlu0 %v2354
      %v2358 = vpop.xlane.xlu0 %2357
      %v2359 = vmul.f32 %v2356, %v2348
      %v2360 = vmul.f32 %v2358, %v2348
      %v2361 = vadd.f32 %v2359, 1e-05
      %v2362 = vadd.f32 %v2360, 1e-05
      %v2363 = vrsqrt.pop %v2361
      %v2364 = vrsqrt.pop %v2362
      %v2365 = vmul.f32 %v2351, %v2363
      %v2366 = vmul.f32 %v2352, %v2364
      %v2368 = vlaneseq
      %v2369 = vshrl.u32 %v2368, 7
      %v2370 = vsub.s32 0, %v2369
      %v2371 = vrot.slane %v2342, %v2370
      %v2373 = vmul.f32 %v2365, %v2371
      %v2374 = vmul.f32 %v2366, %v2371
      %v2376 = vlaneseq
      %v2377 = vshrl.u32 %v2376, 7
      %v2378 = vsub.s32 0, %v2377
      %v2379 = vrot.slane %v2343, %v2378
      %v2381 = vadd.f32 %v2373, %v2379
      %v2382 = vadd.f32 %v2374, %v2379
      %2383 = vst [vmem:[%s285] sm:$0xff] %v2381
      %2384 = vst [vmem:[%s285 + $0x8] sm:$0xff] %v2382
      %2387 = vrot.lane.b32.xlu0 %v575, 96
      %v2388 = vpop.permute.xlu0 %2387
      %2389 = vrot.lane.b32.xlu0 %v576, 96
      %v2390 = vpop.permute.xlu0 %2389
      %2393 = vrot.lane.b32.xlu0 %v575, 64
      %v2394 = vpop.permute.xlu0 %2393
      %2395 = vrot.lane.b32.xlu0 %v576, 64
      %v2396 = vpop.permute.xlu0 %2395
      %2399 = vrot.lane.b32.xlu0 %v575, 32
      %v2400 = vpop.permute.xlu0 %2399
      %2401 = vrot.lane.b32.xlu0 %v576, 32
      %v2402 = vpop.permute.xlu0 %2401
      %v2405 = vcombine.low %v575, %v2394
      %v2406 = vcombine.high %v575, %v2394
      %v2408 = vunpack.c.l.s4 1983009808
      %v2409 = vunpack.c.0.s8 %v2408
      %v2410 = vlaneseq
      %v2411 = vshrl.u32 %v2410, 7
      %v2412 = vsub.s32 %v2409, %v2411
      %v2413 = vrot.slane %v2405, %v2412
      %v2415 = vunpack.c.l.s4 1983009808
      %v2416 = vunpack.c.0.s8 %v2415
      %v2417 = vlaneseq
      %v2418 = vshrl.u32 %v2417, 7
      %v2419 = vsub.s32 %v2416, %v2418
      %v2420 = vrot.slane %v2406, %v2419
      %v2421 = vcombine.low %v2388, %v2400
      %v2422 = vcombine.high %v2388, %v2400
      %v2424 = vunpack.c.l.s4 1983009808
      %v2425 = vunpack.c.0.s8 %v2424
      %v2426 = vlaneseq
      %v2427 = vshrl.u32 %v2426, 7
      %v2428 = vsub.s32 %v2425, %v2427
      %v2429 = vrot.slane %v2421, %v2428
      %v2431 = vunpack.c.l.s4 1983009808
      %v2432 = vunpack.c.0.s8 %v2431
      %v2433 = vlaneseq
      %v2434 = vshrl.u32 %v2433, 7
      %v2435 = vsub.s32 %v2432, %v2434
      %v2436 = vrot.slane %v2422, %v2435
      %v2437 = vcombine.low %v2413, %v2429
      %v2438 = vcombine.high %v2413, %v2429
      %v2440 = vunpack.c.l.s4 1934713408
      %v2441 = vunpack.c.0.s8 %v2440
      %v2442 = vlaneseq
      %v2443 = vshrl.u32 %v2442, 7
      %v2444 = vsub.s32 %v2441, %v2443
      %v2445 = vrot.slane %v2437, %v2444
      %v2447 = vunpack.c.l.s4 1934713408
      %v2448 = vunpack.c.0.s8 %v2447
      %v2449 = vlaneseq
      %v2450 = vshrl.u32 %v2449, 7
      %v2451 = vsub.s32 %v2448, %v2450
      %v2452 = vrot.slane %v2438, %v2451
      %v2453 = vcombine.low %v2420, %v2436
      %v2454 = vcombine.high %v2420, %v2436
      %v2456 = vunpack.c.l.s4 1934713408
      %v2457 = vunpack.c.0.s8 %v2456
      %v2458 = vlaneseq
      %v2459 = vshrl.u32 %v2458, 7
      %v2460 = vsub.s32 %v2457, %v2459
      %v2461 = vrot.slane %v2453, %v2460
      %v2463 = vunpack.c.l.s4 1934713408
      %v2464 = vunpack.c.0.s8 %v2463
      %v2465 = vlaneseq
      %v2466 = vshrl.u32 %v2465, 7
      %v2467 = vsub.s32 %v2464, %v2466
      %v2468 = vrot.slane %v2454, %v2467
      %v2469 = vcombine.high %v2445, 0.0
      %v2470 = vcombine.high %v2452, 0.0
      %v2471 = vcombine.high %v2461, 0.0
      %v2472 = vcombine.high %v2468, 0.0
      %v2473 = vcombine.low %v576, %v2396
      %v2474 = vcombine.high %v576, %v2396
      %v2476 = vunpack.c.l.s4 1983009808
      %v2477 = vunpack.c.0.s8 %v2476
      %v2478 = vlaneseq
      %v2479 = vshrl.u32 %v2478, 7
      %v2480 = vsub.s32 %v2477, %v2479
      %v2481 = vrot.slane %v2473, %v2480
      %v2483 = vunpack.c.l.s4 1983009808
      %v2484 = vunpack.c.0.s8 %v2483
      %v2485 = vlaneseq
      %v2486 = vshrl.u32 %v2485, 7
      %v2487 = vsub.s32 %v2484, %v2486
      %v2488 = vrot.slane %v2474, %v2487
      %v2489 = vcombine.low %v2390, %v2402
      %v2490 = vcombine.high %v2390, %v2402
      %v2492 = vunpack.c.l.s4 1983009808
      %v2493 = vunpack.c.0.s8 %v2492
      %v2494 = vlaneseq
      %v2495 = vshrl.u32 %v2494, 7
      %v2496 = vsub.s32 %v2493, %v2495
      %v2497 = vrot.slane %v2489, %v2496
      %v2499 = vunpack.c.l.s4 1983009808
      %v2500 = vunpack.c.0.s8 %v2499
      %v2501 = vlaneseq
      %v2502 = vshrl.u32 %v2501, 7
      %v2503 = vsub.s32 %v2500, %v2502
      %v2504 = vrot.slane %v2490, %v2503
      %v2505 = vcombine.low %v2481, %v2497
      %v2506 = vcombine.high %v2481, %v2497
      %v2508 = vunpack.c.l.s4 1934713408
      %v2509 = vunpack.c.0.s8 %v2508
      %v2510 = vlaneseq
      %v2511 = vshrl.u32 %v2510, 7
      %v2512 = vsub.s32 %v2509, %v2511
      %v2513 = vrot.slane %v2505, %v2512
      %v2515 = vunpack.c.l.s4 1934713408
      %v2516 = vunpack.c.0.s8 %v2515
      %v2517 = vlaneseq
      %v2518 = vshrl.u32 %v2517, 7
      %v2519 = vsub.s32 %v2516, %v2518
      %v2520 = vrot.slane %v2506, %v2519
      %v2521 = vcombine.low %v2488, %v2504
      %v2522 = vcombine.high %v2488, %v2504
      %v2524 = vunpack.c.l.s4 1934713408
      %v2525 = vunpack.c.0.s8 %v2524
      %v2526 = vlaneseq
      %v2527 = vshrl.u32 %v2526, 7
      %v2528 = vsub.s32 %v2525, %v2527
      %v2529 = vrot.slane %v2521, %v2528
      %v2531 = vunpack.c.l.s4 1934713408
      %v2532 = vunpack.c.0.s8 %v2531
      %v2533 = vlaneseq
      %v2534 = vshrl.u32 %v2533, 7
      %v2535 = vsub.s32 %v2532, %v2534
      %v2536 = vrot.slane %v2522, %v2535
      %v2537 = vcombine.high %v2513, 0.0
      %v2538 = vcombine.high %v2520, 0.0
      %v2539 = vcombine.high %v2529, 0.0
      %v2540 = vcombine.high %v2536, 0.0
      %v2541 = vcombine.low %v2445, %v2452
      %v2543 = vunpack.c.l.s4 1983009808
      %v2544 = vunpack.c.0.s8 %v2543
      %v2545 = vlaneseq
      %v2546 = vshrl.u32 %v2545, 7
      %v2547 = vsub.s32 %v2544, %v2546
      %v2548 = vrot.slane %v2541, %v2547
      %v2549 = vcombine.low %v2469, %v2470
      %v2551 = vunpack.c.l.s4 1983009808
      %v2552 = vunpack.c.0.s8 %v2551
      %v2553 = vlaneseq
      %v2554 = vshrl.u32 %v2553, 7
      %v2555 = vsub.s32 %v2552, %v2554
      %v2556 = vrot.slane %v2549, %v2555
      %v2557 = vcombine.low %v2461, %v2468
      %v2559 = vunpack.c.l.s4 1983009808
      %v2560 = vunpack.c.0.s8 %v2559
      %v2561 = vlaneseq
      %v2562 = vshrl.u32 %v2561, 7
      %v2563 = vsub.s32 %v2560, %v2562
      %v2564 = vrot.slane %v2557, %v2563
      %v2565 = vcombine.low %v2471, %v2472
      %v2567 = vunpack.c.l.s4 1983009808
      %v2568 = vunpack.c.0.s8 %v2567
      %v2569 = vlaneseq
      %v2570 = vshrl.u32 %v2569, 7
      %v2571 = vsub.s32 %v2568, %v2570
      %v2572 = vrot.slane %v2565, %v2571
      %v2573 = vcombine.low %v2548, %v2556
      %v2574 = vcombine.high %v2548, %v2556
      %v2576 = vunpack.c.l.s4 1934713408
      %v2577 = vunpack.c.0.s8 %v2576
      %v2578 = vlaneseq
      %v2579 = vshrl.u32 %v2578, 7
      %v2580 = vsub.s32 %v2577, %v2579
      %v2581 = vrot.slane %v2573, %v2580
      %v2583 = vunpack.c.l.s4 1934713408
      %v2584 = vunpack.c.0.s8 %v2583
      %v2585 = vlaneseq
      %v2586 = vshrl.u32 %v2585, 7
      %v2587 = vsub.s32 %v2584, %v2586
      %v2588 = vrot.slane %v2574, %v2587
      %v2589 = vcombine.low %v2564, %v2572
      %v2590 = vcombine.high %v2564, %v2572
      %v2592 = vunpack.c.l.s4 1934713408
      %v2593 = vunpack.c.0.s8 %v2592
      %v2594 = vlaneseq
      %v2595 = vshrl.u32 %v2594, 7
      %v2596 = vsub.s32 %v2593, %v2595
      %v2597 = vrot.slane %v2589, %v2596
      %v2599 = vunpack.c.l.s4 1934713408
      %v2600 = vunpack.c.0.s8 %v2599
      %v2601 = vlaneseq
      %v2602 = vshrl.u32 %v2601, 7
      %v2603 = vsub.s32 %v2600, %v2602
      %v2604 = vrot.slane %v2590, %v2603
      %v2605 = vcombine.low %v2581, %v2597
      %v2606 = vcombine.high %v2581, %v2597
      %v2607 = vcombine.low %v2588, %v2604
      %v2608 = vcombine.high %v2588, %v2604
      %v2609 = vcombine.low %v2513, %v2520
      %v2611 = vunpack.c.l.s4 1983009808
      %v2612 = vunpack.c.0.s8 %v2611
      %v2613 = vlaneseq
      %v2614 = vshrl.u32 %v2613, 7
      %v2615 = vsub.s32 %v2612, %v2614
      %v2616 = vrot.slane %v2609, %v2615
      %v2617 = vcombine.low %v2537, %v2538
      %v2619 = vunpack.c.l.s4 1983009808
      %v2620 = vunpack.c.0.s8 %v2619
      %v2621 = vlaneseq
      %v2622 = vshrl.u32 %v2621, 7
      %v2623 = vsub.s32 %v2620, %v2622
      %v2624 = vrot.slane %v2617, %v2623
      %v2625 = vcombine.low %v2529, %v2536
      %v2627 = vunpack.c.l.s4 1983009808
      %v2628 = vunpack.c.0.s8 %v2627
      %v2629 = vlaneseq
      %v2630 = vshrl.u32 %v2629, 7
      %v2631 = vsub.s32 %v2628, %v2630
      %v2632 = vrot.slane %v2625, %v2631
      %v2633 = vcombine.low %v2539, %v2540
      %v2635 = vunpack.c.l.s4 1983009808
      %v2636 = vunpack.c.0.s8 %v2635
      %v2637 = vlaneseq
      %v2638 = vshrl.u32 %v2637, 7
      %v2639 = vsub.s32 %v2636, %v2638
      %v2640 = vrot.slane %v2633, %v2639
      %v2641 = vcombine.low %v2616, %v2624
      %v2642 = vcombine.high %v2616, %v2624
      %v2644 = vunpack.c.l.s4 1934713408
      %v2645 = vunpack.c.0.s8 %v2644
      %v2646 = vlaneseq
      %v2647 = vshrl.u32 %v2646, 7
      %v2648 = vsub.s32 %v2645, %v2647
      %v2649 = vrot.slane %v2641, %v2648
      %v2651 = vunpack.c.l.s4 1934713408
      %v2652 = vunpack.c.0.s8 %v2651
      %v2653 = vlaneseq
      %v2654 = vshrl.u32 %v2653, 7
      %v2655 = vsub.s32 %v2652, %v2654
      %v2656 = vrot.slane %v2642, %v2655
      %v2657 = vcombine.low %v2632, %v2640
      %v2658 = vcombine.high %v2632, %v2640
      %v2660 = vunpack.c.l.s4 1934713408
      %v2661 = vunpack.c.0.s8 %v2660
      %v2662 = vlaneseq
      %v2663 = vshrl.u32 %v2662, 7
      %v2664 = vsub.s32 %v2661, %v2663
      %v2665 = vrot.slane %v2657, %v2664
      %v2667 = vunpack.c.l.s4 1934713408
      %v2668 = vunpack.c.0.s8 %v2667
      %v2669 = vlaneseq
      %v2670 = vshrl.u32 %v2669, 7
      %v2671 = vsub.s32 %v2668, %v2670
      %v2672 = vrot.slane %v2658, %v2671
      %v2673 = vcombine.low %v2649, %v2665
      %v2674 = vcombine.high %v2649, %v2665
      %v2675 = vcombine.low %v2656, %v2672
      %v2676 = vcombine.high %v2656, %v2672
      %2679 = vrot.lane.b32.xlu0 %v518, 96
      %v2680 = vpop.permute.xlu0 %2679
      %2681 = vrot.lane.b32.xlu0 %v522, 96
      %v2682 = vpop.permute.xlu0 %2681
      %2685 = vrot.lane.b32.xlu0 %v518, 64
      %v2686 = vpop.permute.xlu0 %2685
      %2687 = vrot.lane.b32.xlu0 %v522, 64
      %v2688 = vpop.permute.xlu0 %2687
      %2691 = vrot.lane.b32.xlu0 %v518, 32
      %v2692 = vpop.permute.xlu0 %2691
      %2693 = vrot.lane.b32.xlu0 %v522, 32
      %v2694 = vpop.permute.xlu0 %2693
      %v2697 = vcombine.low %v518, %v2686
      %v2698 = vcombine.high %v518, %v2686
      %v2700 = vunpack.c.l.s4 1983009808
      %v2701 = vunpack.c.0.s8 %v2700
      %v2702 = vlaneseq
      %v2703 = vshrl.u32 %v2702, 7
      %v2704 = vsub.s32 %v2701, %v2703
      %v2705 = vrot.slane %v2697, %v2704
      %v2707 = vunpack.c.l.s4 1983009808
      %v2708 = vunpack.c.0.s8 %v2707
      %v2709 = vlaneseq
      %v2710 = vshrl.u32 %v2709, 7
      %v2711 = vsub.s32 %v2708, %v2710
      %v2712 = vrot.slane %v2698, %v2711
      %v2713 = vcombine.low %v2680, %v2692
      %v2714 = vcombine.high %v2680, %v2692
      %v2716 = vunpack.c.l.s4 1983009808
      %v2717 = vunpack.c.0.s8 %v2716
      %v2718 = vlaneseq
      %v2719 = vshrl.u32 %v2718, 7
      %v2720 = vsub.s32 %v2717, %v2719
      %v2721 = vrot.slane %v2713, %v2720
      %v2723 = vunpack.c.l.s4 1983009808
      %v2724 = vunpack.c.0.s8 %v2723
      %v2725 = vlaneseq
      %v2726 = vshrl.u32 %v2725, 7
      %v2727 = vsub.s32 %v2724, %v2726
      %v2728 = vrot.slane %v2714, %v2727
      %v2729 = vcombine.low %v2705, %v2721
      %v2730 = vcombine.high %v2705, %v2721
      %v2732 = vunpack.c.l.s4 1934713408
      %v2733 = vunpack.c.0.s8 %v2732
      %v2734 = vlaneseq
      %v2735 = vshrl.u32 %v2734, 7
      %v2736 = vsub.s32 %v2733, %v2735
      %v2737 = vrot.slane %v2729, %v2736
      %v2739 = vunpack.c.l.s4 1934713408
      %v2740 = vunpack.c.0.s8 %v2739
      %v2741 = vlaneseq
      %v2742 = vshrl.u32 %v2741, 7
      %v2743 = vsub.s32 %v2740, %v2742
      %v2744 = vrot.slane %v2730, %v2743
      %v2745 = vcombine.low %v2712, %v2728
      %v2746 = vcombine.high %v2712, %v2728
      %v2748 = vunpack.c.l.s4 1934713408
      %v2749 = vunpack.c.0.s8 %v2748
      %v2750 = vlaneseq
      %v2751 = vshrl.u32 %v2750, 7
      %v2752 = vsub.s32 %v2749, %v2751
      %v2753 = vrot.slane %v2745, %v2752
      %v2755 = vunpack.c.l.s4 1934713408
      %v2756 = vunpack.c.0.s8 %v2755
      %v2757 = vlaneseq
      %v2758 = vshrl.u32 %v2757, 7
      %v2759 = vsub.s32 %v2756, %v2758
      %v2760 = vrot.slane %v2746, %v2759
      %v2761 = vcombine.high %v2737, 0.0
      %v2762 = vcombine.high %v2744, 0.0
      %v2763 = vcombine.high %v2753, 0.0
      %v2764 = vcombine.high %v2760, 0.0
      %v2765 = vcombine.low %v522, %v2688
      %v2766 = vcombine.high %v522, %v2688
      %v2768 = vunpack.c.l.s4 1983009808
      %v2769 = vunpack.c.0.s8 %v2768
      %v2770 = vlaneseq
      %v2771 = vshrl.u32 %v2770, 7
      %v2772 = vsub.s32 %v2769, %v2771
      %v2773 = vrot.slane %v2765, %v2772
      %v2775 = vunpack.c.l.s4 1983009808
      %v2776 = vunpack.c.0.s8 %v2775
      %v2777 = vlaneseq
      %v2778 = vshrl.u32 %v2777, 7
      %v2779 = vsub.s32 %v2776, %v2778
      %v2780 = vrot.slane %v2766, %v2779
      %v2781 = vcombine.low %v2682, %v2694
      %v2782 = vcombine.high %v2682, %v2694
      %v2784 = vunpack.c.l.s4 1983009808
      %v2785 = vunpack.c.0.s8 %v2784
      %v2786 = vlaneseq
      %v2787 = vshrl.u32 %v2786, 7
      %v2788 = vsub.s32 %v2785, %v2787
      %v2789 = vrot.slane %v2781, %v2788
      %v2791 = vunpack.c.l.s4 1983009808
      %v2792 = vunpack.c.0.s8 %v2791
      %v2793 = vlaneseq
      %v2794 = vshrl.u32 %v2793, 7
      %v2795 = vsub.s32 %v2792, %v2794
      %v2796 = vrot.slane %v2782, %v2795
      %v2797 = vcombine.low %v2773, %v2789
      %v2798 = vcombine.high %v2773, %v2789
      %v2800 = vunpack.c.l.s4 1934713408
      %v2801 = vunpack.c.0.s8 %v2800
      %v2802 = vlaneseq
      %v2803 = vshrl.u32 %v2802, 7
      %v2804 = vsub.s32 %v2801, %v2803
      %v2805 = vrot.slane %v2797, %v2804
      %v2807 = vunpack.c.l.s4 1934713408
      %v2808 = vunpack.c.0.s8 %v2807
      %v2809 = vlaneseq
      %v2810 = vshrl.u32 %v2809, 7
      %v2811 = vsub.s32 %v2808, %v2810
      %v2812 = vrot.slane %v2798, %v2811
      %v2813 = vcombine.low %v2780, %v2796
      %v2814 = vcombine.high %v2780, %v2796
      %v2816 = vunpack.c.l.s4 1934713408
      %v2817 = vunpack.c.0.s8 %v2816
      %v2818 = vlaneseq
      %v2819 = vshrl.u32 %v2818, 7
      %v2820 = vsub.s32 %v2817, %v2819
      %v2821 = vrot.slane %v2813, %v2820
      %v2823 = vunpack.c.l.s4 1934713408
      %v2824 = vunpack.c.0.s8 %v2823
      %v2825 = vlaneseq
      %v2826 = vshrl.u32 %v2825, 7
      %v2827 = vsub.s32 %v2824, %v2826
      %v2828 = vrot.slane %v2814, %v2827
      %v2829 = vcombine.high %v2805, 0.0
      %v2830 = vcombine.high %v2812, 0.0
      %v2831 = vcombine.high %v2821, 0.0
      %v2832 = vcombine.high %v2828, 0.0
      %v2833 = vcombine.low %v2737, %v2744
      %v2835 = vunpack.c.l.s4 1983009808
      %v2836 = vunpack.c.0.s8 %v2835
      %v2837 = vlaneseq
      %v2838 = vshrl.u32 %v2837, 7
      %v2839 = vsub.s32 %v2836, %v2838
      %v2840 = vrot.slane %v2833, %v2839
      %v2841 = vcombine.low %v2761, %v2762
      %v2843 = vunpack.c.l.s4 1983009808
      %v2844 = vunpack.c.0.s8 %v2843
      %v2845 = vlaneseq
      %v2846 = vshrl.u32 %v2845, 7
      %v2847 = vsub.s32 %v2844, %v2846
      %v2848 = vrot.slane %v2841, %v2847
      %v2849 = vcombine.low %v2753, %v2760
      %v2851 = vunpack.c.l.s4 1983009808
      %v2852 = vunpack.c.0.s8 %v2851
      %v2853 = vlaneseq
      %v2854 = vshrl.u32 %v2853, 7
      %v2855 = vsub.s32 %v2852, %v2854
      %v2856 = vrot.slane %v2849, %v2855
      %v2857 = vcombine.low %v2763, %v2764
      %v2859 = vunpack.c.l.s4 1983009808
      %v2860 = vunpack.c.0.s8 %v2859
      %v2861 = vlaneseq
      %v2862 = vshrl.u32 %v2861, 7
      %v2863 = vsub.s32 %v2860, %v2862
      %v2864 = vrot.slane %v2857, %v2863
      %v2865 = vcombine.low %v2840, %v2848
      %v2866 = vcombine.high %v2840, %v2848
      %v2868 = vunpack.c.l.s4 1934713408
      %v2869 = vunpack.c.0.s8 %v2868
      %v2870 = vlaneseq
      %v2871 = vshrl.u32 %v2870, 7
      %v2872 = vsub.s32 %v2869, %v2871
      %v2873 = vrot.slane %v2865, %v2872
      %v2875 = vunpack.c.l.s4 1934713408
      %v2876 = vunpack.c.0.s8 %v2875
      %v2877 = vlaneseq
      %v2878 = vshrl.u32 %v2877, 7
      %v2879 = vsub.s32 %v2876, %v2878
      %v2880 = vrot.slane %v2866, %v2879
      %v2881 = vcombine.low %v2856, %v2864
      %v2882 = vcombine.high %v2856, %v2864
      %v2884 = vunpack.c.l.s4 1934713408
      %v2885 = vunpack.c.0.s8 %v2884
      %v2886 = vlaneseq
      %v2887 = vshrl.u32 %v2886, 7
      %v2888 = vsub.s32 %v2885, %v2887
      %v2889 = vrot.slane %v2881, %v2888
      %v2891 = vunpack.c.l.s4 1934713408
      %v2892 = vunpack.c.0.s8 %v2891
      %v2893 = vlaneseq
      %v2894 = vshrl.u32 %v2893, 7
      %v2895 = vsub.s32 %v2892, %v2894
      %v2896 = vrot.slane %v2882, %v2895
      %v2897 = vcombine.low %v2873, %v2889
      %v2898 = vcombine.high %v2873, %v2889
      %v2899 = vcombine.low %v2880, %v2896
      %v2900 = vcombine.high %v2880, %v2896
      %v2901 = vcombine.low %v2805, %v2812
      %v2903 = vunpack.c.l.s4 1983009808
      %v2904 = vunpack.c.0.s8 %v2903
      %v2905 = vlaneseq
      %v2906 = vshrl.u32 %v2905, 7
      %v2907 = vsub.s32 %v2904, %v2906
      %v2908 = vrot.slane %v2901, %v2907
      %v2909 = vcombine.low %v2829, %v2830
      %v2911 = vunpack.c.l.s4 1983009808
      %v2912 = vunpack.c.0.s8 %v2911
      %v2913 = vlaneseq
      %v2914 = vshrl.u32 %v2913, 7
      %v2915 = vsub.s32 %v2912, %v2914
      %v2916 = vrot.slane %v2909, %v2915
      %v2917 = vcombine.low %v2821, %v2828
      %v2919 = vunpack.c.l.s4 1983009808
      %v2920 = vunpack.c.0.s8 %v2919
      %v2921 = vlaneseq
      %v2922 = vshrl.u32 %v2921, 7
      %v2923 = vsub.s32 %v2920, %v2922
      %v2924 = vrot.slane %v2917, %v2923
      %v2925 = vcombine.low %v2831, %v2832
      %v2927 = vunpack.c.l.s4 1983009808
      %v2928 = vunpack.c.0.s8 %v2927
      %v2929 = vlaneseq
      %v2930 = vshrl.u32 %v2929, 7
      %v2931 = vsub.s32 %v2928, %v2930
      %v2932 = vrot.slane %v2925, %v2931
      %v2933 = vcombine.low %v2908, %v2916
      %v2934 = vcombine.high %v2908, %v2916
      %v2936 = vunpack.c.l.s4 1934713408
      %v2937 = vunpack.c.0.s8 %v2936
      %v2938 = vlaneseq
      %v2939 = vshrl.u32 %v2938, 7
      %v2940 = vsub.s32 %v2937, %v2939
      %v2941 = vrot.slane %v2933, %v2940
      %v2943 = vunpack.c.l.s4 1934713408
      %v2944 = vunpack.c.0.s8 %v2943
      %v2945 = vlaneseq
      %v2946 = vshrl.u32 %v2945, 7
      %v2947 = vsub.s32 %v2944, %v2946
      %v2948 = vrot.slane %v2934, %v2947
      %v2949 = vcombine.low %v2924, %v2932
      %v2950 = vcombine.high %v2924, %v2932
      %v2952 = vunpack.c.l.s4 1934713408
      %v2953 = vunpack.c.0.s8 %v2952
      %v2954 = vlaneseq
      %v2955 = vshrl.u32 %v2954, 7
      %v2956 = vsub.s32 %v2953, %v2955
      %v2957 = vrot.slane %v2949, %v2956
      %v2959 = vunpack.c.l.s4 1934713408
      %v2960 = vunpack.c.0.s8 %v2959
      %v2961 = vlaneseq
      %v2962 = vshrl.u32 %v2961, 7
      %v2963 = vsub.s32 %v2960, %v2962
      %v2964 = vrot.slane %v2950, %v2963
      %v2965 = vcombine.low %v2941, %v2957
      %v2966 = vcombine.high %v2941, %v2957
      %v2967 = vcombine.low %v2948, %v2964
      %v2968 = vcombine.high %v2948, %v2964
      %2971 = vrot.lane.b32.xlu0 %v567, 96
      %v2972 = vpop.permute.xlu0 %2971
      %2973 = vrot.lane.b32.xlu0 %v570, 96
      %v2974 = vpop.permute.xlu0 %2973
      %2977 = vrot.lane.b32.xlu0 %v567, 64
      %v2978 = vpop.permute.xlu0 %2977
      %2979 = vrot.lane.b32.xlu0 %v570, 64
      %v2980 = vpop.permute.xlu0 %2979
      %2983 = vrot.lane.b32.xlu0 %v567, 32
      %v2984 = vpop.permute.xlu0 %2983
      %2985 = vrot.lane.b32.xlu0 %v570, 32
      %v2986 = vpop.permute.xlu0 %2985
      %v2989 = vcombine.low %v567, %v2978
      %v2990 = vcombine.high %v567, %v2978
      %v2992 = vunpack.c.l.s4 1983009808
      %v2993 = vunpack.c.0.s8 %v2992
      %v2994 = vlaneseq
      %v2995 = vshrl.u32 %v2994, 7
      %v2996 = vsub.s32 %v2993, %v2995
      %v2997 = vrot.slane %v2989, %v2996
      %v2999 = vunpack.c.l.s4 1983009808
      %v3000 = vunpack.c.0.s8 %v2999
      %v3001 = vlaneseq
      %v3002 = vshrl.u32 %v3001, 7
      %v3003 = vsub.s32 %v3000, %v3002
      %v3004 = vrot.slane %v2990, %v3003
      %v3005 = vcombine.low %v2972, %v2984
      %v3006 = vcombine.high %v2972, %v2984
      %v3008 = vunpack.c.l.s4 1983009808
      %v3009 = vunpack.c.0.s8 %v3008
      %v3010 = vlaneseq
      %v3011 = vshrl.u32 %v3010, 7
      %v3012 = vsub.s32 %v3009, %v3011
      %v3013 = vrot.slane %v3005, %v3012
      %v3015 = vunpack.c.l.s4 1983009808
      %v3016 = vunpack.c.0.s8 %v3015
      %v3017 = vlaneseq
      %v3018 = vshrl.u32 %v3017, 7
      %v3019 = vsub.s32 %v3016, %v3018
      %v3020 = vrot.slane %v3006, %v3019
      %v3021 = vcombine.low %v2997, %v3013
      %v3022 = vcombine.high %v2997, %v3013
      %v3024 = vunpack.c.l.s4 1934713408
      %v3025 = vunpack.c.0.s8 %v3024
      %v3026 = vlaneseq
      %v3027 = vshrl.u32 %v3026, 7
      %v3028 = vsub.s32 %v3025, %v3027
      %v3029 = vrot.slane %v3021, %v3028
      %v3031 = vunpack.c.l.s4 1934713408
      %v3032 = vunpack.c.0.s8 %v3031
      %v3033 = vlaneseq
      %v3034 = vshrl.u32 %v3033, 7
      %v3035 = vsub.s32 %v3032, %v3034
      %v3036 = vrot.slane %v3022, %v3035
      %v3037 = vcombine.low %v3004, %v3020
      %v3038 = vcombine.high %v3004, %v3020
      %v3040 = vunpack.c.l.s4 1934713408
      %v3041 = vunpack.c.0.s8 %v3040
      %v3042 = vlaneseq
      %v3043 = vshrl.u32 %v3042, 7
      %v3044 = vsub.s32 %v3041, %v3043
      %v3045 = vrot.slane %v3037, %v3044
      %v3047 = vunpack.c.l.s4 1934713408
      %v3048 = vunpack.c.0.s8 %v3047
      %v3049 = vlaneseq
      %v3050 = vshrl.u32 %v3049, 7
      %v3051 = vsub.s32 %v3048, %v3050
      %v3052 = vrot.slane %v3038, %v3051
      %v3053 = vcombine.high %v3029, 0.0
      %v3054 = vcombine.high %v3036, 0.0
      %v3055 = vcombine.high %v3045, 0.0
      %v3056 = vcombine.high %v3052, 0.0
      %v3057 = vcombine.low %v570, %v2980
      %v3058 = vcombine.high %v570, %v2980
      %v3060 = vunpack.c.l.s4 1983009808
      %v3061 = vunpack.c.0.s8 %v3060
      %v3062 = vlaneseq
      %v3063 = vshrl.u32 %v3062, 7
      %v3064 = vsub.s32 %v3061, %v3063
      %v3065 = vrot.slane %v3057, %v3064
      %v3067 = vunpack.c.l.s4 1983009808
      %v3068 = vunpack.c.0.s8 %v3067
      %v3069 = vlaneseq
      %v3070 = vshrl.u32 %v3069, 7
      %v3071 = vsub.s32 %v3068, %v3070
      %v3072 = vrot.slane %v3058, %v3071
      %v3073 = vcombine.low %v2974, %v2986
      %v3074 = vcombine.high %v2974, %v2986
      %v3076 = vunpack.c.l.s4 1983009808
      %v3077 = vunpack.c.0.s8 %v3076
      %v3078 = vlaneseq
      %v3079 = vshrl.u32 %v3078, 7
      %v3080 = vsub.s32 %v3077, %v3079
      %v3081 = vrot.slane %v3073, %v3080
      %v3083 = vunpack.c.l.s4 1983009808
      %v3084 = vunpack.c.0.s8 %v3083
      %v3085 = vlaneseq
      %v3086 = vshrl.u32 %v3085, 7
      %v3087 = vsub.s32 %v3084, %v3086
      %v3088 = vrot.slane %v3074, %v3087
      %v3089 = vcombine.low %v3065, %v3081
      %v3090 = vcombine.high %v3065, %v3081
      %v3092 = vunpack.c.l.s4 1934713408
      %v3093 = vunpack.c.0.s8 %v3092
      %v3094 = vlaneseq
      %v3095 = vshrl.u32 %v3094, 7
      %v3096 = vsub.s32 %v3093, %v3095
      %v3097 = vrot.slane %v3089, %v3096
      %v3099 = vunpack.c.l.s4 1934713408
      %v3100 = vunpack.c.0.s8 %v3099
      %v3101 = vlaneseq
      %v3102 = vshrl.u32 %v3101, 7
      %v3103 = vsub.s32 %v3100, %v3102
      %v3104 = vrot.slane %v3090, %v3103
      %v3105 = vcombine.low %v3072, %v3088
      %v3106 = vcombine.high %v3072, %v3088
      %v3108 = vunpack.c.l.s4 1934713408
      %v3109 = vunpack.c.0.s8 %v3108
      %v3110 = vlaneseq
      %v3111 = vshrl.u32 %v3110, 7
      %v3112 = vsub.s32 %v3109, %v3111
      %v3113 = vrot.slane %v3105, %v3112
      %v3115 = vunpack.c.l.s4 1934713408
      %v3116 = vunpack.c.0.s8 %v3115
      %v3117 = vlaneseq
      %v3118 = vshrl.u32 %v3117, 7
      %v3119 = vsub.s32 %v3116, %v3118
      %v3120 = vrot.slane %v3106, %v3119
      %v3121 = vcombine.high %v3097, 0.0
      %v3122 = vcombine.high %v3104, 0.0
      %v3123 = vcombine.high %v3113, 0.0
      %v3124 = vcombine.high %v3120, 0.0
      %v3125 = vcombine.low %v3029, %v3036
      %v3127 = vunpack.c.l.s4 1983009808
      %v3128 = vunpack.c.0.s8 %v3127
      %v3129 = vlaneseq
      %v3130 = vshrl.u32 %v3129, 7
      %v3131 = vsub.s32 %v3128, %v3130
      %v3132 = vrot.slane %v3125, %v3131
      %v3133 = vcombine.low %v3053, %v3054
      %v3135 = vunpack.c.l.s4 1983009808
      %v3136 = vunpack.c.0.s8 %v3135
      %v3137 = vlaneseq
      %v3138 = vshrl.u32 %v3137, 7
      %v3139 = vsub.s32 %v3136, %v3138
      %v3140 = vrot.slane %v3133, %v3139
      %v3141 = vcombine.low %v3045, %v3052
      %v3143 = vunpack.c.l.s4 1983009808
      %v3144 = vunpack.c.0.s8 %v3143
      %v3145 = vlaneseq
      %v3146 = vshrl.u32 %v3145, 7
      %v3147 = vsub.s32 %v3144, %v3146
      %v3148 = vrot.slane %v3141, %v3147
      %v3149 = vcombine.low %v3055, %v3056
      %v3151 = vunpack.c.l.s4 1983009808
      %v3152 = vunpack.c.0.s8 %v3151
      %v3153 = vlaneseq
      %v3154 = vshrl.u32 %v3153, 7
      %v3155 = vsub.s32 %v3152, %v3154
      %v3156 = vrot.slane %v3149, %v3155
      %v3157 = vcombine.low %v3132, %v3140
      %v3158 = vcombine.high %v3132, %v3140
      %v3160 = vunpack.c.l.s4 1934713408
      %v3161 = vunpack.c.0.s8 %v3160
      %v3162 = vlaneseq
      %v3163 = vshrl.u32 %v3162, 7
      %v3164 = vsub.s32 %v3161, %v3163
      %v3165 = vrot.slane %v3157, %v3164
      %v3167 = vunpack.c.l.s4 1934713408
      %v3168 = vunpack.c.0.s8 %v3167
      %v3169 = vlaneseq
      %v3170 = vshrl.u32 %v3169, 7
      %v3171 = vsub.s32 %v3168, %v3170
      %v3172 = vrot.slane %v3158, %v3171
      %v3173 = vcombine.low %v3148, %v3156
      %v3174 = vcombine.high %v3148, %v3156
      %v3176 = vunpack.c.l.s4 1934713408
      %v3177 = vunpack.c.0.s8 %v3176
      %v3178 = vlaneseq
      %v3179 = vshrl.u32 %v3178, 7
      %v3180 = vsub.s32 %v3177, %v3179
      %v3181 = vrot.slane %v3173, %v3180
      %v3183 = vunpack.c.l.s4 1934713408
      %v3184 = vunpack.c.0.s8 %v3183
      %v3185 = vlaneseq
      %v3186 = vshrl.u32 %v3185, 7
      %v3187 = vsub.s32 %v3184, %v3186
      %v3188 = vrot.slane %v3174, %v3187
      %v3189 = vcombine.low %v3165, %v3181
      %v3190 = vcombine.high %v3165, %v3181
      %v3191 = vcombine.low %v3172, %v3188
      %v3192 = vcombine.high %v3172, %v3188
      %v3193 = vcombine.low %v3097, %v3104
      %v3195 = vunpack.c.l.s4 1983009808
      %v3196 = vunpack.c.0.s8 %v3195
      %v3197 = vlaneseq
      %v3198 = vshrl.u32 %v3197, 7
      %v3199 = vsub.s32 %v3196, %v3198
      %v3200 = vrot.slane %v3193, %v3199
      %v3201 = vcombine.low %v3121, %v3122
      %v3203 = vunpack.c.l.s4 1983009808
      %v3204 = vunpack.c.0.s8 %v3203
      %v3205 = vlaneseq
      %v3206 = vshrl.u32 %v3205, 7
      %v3207 = vsub.s32 %v3204, %v3206
      %v3208 = vrot.slane %v3201, %v3207
      %v3209 = vcombine.low %v3113, %v3120
      %v3211 = vunpack.c.l.s4 1983009808
      %v3212 = vunpack.c.0.s8 %v3211
      %v3213 = vlaneseq
      %v3214 = vshrl.u32 %v3213, 7
      %v3215 = vsub.s32 %v3212, %v3214
      %v3216 = vrot.slane %v3209, %v3215
      %v3217 = vcombine.low %v3123, %v3124
      %v3219 = vunpack.c.l.s4 1983009808
      %v3220 = vunpack.c.0.s8 %v3219
      %v3221 = vlaneseq
      %v3222 = vshrl.u32 %v3221, 7
      %v3223 = vsub.s32 %v3220, %v3222
      %v3224 = vrot.slane %v3217, %v3223
      %v3225 = vcombine.low %v3200, %v3208
      %v3226 = vcombine.high %v3200, %v3208
      %v3228 = vunpack.c.l.s4 1934713408
      %v3229 = vunpack.c.0.s8 %v3228
      %v3230 = vlaneseq
      %v3231 = vshrl.u32 %v3230, 7
      %v3232 = vsub.s32 %v3229, %v3231
      %v3233 = vrot.slane %v3225, %v3232
      %v3235 = vunpack.c.l.s4 1934713408
      %v3236 = vunpack.c.0.s8 %v3235
      %v3237 = vlaneseq
      %v3238 = vshrl.u32 %v3237, 7
      %v3239 = vsub.s32 %v3236, %v3238
      %v3240 = vrot.slane %v3226, %v3239
      %v3241 = vcombine.low %v3216, %v3224
      %v3242 = vcombine.high %v3216, %v3224
      %v3244 = vunpack.c.l.s4 1934713408
      %v3245 = vunpack.c.0.s8 %v3244
      %v3246 = vlaneseq
      %v3247 = vshrl.u32 %v3246, 7
      %v3248 = vsub.s32 %v3245, %v3247
      %v3249 = vrot.slane %v3241, %v3248
      %v3251 = vunpack.c.l.s4 1934713408
      %v3252 = vunpack.c.0.s8 %v3251
      %v3253 = vlaneseq
      %v3254 = vshrl.u32 %v3253, 7
      %v3255 = vsub.s32 %v3252, %v3254
      %v3256 = vrot.slane %v3242, %v3255
      %v3257 = vcombine.low %v3233, %v3249
      %v3258 = vcombine.high %v3233, %v3249
      %v3259 = vcombine.low %v3240, %v3256
      %v3260 = vcombine.high %v3240, %v3256
      %v3261 = vpack.c.bf16 %v2673, %v2605
      %v3262 = vpack.c.bf16 %v2674, %v2606
      %v3263 = vpack.c.bf16 %v2675, %v2607
      %v3264 = vpack.c.bf16 %v2676, %v2608
      %v3265 = vpack.c.bf16 %v2965, %v2897
      %v3266 = vpack.c.bf16 %v2966, %v2898
      %v3267 = vpack.c.bf16 %v2967, %v2899
      %v3268 = vpack.c.bf16 %v2968, %v2900
      %v3270 = vsel %vm1461, %v3261, 0
      %v3273 = vsel %vm1461, %v3265, 0
      %3275 = vmatprep.subr.bf16.mxu0 0
      %3276 = vmatpush1.bf16.xpose.msra.mxu0 %v3273
      %3277 = vmatprep.subr.bf16.mxu0 0
      %3278 = vmatpush1.bf16.xpose.msra.mxu0 0
      %3279 = vmatprep.subr.bf16.mxu0 0
      %3280 = vmatpush1.bf16.xpose.msra.mxu0 0
      %3281 = vmatprep.subr.bf16.mxu0 0
      %3282 = vmatpush1.bf16.xpose.msra.mxu0 0
      %3283 = vmatprep.subr.bf16.mxu0 0
      %3284 = vmatpush1.bf16.xpose.msra.mxu0 0
      %3285 = vmatprep.subr.bf16.mxu0 0
      %3286 = vmatpush1.bf16.xpose.msra.mxu0 0
      %3287 = vmatprep.subr.bf16.mxu0 0
      %3288 = vmatpush1.bf16.xpose.msra.mxu0 0
      %3289 = vmatprep.subr.bf16.mxu0 0
      %3290 = vmatpush1.bf16.xpose.msra.mxu0 0
      %3291 = vmatprep.subr.bf16.mxu0 0
      %3292 = vmatpush1.bf16.xpose.msra.mxu0 0
      %3293 = vmatprep.subr.bf16.mxu0 0
      %3294 = vmatpush1.bf16.xpose.msra.mxu0 0
      %3295 = vmatprep.subr.bf16.mxu0 0
      %3296 = vmatpush1.bf16.xpose.msra.mxu0 0
      %3297 = vmatprep.subr.bf16.mxu0 0
      %3298 = vmatpush1.bf16.xpose.msra.mxu0 0
      %3299 = vmatprep.subr.bf16.mxu0 0
      %3300 = vmatpush1.bf16.xpose.msra.mxu0 0
      %3301 = vmatprep.subr.bf16.mxu0 0
      %3302 = vmatpush1.bf16.xpose.msra.mxu0 0
      %3303 = vmatprep.subr.bf16.mxu0 0
      %3304 = vmatpush1.bf16.xpose.msra.mxu0 0
      %3305 = vmatprep.subr.bf16.mxu0 0
      %3306 = vmatpush1.bf16.xpose.msra.mxu0 0
      %3307 = vmatprep.mubr.bf16.mxu0 0
      %3308 = vmatmul.mubr.bf16.gmra.mrb[0].mxu0 %v3270
      %v3309 = vpop.f32.mrb[0].mxu0
      %v3310 = vadd.f32 0.0, %v3309
      %v3311 = vpop.f32.mrb[0].mxu0
      %v3312 = vpop.f32.mrb[0].mxu0
      %v3313 = vadd.f32 0.0, %v3312
      %v3314 = vpop.f32.mrb[0].mxu0
      %3315 = vdwg.mxu0
      %v3317 = vsel %vm1461, %v3262, 0
      %v3320 = vsel %vm1461, %v3266, 0
      %3322 = vmatprep.subr.bf16.mxu0 0
      %3323 = vmatpush1.bf16.xpose.msra.mxu0 %v3320
      %3324 = vmatprep.subr.bf16.mxu0 0
      %3325 = vmatpush1.bf16.xpose.msra.mxu0 0
      %3326 = vmatprep.subr.bf16.mxu0 0
      %3327 = vmatpush1.bf16.xpose.msra.mxu0 0
      %3328 = vmatprep.subr.bf16.mxu0 0
      %3329 = vmatpush1.bf16.xpose.msra.mxu0 0
      %3330 = vmatprep.subr.bf16.mxu0 0
      %3331 = vmatpush1.bf16.xpose.msra.mxu0 0
      %3332 = vmatprep.subr.bf16.mxu0 0
      %3333 = vmatpush1.bf16.xpose.msra.mxu0 0
      %3334 = vmatprep.subr.bf16.mxu0 0
      %3335 = vmatpush1.bf16.xpose.msra.mxu0 0
      %3336 = vmatprep.subr.bf16.mxu0 0
      %3337 = vmatpush1.bf16.xpose.msra.mxu0 0
      %3338 = vmatprep.subr.bf16.mxu0 0
      %3339 = vmatpush1.bf16.xpose.msra.mxu0 0
      %3340 = vmatprep.subr.bf16.mxu0 0
      %3341 = vmatpush1.bf16.xpose.msra.mxu0 0
      %3342 = vmatprep.subr.bf16.mxu0 0
      %3343 = vmatpush1.bf16.xpose.msra.mxu0 0
      %3344 = vmatprep.subr.bf16.mxu0 0
      %3345 = vmatpush1.bf16.xpose.msra.mxu0 0
      %3346 = vmatprep.subr.bf16.mxu0 0
      %3347 = vmatpush1.bf16.xpose.msra.mxu0 0
      %3348 = vmatprep.subr.bf16.mxu0 0
      %3349 = vmatpush1.bf16.xpose.msra.mxu0 0
      %3350 = vmatprep.subr.bf16.mxu0 0
      %3351 = vmatpush1.bf16.xpose.msra.mxu0 0
      %3352 = vmatprep.subr.bf16.mxu0 0
      %3353 = vmatpush1.bf16.xpose.msra.mxu0 0
      %3354 = vmatprep.mubr.bf16.mxu0 0
      %3355 = vmatmul.mubr.bf16.gmra.mrb[0].mxu0 %v3317
      %v3356 = vpop.f32.mrb[0].mxu0
      %v3357 = vadd.f32 0.0, %v3356
      %v3358 = vpop.f32.mrb[0].mxu0
      %v3359 = vpop.f32.mrb[0].mxu0
      %v3360 = vadd.f32 0.0, %v3359
      %v3361 = vpop.f32.mrb[0].mxu0
      %3362 = vdwg.mxu0
      %v3364 = vsel %vm1461, %v3263, 0
      %v3367 = vsel %vm1461, %v3267, 0
      %3369 = vmatprep.subr.bf16.mxu0 0
      %3370 = vmatpush1.bf16.xpose.msra.mxu0 %v3367
      %3371 = vmatprep.subr.bf16.mxu0 0
      %3372 = vmatpush1.bf16.xpose.msra.mxu0 0
      %3373 = vmatprep.subr.bf16.mxu0 0
      %3374 = vmatpush1.bf16.xpose.msra.mxu0 0
      %3375 = vmatprep.subr.bf16.mxu0 0
      %3376 = vmatpush1.bf16.xpose.msra.mxu0 0
      %3377 = vmatprep.subr.bf16.mxu0 0
      %3378 = vmatpush1.bf16.xpose.msra.mxu0 0
      %3379 = vmatprep.subr.bf16.mxu0 0
      %3380 = vmatpush1.bf16.xpose.msra.mxu0 0
      %3381 = vmatprep.subr.bf16.mxu0 0
      %3382 = vmatpush1.bf16.xpose.msra.mxu0 0
      %3383 = vmatprep.subr.bf16.mxu0 0
      %3384 = vmatpush1.bf16.xpose.msra.mxu0 0
      %3385 = vmatprep.subr.bf16.mxu0 0
      %3386 = vmatpush1.bf16.xpose.msra.mxu0 0
      %3387 = vmatprep.subr.bf16.mxu0 0
      %3388 = vmatpush1.bf16.xpose.msra.mxu0 0
      %3389 = vmatprep.subr.bf16.mxu0 0
      %3390 = vmatpush1.bf16.xpose.msra.mxu0 0
      %3391 = vmatprep.subr.bf16.mxu0 0
      %3392 = vmatpush1.bf16.xpose.msra.mxu0 0
      %3393 = vmatprep.subr.bf16.mxu0 0
      %3394 = vmatpush1.bf16.xpose.msra.mxu0 0
      %3395 = vmatprep.subr.bf16.mxu0 0
      %3396 = vmatpush1.bf16.xpose.msra.mxu0 0
      %3397 = vmatprep.subr.bf16.mxu0 0
      %3398 = vmatpush1.bf16.xpose.msra.mxu0 0
      %3399 = vmatprep.subr.bf16.mxu0 0
      %3400 = vmatpush1.bf16.xpose.msra.mxu0 0
      %3401 = vmatprep.mubr.bf16.mxu0 0
      %3402 = vmatmul.mubr.bf16.gmra.mrb[0].mxu0 %v3364
      %v3403 = vpop.f32.mrb[0].mxu0
      %v3404 = vadd.f32 0.0, %v3403
      %v3405 = vpop.f32.mrb[0].mxu0
      %v3406 = vpop.f32.mrb[0].mxu0
      %v3407 = vadd.f32 0.0, %v3406
      %v3408 = vpop.f32.mrb[0].mxu0
      %3409 = vdwg.mxu0
      %v3411 = vsel %vm1461, %v3264, 0
      %v3414 = vsel %vm1461, %v3268, 0
      %3416 = vmatprep.subr.bf16.mxu0 0
      %3417 = vmatpush1.bf16.xpose.msra.mxu0 %v3414
      %3418 = vmatprep.subr.bf16.mxu0 0
      %3419 = vmatpush1.bf16.xpose.msra.mxu0 0
      %3420 = vmatprep.subr.bf16.mxu0 0
      %3421 = vmatpush1.bf16.xpose.msra.mxu0 0
      %3422 = vmatprep.subr.bf16.mxu0 0
      %3423 = vmatpush1.bf16.xpose.msra.mxu0 0
      %3424 = vmatprep.subr.bf16.mxu0 0
      %3425 = vmatpush1.bf16.xpose.msra.mxu0 0
      %3426 = vmatprep.subr.bf16.mxu0 0
      %3427 = vmatpush1.bf16.xpose.msra.mxu0 0
      %3428 = vmatprep.subr.bf16.mxu0 0
      %3429 = vmatpush1.bf16.xpose.msra.mxu0 0
      %3430 = vmatprep.subr.bf16.mxu0 0
      %3431 = vmatpush1.bf16.xpose.msra.mxu0 0
      %3432 = vmatprep.subr.bf16.mxu0 0
      %3433 = vmatpush1.bf16.xpose.msra.mxu0 0
      %3434 = vmatprep.subr.bf16.mxu0 0
      %3435 = vmatpush1.bf16.xpose.msra.mxu0 0
      %3436 = vmatprep.subr.bf16.mxu0 0
      %3437 = vmatpush1.bf16.xpose.msra.mxu0 0
      %3438 = vmatprep.subr.bf16.mxu0 0
      %3439 = vmatpush1.bf16.xpose.msra.mxu0 0
      %3440 = vmatprep.subr.bf16.mxu0 0
      %3441 = vmatpush1.bf16.xpose.msra.mxu0 0
      %3442 = vmatprep.subr.bf16.mxu0 0
      %3443 = vmatpush1.bf16.xpose.msra.mxu0 0
      %3444 = vmatprep.subr.bf16.mxu0 0
      %3445 = vmatpush1.bf16.xpose.msra.mxu0 0
      %3446 = vmatprep.subr.bf16.mxu0 0
      %3447 = vmatpush1.bf16.xpose.msra.mxu0 0
      %3448 = vmatprep.mubr.bf16.mxu0 0
      %3449 = vmatmul.mubr.bf16.gmra.mrb[0].mxu0 %v3411
      %v3450 = vpop.f32.mrb[0].mxu0
      %v3451 = vadd.f32 0.0, %v3450
      %v3452 = vpop.f32.mrb[0].mxu0
      %v3453 = vpop.f32.mrb[0].mxu0
      %v3454 = vadd.f32 0.0, %v3453
      %v3455 = vpop.f32.mrb[0].mxu0
      %3456 = vdwg.mxu0
      %v3457 = vsel %vm1650, %v3310, -inf
      %3458 = vmax.xlane.f32.xlu0 %v3457
      %v3459 = vpop.xlane.xlu0 %3458
      %v3460 = vsel %vm1650, %v3313, -inf
      %3461 = vmax.xlane.f32.xlu0 %v3460
      %v3462 = vpop.xlane.xlu0 %3461
      %v3463 = vsel %vm1650, %v3357, -inf
      %3464 = vmax.xlane.f32.xlu0 %v3463
      %v3465 = vpop.xlane.xlu0 %3464
      %v3466 = vsel %vm1650, %v3360, -inf
      %3467 = vmax.xlane.f32.xlu0 %v3466
      %v3468 = vpop.xlane.xlu0 %3467
      %v3469 = vsel %vm1650, %v3404, -inf
      %3470 = vmax.xlane.f32.xlu0 %v3469
      %v3471 = vpop.xlane.xlu0 %3470
      %v3472 = vsel %vm1650, %v3407, -inf
      %3473 = vmax.xlane.f32.xlu0 %v3472
      %v3474 = vpop.xlane.xlu0 %3473
      %v3475 = vsel %vm1650, %v3451, -inf
      %3476 = vmax.xlane.f32.xlu0 %v3475
      %v3477 = vpop.xlane.xlu0 %3476
      %v3478 = vsel %vm1650, %v3454, -inf
      %3479 = vmax.xlane.f32.xlu0 %v3478
      %v3480 = vpop.xlane.xlu0 %3479
      %v3481 = vsub.f32 %v3310, %v3459
      %v3482 = vsub.f32 %v3313, %v3462
      %v3483 = vsub.f32 %v3357, %v3465
      %v3484 = vsub.f32 %v3360, %v3468
      %v3485 = vsub.f32 %v3404, %v3471
      %v3486 = vsub.f32 %v3407, %v3474
      %v3487 = vsub.f32 %v3451, %v3477
      %v3488 = vsub.f32 %v3454, %v3480
      %v3489 = vmul.f32 %v3481, 1.442695
      %v3490 = vpow.pop %v3489
      %v3491 = vmul.f32 %v3482, 1.442695
      %v3492 = vpow.pop %v3491
      %v3493 = vmul.f32 %v3483, 1.442695
      %v3494 = vpow.pop %v3493
      %v3495 = vmul.f32 %v3484, 1.442695
      %v3496 = vpow.pop %v3495
      %v3497 = vmul.f32 %v3485, 1.442695
      %v3498 = vpow.pop %v3497
      %v3499 = vmul.f32 %v3486, 1.442695
      %v3500 = vpow.pop %v3499
      %v3501 = vmul.f32 %v3487, 1.442695
      %v3502 = vpow.pop %v3501
      %v3503 = vmul.f32 %v3488, 1.442695
      %v3504 = vpow.pop %v3503
      %v3505 = vsel %vm1650, %v3490, 0.0
      %3506 = vadd.xlane.f32.xlu0 %v3505
      %v3507 = vpop.xlane.xlu0 %3506
      %v3508 = vsel %vm1650, %v3492, 0.0
      %3509 = vadd.xlane.f32.xlu0 %v3508
      %v3510 = vpop.xlane.xlu0 %3509
      %v3511 = vsel %vm1650, %v3494, 0.0
      %3512 = vadd.xlane.f32.xlu0 %v3511
      %v3513 = vpop.xlane.xlu0 %3512
      %v3514 = vsel %vm1650, %v3496, 0.0
      %3515 = vadd.xlane.f32.xlu0 %v3514
      %v3516 = vpop.xlane.xlu0 %3515
      %v3517 = vsel %vm1650, %v3498, 0.0
      %3518 = vadd.xlane.f32.xlu0 %v3517
      %v3519 = vpop.xlane.xlu0 %3518
      %v3520 = vsel %vm1650, %v3500, 0.0
      %3521 = vadd.xlane.f32.xlu0 %v3520
      %v3522 = vpop.xlane.xlu0 %3521
      %v3523 = vsel %vm1650, %v3502, 0.0
      %3524 = vadd.xlane.f32.xlu0 %v3523
      %v3525 = vpop.xlane.xlu0 %3524
      %v3526 = vsel %vm1650, %v3504, 0.0
      %3527 = vadd.xlane.f32.xlu0 %v3526
      %v3528 = vpop.xlane.xlu0 %3527
      %v3529 = vpack.c.bf16 %v3492, %v3490
      %v3530 = vpack.c.bf16 %v3496, %v3494
      %v3531 = vpack.c.bf16 %v3500, %v3498
      %v3532 = vpack.c.bf16 %v3504, %v3502
      %v3533 = vpack.c.bf16 %v3257, %v3189
      %v3534 = vpack.c.bf16 %v3258, %v3190
      %v3535 = vpack.c.bf16 %v3259, %v3191
      %v3536 = vpack.c.bf16 %v3260, %v3192
      %v3538 = vsel %vm1650, %v3529, 0
      %3540 = vmatprep.subr.bf16.mxu0 0
      %3541 = vmatpush1.bf16.msra.mxu0 %v3533
      %3542 = vmatprep.subr.bf16.mxu0 0
      %3543 = vmatpush1.bf16.msra.mxu0 0
      %3544 = vmatprep.subr.bf16.mxu0 0
      %3545 = vmatpush1.bf16.msra.mxu0 0
      %3546 = vmatprep.subr.bf16.mxu0 0
      %3547 = vmatpush1.bf16.msra.mxu0 0
      %3548 = vmatprep.subr.bf16.mxu0 0
      %3549 = vmatpush1.bf16.msra.mxu0 0
      %3550 = vmatprep.subr.bf16.mxu0 0
      %3551 = vmatpush1.bf16.msra.mxu0 0
      %3552 = vmatprep.subr.bf16.mxu0 0
      %3553 = vmatpush1.bf16.msra.mxu0 0
      %3554 = vmatprep.subr.bf16.mxu0 0
      %3555 = vmatpush1.bf16.msra.mxu0 0
      %3556 = vmatprep.subr.bf16.mxu0 0
      %3557 = vmatpush1.bf16.msra.mxu0 0
      %3558 = vmatprep.subr.bf16.mxu0 0
      %3559 = vmatpush1.bf16.msra.mxu0 0
      %3560 = vmatprep.subr.bf16.mxu0 0
      %3561 = vmatpush1.bf16.msra.mxu0 0
      %3562 = vmatprep.subr.bf16.mxu0 0
      %3563 = vmatpush1.bf16.msra.mxu0 0
      %3564 = vmatprep.subr.bf16.mxu0 0
      %3565 = vmatpush1.bf16.msra.mxu0 0
      %3566 = vmatprep.subr.bf16.mxu0 0
      %3567 = vmatpush1.bf16.msra.mxu0 0
      %3568 = vmatprep.subr.bf16.mxu0 0
      %3569 = vmatpush1.bf16.msra.mxu0 0
      %3570 = vmatprep.subr.bf16.mxu0 0
      %3571 = vmatpush1.bf16.msra.mxu0 0
      %3572 = vmatprep.mubr.bf16.mxu0 0
      %3573 = vmatmul.mubr.bf16.gmra.mrb[0].mxu0 %v3538
      %v3574 = vpop.f32.mrb[0].mxu0
      %v3575 = vadd.f32 0.0, %v3574
      %v3576 = vpop.f32.mrb[0].mxu0
      %v3577 = vpop.f32.mrb[0].mxu0
      %v3578 = vadd.f32 0.0, %v3577
      %v3579 = vpop.f32.mrb[0].mxu0
      %3580 = vdwg.mxu0
      %v3582 = vsel %vm1650, %v3530, 0
      %3584 = vmatprep.subr.bf16.mxu0 0
      %3585 = vmatpush1.bf16.msra.mxu0 %v3534
      %3586 = vmatprep.subr.bf16.mxu0 0
      %3587 = vmatpush1.bf16.msra.mxu0 0
      %3588 = vmatprep.subr.bf16.mxu0 0
      %3589 = vmatpush1.bf16.msra.mxu0 0
      %3590 = vmatprep.subr.bf16.mxu0 0
      %3591 = vmatpush1.bf16.msra.mxu0 0
      %3592 = vmatprep.subr.bf16.mxu0 0
      %3593 = vmatpush1.bf16.msra.mxu0 0
      %3594 = vmatprep.subr.bf16.mxu0 0
      %3595 = vmatpush1.bf16.msra.mxu0 0
      %3596 = vmatprep.subr.bf16.mxu0 0
      %3597 = vmatpush1.bf16.msra.mxu0 0
      %3598 = vmatprep.subr.bf16.mxu0 0
      %3599 = vmatpush1.bf16.msra.mxu0 0
      %3600 = vmatprep.subr.bf16.mxu0 0
      %3601 = vmatpush1.bf16.msra.mxu0 0
      %3602 = vmatprep.subr.bf16.mxu0 0
      %3603 = vmatpush1.bf16.msra.mxu0 0
      %3604 = vmatprep.subr.bf16.mxu0 0
      %3605 = vmatpush1.bf16.msra.mxu0 0
      %3606 = vmatprep.subr.bf16.mxu0 0
      %3607 = vmatpush1.bf16.msra.mxu0 0
      %3608 = vmatprep.subr.bf16.mxu0 0
      %3609 = vmatpush1.bf16.msra.mxu0 0
      %3610 = vmatprep.subr.bf16.mxu0 0
      %3611 = vmatpush1.bf16.msra.mxu0 0
      %3612 = vmatprep.subr.bf16.mxu0 0
      %3613 = vmatpush1.bf16.msra.mxu0 0
      %3614 = vmatprep.subr.bf16.mxu0 0
      %3615 = vmatpush1.bf16.msra.mxu0 0
      %3616 = vmatprep.mubr.bf16.mxu0 0
      %3617 = vmatmul.mubr.bf16.gmra.mrb[0].mxu0 %v3582
      %v3618 = vpop.f32.mrb[0].mxu0
      %v3619 = vadd.f32 0.0, %v3618
      %v3620 = vpop.f32.mrb[0].mxu0
      %v3621 = vpop.f32.mrb[0].mxu0
      %v3622 = vadd.f32 0.0, %v3621
      %v3623 = vpop.f32.mrb[0].mxu0
      %3624 = vdwg.mxu0
      %v3626 = vsel %vm1650, %v3531, 0
      %3628 = vmatprep.subr.bf16.mxu0 0
      %3629 = vmatpush1.bf16.msra.mxu0 %v3535
      %3630 = vmatprep.subr.bf16.mxu0 0
      %3631 = vmatpush1.bf16.msra.mxu0 0
      %3632 = vmatprep.subr.bf16.mxu0 0
      %3633 = vmatpush1.bf16.msra.mxu0 0
      %3634 = vmatprep.subr.bf16.mxu0 0
      %3635 = vmatpush1.bf16.msra.mxu0 0
      %3636 = vmatprep.subr.bf16.mxu0 0
      %3637 = vmatpush1.bf16.msra.mxu0 0
      %3638 = vmatprep.subr.bf16.mxu0 0
      %3639 = vmatpush1.bf16.msra.mxu0 0
      %3640 = vmatprep.subr.bf16.mxu0 0
      %3641 = vmatpush1.bf16.msra.mxu0 0
      %3642 = vmatprep.subr.bf16.mxu0 0
      %3643 = vmatpush1.bf16.msra.mxu0 0
      %3644 = vmatprep.subr.bf16.mxu0 0
      %3645 = vmatpush1.bf16.msra.mxu0 0
      %3646 = vmatprep.subr.bf16.mxu0 0
      %3647 = vmatpush1.bf16.msra.mxu0 0
      %3648 = vmatprep.subr.bf16.mxu0 0
      %3649 = vmatpush1.bf16.msra.mxu0 0
      %3650 = vmatprep.subr.bf16.mxu0 0
      %3651 = vmatpush1.bf16.msra.mxu0 0
      %3652 = vmatprep.subr.bf16.mxu0 0
      %3653 = vmatpush1.bf16.msra.mxu0 0
      %3654 = vmatprep.subr.bf16.mxu0 0
      %3655 = vmatpush1.bf16.msra.mxu0 0
      %3656 = vmatprep.subr.bf16.mxu0 0
      %3657 = vmatpush1.bf16.msra.mxu0 0
      %3658 = vmatprep.subr.bf16.mxu0 0
      %3659 = vmatpush1.bf16.msra.mxu0 0
      %3660 = vmatprep.mubr.bf16.mxu0 0
      %3661 = vmatmul.mubr.bf16.gmra.mrb[0].mxu0 %v3626
      %v3662 = vpop.f32.mrb[0].mxu0
      %v3663 = vadd.f32 0.0, %v3662
      %v3664 = vpop.f32.mrb[0].mxu0
      %v3665 = vpop.f32.mrb[0].mxu0
      %v3666 = vadd.f32 0.0, %v3665
      %v3667 = vpop.f32.mrb[0].mxu0
      %3668 = vdwg.mxu0
      %v3670 = vsel %vm1650, %v3532, 0
      %3672 = vmatprep.subr.bf16.mxu0 0
      %3673 = vmatpush1.bf16.msra.mxu0 %v3536
      %3674 = vmatprep.subr.bf16.mxu0 0
      %3675 = vmatpush1.bf16.msra.mxu0 0
      %3676 = vmatprep.subr.bf16.mxu0 0
      %3677 = vmatpush1.bf16.msra.mxu0 0
      %3678 = vmatprep.subr.bf16.mxu0 0
      %3679 = vmatpush1.bf16.msra.mxu0 0
      %3680 = vmatprep.subr.bf16.mxu0 0
      %3681 = vmatpush1.bf16.msra.mxu0 0
      %3682 = vmatprep.subr.bf16.mxu0 0
      %3683 = vmatpush1.bf16.msra.mxu0 0
      %3684 = vmatprep.subr.bf16.mxu0 0
      %3685 = vmatpush1.bf16.msra.mxu0 0
      %3686 = vmatprep.subr.bf16.mxu0 0
      %3687 = vmatpush1.bf16.msra.mxu0 0
      %3688 = vmatprep.subr.bf16.mxu0 0
      %3689 = vmatpush1.bf16.msra.mxu0 0
      %3690 = vmatprep.subr.bf16.mxu0 0
      %3691 = vmatpush1.bf16.msra.mxu0 0
      %3692 = vmatprep.subr.bf16.mxu0 0
      %3693 = vmatpush1.bf16.msra.mxu0 0
      %3694 = vmatprep.subr.bf16.mxu0 0
      %3695 = vmatpush1.bf16.msra.mxu0 0
      %3696 = vmatprep.subr.bf16.mxu0 0
      %3697 = vmatpush1.bf16.msra.mxu0 0
      %3698 = vmatprep.subr.bf16.mxu0 0
      %3699 = vmatpush1.bf16.msra.mxu0 0
      %3700 = vmatprep.subr.bf16.mxu0 0
      %3701 = vmatpush1.bf16.msra.mxu0 0
      %3702 = vmatprep.subr.bf16.mxu0 0
      %3703 = vmatpush1.bf16.msra.mxu0 0
      %3704 = vmatprep.mubr.bf16.mxu0 0
      %3705 = vmatmul.mubr.bf16.gmra.mrb[0].mxu0 %v3670
      %v3706 = vpop.f32.mrb[0].mxu0
      %v3707 = vadd.f32 0.0, %v3706
      %v3708 = vpop.f32.mrb[0].mxu0
      %v3709 = vpop.f32.mrb[0].mxu0
      %v3710 = vadd.f32 0.0, %v3709
      %v3711 = vpop.f32.mrb[0].mxu0
      %3712 = vdwg.mxu0
      %v3713 = vrcp.pop %v3507
      %v3714 = vrcp.pop %v3510
      %v3715 = vrcp.pop %v3513
      %v3716 = vrcp.pop %v3516
      %v3717 = vrcp.pop %v3519
      %v3718 = vrcp.pop %v3522
      %v3719 = vrcp.pop %v3525
      %v3720 = vrcp.pop %v3528
      %v3721 = vmul.f32 %v3575, %v3713
      %v3722 = vmul.f32 %v3578, %v3714
      %v3723 = vmul.f32 %v3619, %v3715
      %v3724 = vmul.f32 %v3622, %v3716
      %v3725 = vmul.f32 %v3663, %v3717
      %v3726 = vmul.f32 %v3666, %v3718
      %v3727 = vmul.f32 %v3707, %v3719
      %v3728 = vmul.f32 %v3710, %v3720
      %v3729 = vcombine.low %v3721, %v3725
      %v3730 = vcombine.high %v3721, %v3725
      %v3732 = vunpack.c.l.s4 1983009808
      %v3733 = vunpack.c.0.s8 %v3732
      %v3734 = vlaneseq
      %v3735 = vshrl.u32 %v3734, 7
      %v3736 = vsub.s32 %v3733, %v3735
      %v3737 = vrot.slane %v3729, %v3736
      %v3739 = vunpack.c.l.s4 1983009808
      %v3740 = vunpack.c.0.s8 %v3739
      %v3741 = vlaneseq
      %v3742 = vshrl.u32 %v3741, 7
      %v3743 = vsub.s32 %v3740, %v3742
      %v3744 = vrot.slane %v3730, %v3743
      %v3745 = vcombine.low %v3723, %v3727
      %v3746 = vcombine.high %v3723, %v3727
      %v3748 = vunpack.c.l.s4 1983009808
      %v3749 = vunpack.c.0.s8 %v3748
      %v3750 = vlaneseq
      %v3751 = vshrl.u32 %v3750, 7
      %v3752 = vsub.s32 %v3749, %v3751
      %v3753 = vrot.slane %v3745, %v3752
      %v3755 = vunpack.c.l.s4 1983009808
      %v3756 = vunpack.c.0.s8 %v3755
      %v3757 = vlaneseq
      %v3758 = vshrl.u32 %v3757, 7
      %v3759 = vsub.s32 %v3756, %v3758
      %v3760 = vrot.slane %v3746, %v3759
      %v3761 = vcombine.low %v3737, %v3753
      %v3762 = vcombine.high %v3737, %v3753
      %v3764 = vunpack.c.l.s4 1934713408
      %v3765 = vunpack.c.0.s8 %v3764
      %v3766 = vlaneseq
      %v3767 = vshrl.u32 %v3766, 7
      %v3768 = vsub.s32 %v3765, %v3767
      %v3769 = vrot.slane %v3761, %v3768
      %v3771 = vunpack.c.l.s4 1934713408
      %v3772 = vunpack.c.0.s8 %v3771
      %v3773 = vlaneseq
      %v3774 = vshrl.u32 %v3773, 7
      %v3775 = vsub.s32 %v3772, %v3774
      %v3776 = vrot.slane %v3762, %v3775
      %v3777 = vcombine.low %v3744, %v3760
      %v3778 = vcombine.high %v3744, %v3760
      %v3780 = vunpack.c.l.s4 1934713408
      %v3781 = vunpack.c.0.s8 %v3780
      %v3782 = vlaneseq
      %v3783 = vshrl.u32 %v3782, 7
      %v3784 = vsub.s32 %v3781, %v3783
      %v3785 = vrot.slane %v3777, %v3784
      %v3787 = vunpack.c.l.s4 1934713408
      %v3788 = vunpack.c.0.s8 %v3787
      %v3789 = vlaneseq
      %v3790 = vshrl.u32 %v3789, 7
      %v3791 = vsub.s32 %v3788, %v3790
      %v3792 = vrot.slane %v3778, %v3791
      %v3793 = vcombine.high %v3769, 0.0
      %v3794 = vcombine.high %v3776, 0.0
      %v3795 = vcombine.high %v3785, 0.0
      %v3796 = vcombine.high %v3792, 0.0
      %v3797 = vcombine.low %v3722, %v3726
      %v3798 = vcombine.high %v3722, %v3726
      %v3800 = vunpack.c.l.s4 1983009808
      %v3801 = vunpack.c.0.s8 %v3800
      %v3802 = vlaneseq
      %v3803 = vshrl.u32 %v3802, 7
      %v3804 = vsub.s32 %v3801, %v3803
      %v3805 = vrot.slane %v3797, %v3804
      %v3807 = vunpack.c.l.s4 1983009808
      %v3808 = vunpack.c.0.s8 %v3807
      %v3809 = vlaneseq
      %v3810 = vshrl.u32 %v3809, 7
      %v3811 = vsub.s32 %v3808, %v3810
      %v3812 = vrot.slane %v3798, %v3811
      %v3813 = vcombine.low %v3724, %v3728
      %v3814 = vcombine.high %v3724, %v3728
      %v3816 = vunpack.c.l.s4 1983009808
      %v3817 = vunpack.c.0.s8 %v3816
      %v3818 = vlaneseq
      %v3819 = vshrl.u32 %v3818, 7
      %v3820 = vsub.s32 %v3817, %v3819
      %v3821 = vrot.slane %v3813, %v3820
      %v3823 = vunpack.c.l.s4 1983009808
      %v3824 = vunpack.c.0.s8 %v3823
      %v3825 = vlaneseq
      %v3826 = vshrl.u32 %v3825, 7
      %v3827 = vsub.s32 %v3824, %v3826
      %v3828 = vrot.slane %v3814, %v3827
      %v3829 = vcombine.low %v3805, %v3821
      %v3830 = vcombine.high %v3805, %v3821
      %v3832 = vunpack.c.l.s4 1934713408
      %v3833 = vunpack.c.0.s8 %v3832
      %v3834 = vlaneseq
      %v3835 = vshrl.u32 %v3834, 7
      %v3836 = vsub.s32 %v3833, %v3835
      %v3837 = vrot.slane %v3829, %v3836
      %v3839 = vunpack.c.l.s4 1934713408
      %v3840 = vunpack.c.0.s8 %v3839
      %v3841 = vlaneseq
      %v3842 = vshrl.u32 %v3841, 7
      %v3843 = vsub.s32 %v3840, %v3842
      %v3844 = vrot.slane %v3830, %v3843
      %v3845 = vcombine.low %v3812, %v3828
      %v3846 = vcombine.high %v3812, %v3828
      %v3848 = vunpack.c.l.s4 1934713408
      %v3849 = vunpack.c.0.s8 %v3848
      %v3850 = vlaneseq
      %v3851 = vshrl.u32 %v3850, 7
      %v3852 = vsub.s32 %v3849, %v3851
      %v3853 = vrot.slane %v3845, %v3852
      %v3855 = vunpack.c.l.s4 1934713408
      %v3856 = vunpack.c.0.s8 %v3855
      %v3857 = vlaneseq
      %v3858 = vshrl.u32 %v3857, 7
      %v3859 = vsub.s32 %v3856, %v3858
      %v3860 = vrot.slane %v3846, %v3859
      %v3861 = vcombine.high %v3837, 0.0
      %v3862 = vcombine.high %v3844, 0.0
      %v3863 = vcombine.high %v3853, 0.0
      %v3864 = vcombine.high %v3860, 0.0
      %v3865 = vcombine.low %v3769, %v3776
      %v3867 = vunpack.c.l.s4 1983009808
      %v3868 = vunpack.c.0.s8 %v3867
      %v3869 = vlaneseq
      %v3870 = vshrl.u32 %v3869, 7
      %v3871 = vsub.s32 %v3868, %v3870
      %v3872 = vrot.slane %v3865, %v3871
      %v3873 = vcombine.low %v3793, %v3794
      %v3875 = vunpack.c.l.s4 1983009808
      %v3876 = vunpack.c.0.s8 %v3875
      %v3877 = vlaneseq
      %v3878 = vshrl.u32 %v3877, 7
      %v3879 = vsub.s32 %v3876, %v3878
      %v3880 = vrot.slane %v3873, %v3879
      %v3881 = vcombine.low %v3785, %v3792
      %v3883 = vunpack.c.l.s4 1983009808
      %v3884 = vunpack.c.0.s8 %v3883
      %v3885 = vlaneseq
      %v3886 = vshrl.u32 %v3885, 7
      %v3887 = vsub.s32 %v3884, %v3886
      %v3888 = vrot.slane %v3881, %v3887
      %v3889 = vcombine.low %v3795, %v3796
      %v3891 = vunpack.c.l.s4 1983009808
      %v3892 = vunpack.c.0.s8 %v3891
      %v3893 = vlaneseq
      %v3894 = vshrl.u32 %v3893, 7
      %v3895 = vsub.s32 %v3892, %v3894
      %v3896 = vrot.slane %v3889, %v3895
      %v3897 = vcombine.low %v3872, %v3880
      %v3898 = vcombine.high %v3872, %v3880
      %v3900 = vunpack.c.l.s4 1934713408
      %v3901 = vunpack.c.0.s8 %v3900
      %v3902 = vlaneseq
      %v3903 = vshrl.u32 %v3902, 7
      %v3904 = vsub.s32 %v3901, %v3903
      %v3905 = vrot.slane %v3897, %v3904
      %v3907 = vunpack.c.l.s4 1934713408
      %v3908 = vunpack.c.0.s8 %v3907
      %v3909 = vlaneseq
      %v3910 = vshrl.u32 %v3909, 7
      %v3911 = vsub.s32 %v3908, %v3910
      %v3912 = vrot.slane %v3898, %v3911
      %v3913 = vcombine.low %v3888, %v3896
      %v3914 = vcombine.high %v3888, %v3896
      %v3916 = vunpack.c.l.s4 1934713408
      %v3917 = vunpack.c.0.s8 %v3916
      %v3918 = vlaneseq
      %v3919 = vshrl.u32 %v3918, 7
      %v3920 = vsub.s32 %v3917, %v3919
      %v3921 = vrot.slane %v3913, %v3920
      %v3923 = vunpack.c.l.s4 1934713408
      %v3924 = vunpack.c.0.s8 %v3923
      %v3925 = vlaneseq
      %v3926 = vshrl.u32 %v3925, 7
      %v3927 = vsub.s32 %v3924, %v3926
      %v3928 = vrot.slane %v3914, %v3927
      %v3929 = vcombine.low %v3905, %v3921
      %v3930 = vcombine.high %v3905, %v3921
      %v3931 = vcombine.low %v3912, %v3928
      %v3932 = vcombine.high %v3912, %v3928
      %v3933 = vcombine.low %v3837, %v3844
      %v3935 = vunpack.c.l.s4 1983009808
      %v3936 = vunpack.c.0.s8 %v3935
      %v3937 = vlaneseq
      %v3938 = vshrl.u32 %v3937, 7
      %v3939 = vsub.s32 %v3936, %v3938
      %v3940 = vrot.slane %v3933, %v3939
      %v3941 = vcombine.low %v3861, %v3862
      %v3943 = vunpack.c.l.s4 1983009808
      %v3944 = vunpack.c.0.s8 %v3943
      %v3945 = vlaneseq
      %v3946 = vshrl.u32 %v3945, 7
      %v3947 = vsub.s32 %v3944, %v3946
      %v3948 = vrot.slane %v3941, %v3947
      %v3949 = vcombine.low %v3853, %v3860
      %v3951 = vunpack.c.l.s4 1983009808
      %v3952 = vunpack.c.0.s8 %v3951
      %v3953 = vlaneseq
      %v3954 = vshrl.u32 %v3953, 7
      %v3955 = vsub.s32 %v3952, %v3954
      %v3956 = vrot.slane %v3949, %v3955
      %v3957 = vcombine.low %v3863, %v3864
      %v3959 = vunpack.c.l.s4 1983009808
      %v3960 = vunpack.c.0.s8 %v3959
      %v3961 = vlaneseq
      %v3962 = vshrl.u32 %v3961, 7
      %v3963 = vsub.s32 %v3960, %v3962
      %v3964 = vrot.slane %v3957, %v3963
      %v3965 = vcombine.low %v3940, %v3948
      %v3966 = vcombine.high %v3940, %v3948
      %v3968 = vunpack.c.l.s4 1934713408
      %v3969 = vunpack.c.0.s8 %v3968
      %v3970 = vlaneseq
      %v3971 = vshrl.u32 %v3970, 7
      %v3972 = vsub.s32 %v3969, %v3971
      %v3973 = vrot.slane %v3965, %v3972
      %v3975 = vunpack.c.l.s4 1934713408
      %v3976 = vunpack.c.0.s8 %v3975
      %v3977 = vlaneseq
      %v3978 = vshrl.u32 %v3977, 7
      %v3979 = vsub.s32 %v3976, %v3978
      %v3980 = vrot.slane %v3966, %v3979
      %v3981 = vcombine.low %v3956, %v3964
      %v3982 = vcombine.high %v3956, %v3964
      %v3984 = vunpack.c.l.s4 1934713408
      %v3985 = vunpack.c.0.s8 %v3984
      %v3986 = vlaneseq
      %v3987 = vshrl.u32 %v3986, 7
      %v3988 = vsub.s32 %v3985, %v3987
      %v3989 = vrot.slane %v3981, %v3988
      %v3991 = vunpack.c.l.s4 1934713408
      %v3992 = vunpack.c.0.s8 %v3991
      %v3993 = vlaneseq
      %v3994 = vshrl.u32 %v3993, 7
      %v3995 = vsub.s32 %v3992, %v3994
      %v3996 = vrot.slane %v3982, %v3995
      %v3997 = vcombine.low %v3973, %v3989
      %v3998 = vcombine.high %v3973, %v3989
      %v3999 = vcombine.low %v3980, %v3996
      %v4000 = vcombine.high %v3980, %v3996
      %4003 = vrot.lane.b32.xlu0 %v3930, 32
      %v4004 = vpop.permute.xlu0 %4003
      %4005 = vrot.lane.b32.xlu0 %v3998, 32
      %v4006 = vpop.permute.xlu0 %4005
      %4011 = vrot.lane.b32.xlu0 %v3931, 64
      %v4012 = vpop.permute.xlu0 %4011
      %4013 = vrot.lane.b32.xlu0 %v3999, 64
      %v4014 = vpop.permute.xlu0 %4013
      %4019 = vrot.lane.b32.xlu0 %v3932, 96
      %v4020 = vpop.permute.xlu0 %4019
      %4021 = vrot.lane.b32.xlu0 %v4000, 96
      %v4022 = vpop.permute.xlu0 %4021
      %v4025 = vsel %vm1461, %v3929, %v4004
      %v4026 = vsel %vm1461, %v3997, %v4006
      %v4027 = vsel %vm2221, %v4025, %v4012
      %v4028 = vsel %vm2221, %v4026, %v4014
      %v4029 = vsel %vm2224, %v4027, %v4020
      %v4030 = vsel %vm2224, %v4028, %v4022
      %v4031 = vpack.c.bf16 %v4030, %v4029
      %v4032 = vld [vmem:[%s3] sm:$0xf]
      %v4033 = vld [vmem:[%s3 + $0x4] sm:$0xf]
      %v4034 = vld [vmem:[%s3 + $0x8] sm:$0xf]
      %v4035 = vld [vmem:[%s3 + $0xc] sm:$0xf]
      %v4036 = vld [vmem:[%s3 + $0x10] sm:$0xf]
      %v4037 = vld [vmem:[%s3 + $0x14] sm:$0xf]
      %v4038 = vld [vmem:[%s3 + $0x18] sm:$0xf]
      %v4039 = vld [vmem:[%s3 + $0x1c] sm:$0xf]
      %v4040 = vld [vmem:[%s3 + $0x20] sm:$0xf]
      %v4041 = vld [vmem:[%s3 + $0x24] sm:$0xf]
      %v4042 = vld [vmem:[%s3 + $0x28] sm:$0xf]
      %v4043 = vld [vmem:[%s3 + $0x2c] sm:$0xf]
      %v4044 = vld [vmem:[%s3 + $0x30] sm:$0xf]
      %v4045 = vld [vmem:[%s3 + $0x34] sm:$0xf]
      %v4046 = vld [vmem:[%s3 + $0x38] sm:$0xf]
      %v4047 = vld [vmem:[%s3 + $0x3c] sm:$0xf]
      %v4048 = vld [vmem:[%s4] sm:$0x1]
      %v4050 = vlaneseq
      %v4051 = vshrl.u32 %v4050, 7
      %v4052 = vsub.s32 0, %v4051
      %v4053 = vrot.slane %v4048, %v4052
      %v4071 = vunpack.c.l.b16 %v4032
      %v4072 = vunpack.c.l.b16 %v4033
      %v4073 = vunpack.c.l.b16 %v4034
      %v4074 = vunpack.c.l.b16 %v4035
      %v4075 = vunpack.c.l.b16 %v4036
      %v4076 = vunpack.c.l.b16 %v4037
      %v4077 = vunpack.c.l.b16 %v4038
      %v4078 = vunpack.c.l.b16 %v4039
      %v4079 = vunpack.c.l.b16 %v4040
      %v4080 = vunpack.c.l.b16 %v4041
      %v4081 = vunpack.c.l.b16 %v4042
      %v4082 = vunpack.c.l.b16 %v4043
      %v4083 = vunpack.c.l.b16 %v4044
      %v4084 = vunpack.c.l.b16 %v4045
      %v4085 = vunpack.c.l.b16 %v4046
      %v4086 = vunpack.c.l.b16 %v4047
      %v4087 = vpack.c.b16 %v4072, %v4071
      %v4088 = vpack.c.b16 %v4074, %v4073
      %v4089 = vpack.c.b16 %v4076, %v4075
      %v4090 = vpack.c.b16 %v4078, %v4077
      %v4091 = vpack.c.b16 %v4080, %v4079
      %v4092 = vpack.c.b16 %v4082, %v4081
      %v4093 = vpack.c.b16 %v4084, %v4083
      %v4094 = vpack.c.b16 %v4086, %v4085
      %4103 = vmatprep.subr.bf16.mxu0 0
      %4104 = vmatpush1.bf16.msra.mxu0 %v4087
      %4105 = vmatprep.subr.bf16.mxu0 0
      %4106 = vmatpush1.bf16.msra.mxu0 %v4088
      %4107 = vmatprep.subr.bf16.mxu0 0
      %4108 = vmatpush1.bf16.msra.mxu0 %v4089
      %4109 = vmatprep.subr.bf16.mxu0 0
      %4110 = vmatpush1.bf16.msra.mxu0 %v4090
      %4111 = vmatprep.subr.bf16.mxu0 0
      %4112 = vmatpush1.bf16.msra.mxu0 %v4091
      %4113 = vmatprep.subr.bf16.mxu0 0
      %4114 = vmatpush1.bf16.msra.mxu0 %v4092
      %4115 = vmatprep.subr.bf16.mxu0 0
      %4116 = vmatpush1.bf16.msra.mxu0 %v4093
      %4117 = vmatprep.subr.bf16.mxu0 0
      %4118 = vmatpush1.bf16.msra.mxu0 %v4094
      %4119 = vmatprep.subr.bf16.mxu0 0
      %4120 = vmatpush1.bf16.msra.mxu0 0
      %4121 = vmatprep.subr.bf16.mxu0 0
      %4122 = vmatpush1.bf16.msra.mxu0 0
      %4123 = vmatprep.subr.bf16.mxu0 0
      %4124 = vmatpush1.bf16.msra.mxu0 0
      %4125 = vmatprep.subr.bf16.mxu0 0
      %4126 = vmatpush1.bf16.msra.mxu0 0
      %4127 = vmatprep.subr.bf16.mxu0 0
      %4128 = vmatpush1.bf16.msra.mxu0 0
      %4129 = vmatprep.subr.bf16.mxu0 0
      %4130 = vmatpush1.bf16.msra.mxu0 0
      %4131 = vmatprep.subr.bf16.mxu0 0
      %4132 = vmatpush1.bf16.msra.mxu0 0
      %4133 = vmatprep.subr.bf16.mxu0 0
      %4134 = vmatpush1.bf16.msra.mxu0 0
      %4135 = vmatprep.mubr.bf16.mxu0 0
      %4136 = vmatmul.mubr.bf16.gmra.mrb[0].mxu0 %v4031
      %v4137 = vpop.f32.mrb[0].mxu0
      %v4138 = vadd.f32 %v4053, %v4137
      %v4139 = vpop.f32.mrb[0].mxu0
      %v4140 = vpop.f32.mrb[0].mxu0
      %v4141 = vadd.f32 %v4053, %v4140
      %v4142 = vpop.f32.mrb[0].mxu0
      %4143 = vdwg.mxu0
      %v4144 = vadd.f32 %v290, %v4138
      %v4145 = vadd.f32 %v291, %v4141
      %v4146 = vld [vmem:[%s5] sm:$0x1]
      %v4147 = vld [vmem:[%s6] sm:$0x1]
      %4148 = vadd.xlane.f32.xlu0 %v4144
      %v4149 = vpop.xlane.xlu0 %4148
      %4150 = vadd.xlane.f32.xlu0 %v4145
      %v4151 = vpop.xlane.xlu0 %4150
      %v4152 = vmul.f32 %v4149, %v2348
      %v4153 = vmul.f32 %v4151, %v2348
      %v4154 = vsub.f32 %v4144, %v4152
      %v4155 = vsub.f32 %v4145, %v4153
      %v4156 = vmul.f32 %v4154, %v4154
      %v4157 = vmul.f32 %v4155, %v4155
      %4158 = vadd.xlane.f32.xlu0 %v4156
      %v4159 = vpop.xlane.xlu0 %4158
      %4160 = vadd.xlane.f32.xlu0 %v4157
      %v4161 = vpop.xlane.xlu0 %4160
      %v4162 = vmul.f32 %v4159, %v2348
      %v4163 = vmul.f32 %v4161, %v2348
      %v4164 = vadd.f32 %v4162, 1e-05
      %v4165 = vadd.f32 %v4163, 1e-05
      %v4166 = vrsqrt.pop %v4164
      %v4167 = vrsqrt.pop %v4165
      %v4168 = vmul.f32 %v4154, %v4166
      %v4169 = vmul.f32 %v4155, %v4167
      %v4171 = vlaneseq
      %v4172 = vshrl.u32 %v4171, 7
      %v4173 = vsub.s32 0, %v4172
      %v4174 = vrot.slane %v4146, %v4173
      %v4176 = vmul.f32 %v4168, %v4174
      %v4177 = vmul.f32 %v4169, %v4174
      %v4179 = vlaneseq
      %v4180 = vshrl.u32 %v4179, 7
      %v4181 = vsub.s32 0, %v4180
      %v4182 = vrot.slane %v4147, %v4181
      %v4184 = vadd.f32 %v4176, %v4182
      %v4185 = vadd.f32 %v4177, %v4182
      %s4186 = scalar_lea.vmem %s285, 16
      %4187 = vst [vmem:[%s4186] sm:$0xff] %v4184
      %4188 = vst [vmem:[%s4186 + $0x8] sm:$0xff] %v4185
      %s4189 = smul.u32 2, %s18
      %p4190 = scmp.lt.s32.totalorder %s4189, 3
      %s4191 = scalar_select %p4190, %s4189, 3
      %s4192 = smul.addr %s4191, 2
      %s4193 = smul.addr %s4192, 8
      %s4194 = scalar_lea.vmem %s7, %s4193
      // Predicated region
      $region49: #{fft_block.2} parent=47 // pred_check
        %p4195 = pneg %p188
      $region50: #{fft_block.2} parent=47 // pred_check_branch
        %4197 = sbr.rel (%p4195) target = $region52
      $region51: #{fft_block.2} parent=47 // pred_region
        %s4198 = smul.u32 2, %s18
      $region52: #{fft_block.2} parent=47 // pred_fallthru
        _
    $region48: #{fft_block.2} parent=5 // pred_fallthru
      _
    %p4199 = scmp.le.s32.totalorder 2, %s13
    // Predicated region
    $region53: #{fft_block.2} parent=5 // pred_check
      %p4200 = pneg %p4199
    $region54: #{fft_block.2} parent=5 // pred_check_branch
      %4202 = sbr.rel (%p4200) target = $region56
    $region55: #{fft_block.2} parent=5 // pred_region
      %s4203 = ssub.s32 %s13, 2
      // Predicated region
      $region57: #{fft_block.2} parent=55 // pred_check
        %p4204 = pneg %p194
      $region58: #{fft_block.2} parent=55 // pred_check_branch
        %4206 = sbr.rel (%p4204) target = $region60
      $region59: #{fft_block.2} parent=55 // pred_region
        %s4207 = smul.u32 2, %s19
        %p4208 = scmp.lt.s32.totalorder %s4207, 3
        %s4209 = scalar_select %p4208, %s4207, 3
        %s4210 = smul.addr %s4209, 2
        %s4211 = smul.addr %s4210, 8
        %s4212 = scalar_lea.vmem %s7, %s4211
      $region60: #{fft_block.2} parent=55 // pred_fallthru
        _
    $region56: #{fft_block.2} parent=5 // pred_fallthru
      _
  $region6: #{fft_block.2} parent=0 // loop_footer
    %s17 = sadd.s32 1, %s13
  $region7: #{fft_block.2} parent=0 // loop_footer_branch
    %12 = sbr.rel target = $region3
  $region8: #{fft_block.2} parent=0 // loop_exit
    _

</llo_original>
